<compile_context>
chip_gen: v7x
topology: tpu7x:2x2x1
jax: 0.10.0
libtpu: 0.0.40
codegen_flags: <defaults>
</compile_context>

<pallas_src>
import math
import jax
import jax.numpy as jnp
from jax.experimental import pallas as pl
from jax.experimental.pallas import tpu as pltpu

# ---- static problem sizes ---------------------------------------------------
B = 2            # batch
T = 16           # time frames
F = 16           # mel / freq bins
C = 32           # cnn nb_filters[-1] == encoder input_dim
ADIM = 32        # encoder adim
FFN = 4 * ADIM   # feed-forward hidden
NCLASS = 10      # n_class
S = T + 1        # tag token + frames
LANES = 128      # vreg lane width; pred head padded to this for dense stores

# ---- packed-weight layout (one flat (WROWS, 128) f32 slab) -------------------
def _round8(n):
    return ((n + 7) // 8) * 8

_SEGS = [            # (name, rows, cols)
    ('conv_w', 9, C),
    ('conv_b', 1, C),
    ('tag',    1, C),
    ('win',    C, ADIM),
    ('bin',    1, ADIM),
    ('g1',     1, ADIM),
    ('be1',    1, ADIM),
    ('wqkv',   C, 3 * ADIM),
    ('bqkv',   1, 3 * ADIM),
    ('wo',     ADIM, ADIM),
    ('bo',     1, ADIM),
    ('g2',     1, ADIM),
    ('be2',    1, ADIM),
    ('w1',     ADIM, FFN),
    ('b1',     1, FFN),
    ('w2',     FFN, ADIM),
    ('b2',     1, ADIM),
    ('g3',     1, ADIM),
    ('be3',    1, ADIM),
    ('wp',     ADIM, LANES),   # pred head, zero-padded NCLASS -> 128 lanes
    ('bp',     1, LANES),
]
_OFF = {}
_c = 0
for _name, _rows, _cols in _SEGS:
    _OFF[_name] = _c           # 8-row aligned -> slices start on sublane tiles
    _c += _round8(_rows)
WROWS = _c                     # 416 rows * 128 lanes * 4 B ~= 213 KB, one DMA
_SHAPES = {name: (rows, cols) for name, rows, cols in _SEGS}


# ---------------------------------------------------------------------------
# The single fused kernel: conv downsampler -> tag token -> encoder block ->
# prediction head.  Everything for the whole batch in one grid step.
# ---------------------------------------------------------------------------
def sed_kernel(x_ref, w_ref, out_ref):
    def W(name):
        rows, cols = _SHAPES[name]
        o = _OFF[name]
        return w_ref[o:o + rows, :cols]            # static, 8-aligned slice

    def ln(z, gname, bname):
        mu = jnp.mean(z, axis=-1, keepdims=True)
        var = jnp.mean((z - mu) ** 2, axis=-1, keepdims=True)
        return (z - mu) * jax.lax.rsqrt(var + 1e-5) * W(gname) + W(bname)

    x = x_ref[...].reshape(B, T, F)                # drop channel dim (=1)

    conv_w = W('conv_w')                           # (9, C) taps
    conv_b = W('conv_b')                           # (1, C)
    tag = W('tag')                                 # (1, C)

    # --- CNN local downsampler: 3x3 conv as 9 VPU FMA taps + ReLU + freq mean,
    #     zero padding built in-kernel by concatenation; prepend tag token.
    zr = jnp.zeros((1, F), jnp.float32)
    zc = jnp.zeros((T + 2, 1), jnp.float32)
    pieces = []
    for b in range(B):                             # B=2, unrolled statically
        xb = jnp.concatenate([zr, x[b], zr], axis=0)        # (T+2, F)
        xb = jnp.concatenate([zc, xb, zc], axis=1)          # (T+2, F+2)
        acc = jnp.zeros((T, F, C), jnp.float32)
        for dy in range(3):
            for dx in range(3):
                tap = xb[dy:dy + T, dx:dx + F]              # (T, F) static slice
                wrow = conv_w[dy * 3 + dx:dy * 3 + dx + 1, :]   # (1, C)
                acc = acc + tap[:, :, None] * wrow          # VPU broadcast FMA
        acc = jnp.maximum(acc + conv_b, 0.0)                # bias + ReLU
        feat = jnp.sum(acc, axis=1) * (1.0 / F)             # freq mean -> (T, C)
        pieces.append(tag)                                  # tag token row
        pieces.append(feat)
    h_in = jnp.concatenate(pieces, axis=0)                  # (B*S, C)

    # --- encoder input projection (shared weights, batch folded into rows)
    h = jnp.dot(h_in, W('win'), preferred_element_type=jnp.float32) + W('bin')

    # --- self-attention sublayer (single head), fused QKV projection
    a_in = ln(h, 'g1', 'be1')
    qkv = jnp.dot(a_in, W('wqkv'), preferred_element_type=jnp.float32) + W('bqkv')
    scale = 1.0 / math.sqrt(ADIM)
    att_parts = []
    for b in range(B):
        qb = qkv[b * S:(b + 1) * S, 0 * ADIM:1 * ADIM]      # (S, ADIM)
        kb = qkv[b * S:(b + 1) * S, 1 * ADIM:2 * ADIM]
        vb = qkv[b * S:(b + 1) * S, 2 * ADIM:3 * ADIM]
        sb = jnp.dot(qb, kb.T, preferred_element_type=jnp.float32) * scale
        sb = sb - jnp.max(sb, axis=-1, keepdims=True)
        pb = jnp.exp(sb)
        pb = pb * pl.reciprocal(jnp.sum(pb, axis=-1, keepdims=True), approx=True)
        att_parts.append(jnp.dot(pb, vb, preferred_element_type=jnp.float32))
    att = jnp.concatenate(att_parts, axis=0)                # (B*S, ADIM)
    h = h + jnp.dot(att, W('wo'), preferred_element_type=jnp.float32) + W('bo')

    # --- feed-forward sublayer (swish)
    f_in = ln(h, 'g2', 'be2')
    f = jnp.dot(f_in, W('w1'), preferred_element_type=jnp.float32) + W('b1')
    f = f * jax.nn.sigmoid(f)
    h = h + jnp.dot(f, W('w2'), preferred_element_type=jnp.float32) + W('b2')

    hf = ln(h, 'g3', 'be3')

    # --- prediction head: lane-dense (B*S, 128) store, sliced in the wrapper
    out_ref[...] = jnp.dot(hf, W('wp'), preferred_element_type=jnp.float32) + W('bp')


# ---------------------------------------------------------------------------
# SEDModel.forward  (pooling='token', mask=None, prompt_tuning unused)
# ---------------------------------------------------------------------------
def sed_forward(x_nchw, packed_w):
    logits_pad = pl.pallas_call(
        sed_kernel,
        out_shape=jax.ShapeDtypeStruct((B * S, LANES), jnp.float32),
        in_specs=[pl.BlockSpec(memory_space=pltpu.MemorySpace.VMEM),
                  pl.BlockSpec(memory_space=pltpu.MemorySpace.VMEM)],
        out_specs=pl.BlockSpec(memory_space=pltpu.MemorySpace.VMEM),
    )(x_nchw, packed_w)
    logits = logits_pad.reshape(B, S, LANES)[:, :, :NCLASS]   # (B, S, NCLASS)
    weak = logits[:, 0, :]              # tag-token prediction
    strong = logits[:, 1:, :]           # == logits[:, -seq_len:, :] (seq_len=T)
    return {'strong': strong, 'weak': weak}


# ---------------------------------------------------------------------------
# Parameter init (deterministic, synthetic) -> single packed slab
# ---------------------------------------------------------------------------
def init_params(key):
    ks = jax.random.split(key, 9)
    n = lambda k, shape, scale=0.02: (scale * jax.random.normal(k, shape)).astype(jnp.float32)
    zeros = lambda shape: jnp.zeros(shape, jnp.float32)
    ones = lambda shape: jnp.ones(shape, jnp.float32)

    # conv weight in PyTorch layout (C_out, C_in=1, 3, 3) -> tap-major (9, C)
    conv_w9c = n(ks[0], (C, 1, 3, 3)).reshape(C, 9).T
    # fused QKV weight (C, 3*ADIM) = [wq | wk | wv]
    wqkv = jnp.concatenate([n(ks[2], (ADIM, ADIM)),
                            n(ks[3], (ADIM, ADIM)),
                            n(ks[4], (ADIM, ADIM))], axis=1)
    # pred head padded NCLASS -> 128 lanes (zero columns beyond NCLASS)
    wp = jnp.pad(n(ks[8], (ADIM, NCLASS)), ((0, 0), (0, LANES - NCLASS)))

    tensors = {
        'conv_w': conv_w9c,               'conv_b': zeros((1, C)),
        'tag':    zeros((1, C)),          # nn.Parameter(torch.zeros(1,1,input_dim))
        'win':    n(ks[1], (C, ADIM)),    'bin': zeros((1, ADIM)),
        'g1':     ones((1, ADIM)),        'be1': zeros((1, ADIM)),
        'wqkv':   wqkv,                   'bqkv': zeros((1, 3 * ADIM)),
        'wo':     n(ks[5], (ADIM, ADIM)), 'bo': zeros((1, ADIM)),
        'g2':     ones((1, ADIM)),        'be2': zeros((1, ADIM)),
        'w1':     n(ks[6], (ADIM, FFN)),  'b1': zeros((1, FFN)),
        'w2':     n(ks[7], (FFN, ADIM)),  'b2': zeros((1, ADIM)),
        'g3':     ones((1, ADIM)),        'be3': zeros((1, ADIM)),
        'wp':     wp,                     'bp': zeros((1, LANES)),
    }
    packed = jnp.zeros((WROWS, LANES), jnp.float32)
    for name, mat in tensors.items():
        r, c = mat.shape
        packed = packed.at[_OFF[name]:_OFF[name] + r, :c].set(mat)
    return packed


if __name__ == "__main__":
    key = jax.random.PRNGKey(0)
    k_x, k_p = jax.random.split(key)
    x = jax.random.normal(k_x, (B, 1, T, F), dtype=jnp.float32)   # NCHW, 1 channel
    packed_w = init_params(k_p)

    out = jax.jit(sed_forward)(x, packed_w)
    jax.block_until_ready(out)

    assert out['strong'].shape == (B, T, NCLASS)
    assert out['weak'].shape == (B, NCLASS)
    assert bool(jnp.all(jnp.isfinite(out['strong']))) and bool(jnp.all(jnp.isfinite(out['weak'])))
    print("KERNEL_OK")
</pallas_src>

<mosaic_0001>
module attributes {stable_mosaic.version = 11 : i64} {
  func.func @sed_kernel(%arg0: memref<2x1x16x16xf32, #tpu.memory_space<vmem>>, %arg1: memref<416x128xf32, #tpu.memory_space<vmem>>, %arg2: memref<34x128xf32, #tpu.memory_space<vmem>>) attributes {dimension_semantics = [], scalar_prefetch = 0 : i64, scratch_operands = 0 : i64, tpu.core_type = #tpu.core_type<tc>} {
    %c0 = arith.constant 0 : index
    %c0_0 = arith.constant 0 : index
    %c0_1 = arith.constant 0 : index
    %c0_2 = arith.constant 0 : index
    %0 = vector.load %arg0[%c0, %c0_0, %c0_1, %c0_2] : memref<2x1x16x16xf32, #tpu.memory_space<vmem>>, vector<2x1x16x16xf32>
    %1 = vector.shape_cast %0 : vector<2x1x16x16xf32> to vector<2x16x16xf32>
    %c0_3 = arith.constant 0 : index
    %c0_4 = arith.constant 0 : index
    %2 = vector.load %arg1[%c0_3, %c0_4] : memref<416x128xf32, #tpu.memory_space<vmem>>, vector<9x32xf32>
    %c16 = arith.constant 16 : index
    %c0_5 = arith.constant 0 : index
    %3 = vector.load %arg1[%c16, %c0_5] : memref<416x128xf32, #tpu.memory_space<vmem>>, vector<1x32xf32>
    %c24 = arith.constant 24 : index
    %c0_6 = arith.constant 0 : index
    %4 = vector.load %arg1[%c24, %c0_6] : memref<416x128xf32, #tpu.memory_space<vmem>>, vector<1x32xf32>
    %cst = arith.constant 0.000000e+00 : f32
    %5 = vector.broadcast %cst : f32 to vector<1x16xf32>
    %cst_7 = arith.constant 0.000000e+00 : f32
    %6 = vector.broadcast %cst_7 : f32 to vector<18x1xf32>
    %7 = vector.extract_strided_slice %1 {offsets = [0, 0, 0], sizes = [1, 16, 16], strides = [1, 1, 1]} : vector<2x16x16xf32> to vector<1x16x16xf32>
    %8 = vector.shape_cast %7 : vector<1x16x16xf32> to vector<16x16xf32>
    %9 = tpu.concatenate %5, %8, %5 in 0 : vector<1x16xf32>, vector<16x16xf32>, vector<1x16xf32> -> vector<18x16xf32>
    %10 = tpu.concatenate %6, %9, %6 in 1 : vector<18x1xf32>, vector<18x16xf32>, vector<18x1xf32> -> vector<18x18xf32>
    %cst_8 = arith.constant 0.000000e+00 : f32
    %11 = vector.broadcast %cst_8 : f32 to vector<16x16x32xf32>
    %12 = vector.extract_strided_slice %10 {offsets = [0, 0], sizes = [16, 16], strides = [1, 1]} : vector<18x18xf32> to vector<16x16xf32>
    %13 = vector.extract_strided_slice %2 {offsets = [0, 0], sizes = [1, 32], strides = [1, 1]} : vector<9x32xf32> to vector<1x32xf32>
    %14 = vector.shape_cast %12 : vector<16x16xf32> to vector<16x16x1xf32>
    %15 = vector.shape_cast %13 : vector<1x32xf32> to vector<1x1x32xf32>
    %16 = vector.broadcast %14 : vector<16x16x1xf32> to vector<16x16x32xf32>
    %17 = vector.broadcast %15 : vector<1x1x32xf32> to vector<16x16x32xf32>
    %18 = arith.mulf %16, %17 : vector<16x16x32xf32>
    %19 = arith.addf %11, %18 : vector<16x16x32xf32>
    %20 = vector.extract_strided_slice %10 {offsets = [0, 1], sizes = [16, 16], strides = [1, 1]} : vector<18x18xf32> to vector<16x16xf32>
    %21 = vector.extract_strided_slice %2 {offsets = [1, 0], sizes = [1, 32], strides = [1, 1]} : vector<9x32xf32> to vector<1x32xf32>
    %22 = vector.shape_cast %20 : vector<16x16xf32> to vector<16x16x1xf32>
    %23 = vector.shape_cast %21 : vector<1x32xf32> to vector<1x1x32xf32>
    %24 = vector.broadcast %22 : vector<16x16x1xf32> to vector<16x16x32xf32>
    %25 = vector.broadcast %23 : vector<1x1x32xf32> to vector<16x16x32xf32>
    %26 = arith.mulf %24, %25 : vector<16x16x32xf32>
    %27 = arith.addf %19, %26 : vector<16x16x32xf32>
    %28 = vector.extract_strided_slice %10 {offsets = [0, 2], sizes = [16, 16], strides = [1, 1]} : vector<18x18xf32> to vector<16x16xf32>
    %29 = vector.extract_strided_slice %2 {offsets = [2, 0], sizes = [1, 32], strides = [1, 1]} : vector<9x32xf32> to vector<1x32xf32>
    %30 = vector.shape_cast %28 : vector<16x16xf32> to vector<16x16x1xf32>
    %31 = vector.shape_cast %29 : vector<1x32xf32> to vector<1x1x32xf32>
    %32 = vector.broadcast %30 : vector<16x16x1xf32> to vector<16x16x32xf32>
    %33 = vector.broadcast %31 : vector<1x1x32xf32> to vector<16x16x32xf32>
    %34 = arith.mulf %32, %33 : vector<16x16x32xf32>
    %35 = arith.addf %27, %34 : vector<16x16x32xf32>
    %36 = vector.extract_strided_slice %10 {offsets = [1, 0], sizes = [16, 16], strides = [1, 1]} : vector<18x18xf32> to vector<16x16xf32>
    %37 = vector.extract_strided_slice %2 {offsets = [3, 0], sizes = [1, 32], strides = [1, 1]} : vector<9x32xf32> to vector<1x32xf32>
    %38 = vector.shape_cast %36 : vector<16x16xf32> to vector<16x16x1xf32>
    %39 = vector.shape_cast %37 : vector<1x32xf32> to vector<1x1x32xf32>
    %40 = vector.broadcast %38 : vector<16x16x1xf32> to vector<16x16x32xf32>
    %41 = vector.broadcast %39 : vector<1x1x32xf32> to vector<16x16x32xf32>
    %42 = arith.mulf %40, %41 : vector<16x16x32xf32>
    %43 = arith.addf %35, %42 : vector<16x16x32xf32>
    %44 = vector.extract_strided_slice %10 {offsets = [1, 1], sizes = [16, 16], strides = [1, 1]} : vector<18x18xf32> to vector<16x16xf32>
    %45 = vector.extract_strided_slice %2 {offsets = [4, 0], sizes = [1, 32], strides = [1, 1]} : vector<9x32xf32> to vector<1x32xf32>
    %46 = vector.shape_cast %44 : vector<16x16xf32> to vector<16x16x1xf32>
    %47 = vector.shape_cast %45 : vector<1x32xf32> to vector<1x1x32xf32>
    %48 = vector.broadcast %46 : vector<16x16x1xf32> to vector<16x16x32xf32>
    %49 = vector.broadcast %47 : vector<1x1x32xf32> to vector<16x16x32xf32>
    %50 = arith.mulf %48, %49 : vector<16x16x32xf32>
    %51 = arith.addf %43, %50 : vector<16x16x32xf32>
    %52 = vector.extract_strided_slice %10 {offsets = [1, 2], sizes = [16, 16], strides = [1, 1]} : vector<18x18xf32> to vector<16x16xf32>
    %53 = vector.extract_strided_slice %2 {offsets = [5, 0], sizes = [1, 32], strides = [1, 1]} : vector<9x32xf32> to vector<1x32xf32>
    %54 = vector.shape_cast %52 : vector<16x16xf32> to vector<16x16x1xf32>
    %55 = vector.shape_cast %53 : vector<1x32xf32> to vector<1x1x32xf32>
    %56 = vector.broadcast %54 : vector<16x16x1xf32> to vector<16x16x32xf32>
    %57 = vector.broadcast %55 : vector<1x1x32xf32> to vector<16x16x32xf32>
    %58 = arith.mulf %56, %57 : vector<16x16x32xf32>
    %59 = arith.addf %51, %58 : vector<16x16x32xf32>
    %60 = vector.extract_strided_slice %10 {offsets = [2, 0], sizes = [16, 16], strides = [1, 1]} : vector<18x18xf32> to vector<16x16xf32>
    %61 = vector.extract_strided_slice %2 {offsets = [6, 0], sizes = [1, 32], strides = [1, 1]} : vector<9x32xf32> to vector<1x32xf32>
    %62 = vector.shape_cast %60 : vector<16x16xf32> to vector<16x16x1xf32>
    %63 = vector.shape_cast %61 : vector<1x32xf32> to vector<1x1x32xf32>
    %64 = vector.broadcast %62 : vector<16x16x1xf32> to vector<16x16x32xf32>
    %65 = vector.broadcast %63 : vector<1x1x32xf32> to vector<16x16x32xf32>
    %66 = arith.mulf %64, %65 : vector<16x16x32xf32>
    %67 = arith.addf %59, %66 : vector<16x16x32xf32>
    %68 = vector.extract_strided_slice %10 {offsets = [2, 1], sizes = [16, 16], strides = [1, 1]} : vector<18x18xf32> to vector<16x16xf32>
    %69 = vector.extract_strided_slice %2 {offsets = [7, 0], sizes = [1, 32], strides = [1, 1]} : vector<9x32xf32> to vector<1x32xf32>
    %70 = vector.shape_cast %68 : vector<16x16xf32> to vector<16x16x1xf32>
    %71 = vector.shape_cast %69 : vector<1x32xf32> to vector<1x1x32xf32>
    %72 = vector.broadcast %70 : vector<16x16x1xf32> to vector<16x16x32xf32>
    %73 = vector.broadcast %71 : vector<1x1x32xf32> to vector<16x16x32xf32>
    %74 = arith.mulf %72, %73 : vector<16x16x32xf32>
    %75 = arith.addf %67, %74 : vector<16x16x32xf32>
    %76 = vector.extract_strided_slice %10 {offsets = [2, 2], sizes = [16, 16], strides = [1, 1]} : vector<18x18xf32> to vector<16x16xf32>
    %77 = vector.extract_strided_slice %2 {offsets = [8, 0], sizes = [1, 32], strides = [1, 1]} : vector<9x32xf32> to vector<1x32xf32>
    %78 = vector.shape_cast %76 : vector<16x16xf32> to vector<16x16x1xf32>
    %79 = vector.shape_cast %77 : vector<1x32xf32> to vector<1x1x32xf32>
    %80 = vector.broadcast %78 : vector<16x16x1xf32> to vector<16x16x32xf32>
    %81 = vector.broadcast %79 : vector<1x1x32xf32> to vector<16x16x32xf32>
    %82 = arith.mulf %80, %81 : vector<16x16x32xf32>
    %83 = arith.addf %75, %82 : vector<16x16x32xf32>
    %84 = vector.shape_cast %3 : vector<1x32xf32> to vector<1x1x32xf32>
    %85 = vector.broadcast %84 : vector<1x1x32xf32> to vector<16x16x32xf32>
    %86 = arith.addf %83, %85 : vector<16x16x32xf32>
    %cst_9 = arith.constant 0.000000e+00 : f32
    %87 = vector.broadcast %cst_9 : f32 to vector<16x16x32xf32>
    %88 = arith.maximumf %86, %87 : vector<16x16x32xf32>
    %cst_10 = arith.constant dense<0.000000e+00> : vector<16x32xf32>
    %89 = vector.multi_reduction <add>, %88, %cst_10 [1] : vector<16x16x32xf32> to vector<16x32xf32>
    %cst_11 = arith.constant 6.250000e-02 : f32
    %90 = vector.broadcast %cst_11 : f32 to vector<16x32xf32>
    %91 = arith.mulf %89, %90 : vector<16x32xf32>
    %92 = vector.extract_strided_slice %1 {offsets = [1, 0, 0], sizes = [1, 16, 16], strides = [1, 1, 1]} : vector<2x16x16xf32> to vector<1x16x16xf32>
    %93 = vector.shape_cast %92 : vector<1x16x16xf32> to vector<16x16xf32>
    %94 = tpu.concatenate %5, %93, %5 in 0 : vector<1x16xf32>, vector<16x16xf32>, vector<1x16xf32> -> vector<18x16xf32>
    %95 = tpu.concatenate %6, %94, %6 in 1 : vector<18x1xf32>, vector<18x16xf32>, vector<18x1xf32> -> vector<18x18xf32>
    %cst_12 = arith.constant 0.000000e+00 : f32
    %96 = vector.broadcast %cst_12 : f32 to vector<16x16x32xf32>
    %97 = vector.extract_strided_slice %95 {offsets = [0, 0], sizes = [16, 16], strides = [1, 1]} : vector<18x18xf32> to vector<16x16xf32>
    %98 = vector.extract_strided_slice %2 {offsets = [0, 0], sizes = [1, 32], strides = [1, 1]} : vector<9x32xf32> to vector<1x32xf32>
    %99 = vector.shape_cast %97 : vector<16x16xf32> to vector<16x16x1xf32>
    %100 = vector.shape_cast %98 : vector<1x32xf32> to vector<1x1x32xf32>
    %101 = vector.broadcast %99 : vector<16x16x1xf32> to vector<16x16x32xf32>
    %102 = vector.broadcast %100 : vector<1x1x32xf32> to vector<16x16x32xf32>
    %103 = arith.mulf %101, %102 : vector<16x16x32xf32>
    %104 = arith.addf %96, %103 : vector<16x16x32xf32>
    %105 = vector.extract_strided_slice %95 {offsets = [0, 1], sizes = [16, 16], strides = [1, 1]} : vector<18x18xf32> to vector<16x16xf32>
    %106 = vector.extract_strided_slice %2 {offsets = [1, 0], sizes = [1, 32], strides = [1, 1]} : vector<9x32xf32> to vector<1x32xf32>
    %107 = vector.shape_cast %105 : vector<16x16xf32> to vector<16x16x1xf32>
    %108 = vector.shape_cast %106 : vector<1x32xf32> to vector<1x1x32xf32>
    %109 = vector.broadcast %107 : vector<16x16x1xf32> to vector<16x16x32xf32>
    %110 = vector.broadcast %108 : vector<1x1x32xf32> to vector<16x16x32xf32>
    %111 = arith.mulf %109, %110 : vector<16x16x32xf32>
    %112 = arith.addf %104, %111 : vector<16x16x32xf32>
    %113 = vector.extract_strided_slice %95 {offsets = [0, 2], sizes = [16, 16], strides = [1, 1]} : vector<18x18xf32> to vector<16x16xf32>
    %114 = vector.extract_strided_slice %2 {offsets = [2, 0], sizes = [1, 32], strides = [1, 1]} : vector<9x32xf32> to vector<1x32xf32>
    %115 = vector.shape_cast %113 : vector<16x16xf32> to vector<16x16x1xf32>
    %116 = vector.shape_cast %114 : vector<1x32xf32> to vector<1x1x32xf32>
    %117 = vector.broadcast %115 : vector<16x16x1xf32> to vector<16x16x32xf32>
    %118 = vector.broadcast %116 : vector<1x1x32xf32> to vector<16x16x32xf32>
    %119 = arith.mulf %117, %118 : vector<16x16x32xf32>
    %120 = arith.addf %112, %119 : vector<16x16x32xf32>
    %121 = vector.extract_strided_slice %95 {offsets = [1, 0], sizes = [16, 16], strides = [1, 1]} : vector<18x18xf32> to vector<16x16xf32>
    %122 = vector.extract_strided_slice %2 {offsets = [3, 0], sizes = [1, 32], strides = [1, 1]} : vector<9x32xf32> to vector<1x32xf32>
    %123 = vector.shape_cast %121 : vector<16x16xf32> to vector<16x16x1xf32>
    %124 = vector.shape_cast %122 : vector<1x32xf32> to vector<1x1x32xf32>
    %125 = vector.broadcast %123 : vector<16x16x1xf32> to vector<16x16x32xf32>
    %126 = vector.broadcast %124 : vector<1x1x32xf32> to vector<16x16x32xf32>
    %127 = arith.mulf %125, %126 : vector<16x16x32xf32>
    %128 = arith.addf %120, %127 : vector<16x16x32xf32>
    %129 = vector.extract_strided_slice %95 {offsets = [1, 1], sizes = [16, 16], strides = [1, 1]} : vector<18x18xf32> to vector<16x16xf32>
    %130 = vector.extract_strided_slice %2 {offsets = [4, 0], sizes = [1, 32], strides = [1, 1]} : vector<9x32xf32> to vector<1x32xf32>
    %131 = vector.shape_cast %129 : vector<16x16xf32> to vector<16x16x1xf32>
    %132 = vector.shape_cast %130 : vector<1x32xf32> to vector<1x1x32xf32>
    %133 = vector.broadcast %131 : vector<16x16x1xf32> to vector<16x16x32xf32>
    %134 = vector.broadcast %132 : vector<1x1x32xf32> to vector<16x16x32xf32>
    %135 = arith.mulf %133, %134 : vector<16x16x32xf32>
    %136 = arith.addf %128, %135 : vector<16x16x32xf32>
    %137 = vector.extract_strided_slice %95 {offsets = [1, 2], sizes = [16, 16], strides = [1, 1]} : vector<18x18xf32> to vector<16x16xf32>
    %138 = vector.extract_strided_slice %2 {offsets = [5, 0], sizes = [1, 32], strides = [1, 1]} : vector<9x32xf32> to vector<1x32xf32>
    %139 = vector.shape_cast %137 : vector<16x16xf32> to vector<16x16x1xf32>
    %140 = vector.shape_cast %138 : vector<1x32xf32> to vector<1x1x32xf32>
    %141 = vector.broadcast %139 : vector<16x16x1xf32> to vector<16x16x32xf32>
    %142 = vector.broadcast %140 : vector<1x1x32xf32> to vector<16x16x32xf32>
    %143 = arith.mulf %141, %142 : vector<16x16x32xf32>
    %144 = arith.addf %136, %143 : vector<16x16x32xf32>
    %145 = vector.extract_strided_slice %95 {offsets = [2, 0], sizes = [16, 16], strides = [1, 1]} : vector<18x18xf32> to vector<16x16xf32>
    %146 = vector.extract_strided_slice %2 {offsets = [6, 0], sizes = [1, 32], strides = [1, 1]} : vector<9x32xf32> to vector<1x32xf32>
    %147 = vector.shape_cast %145 : vector<16x16xf32> to vector<16x16x1xf32>
    %148 = vector.shape_cast %146 : vector<1x32xf32> to vector<1x1x32xf32>
    %149 = vector.broadcast %147 : vector<16x16x1xf32> to vector<16x16x32xf32>
    %150 = vector.broadcast %148 : vector<1x1x32xf32> to vector<16x16x32xf32>
    %151 = arith.mulf %149, %150 : vector<16x16x32xf32>
    %152 = arith.addf %144, %151 : vector<16x16x32xf32>
    %153 = vector.extract_strided_slice %95 {offsets = [2, 1], sizes = [16, 16], strides = [1, 1]} : vector<18x18xf32> to vector<16x16xf32>
    %154 = vector.extract_strided_slice %2 {offsets = [7, 0], sizes = [1, 32], strides = [1, 1]} : vector<9x32xf32> to vector<1x32xf32>
    %155 = vector.shape_cast %153 : vector<16x16xf32> to vector<16x16x1xf32>
    %156 = vector.shape_cast %154 : vector<1x32xf32> to vector<1x1x32xf32>
    %157 = vector.broadcast %155 : vector<16x16x1xf32> to vector<16x16x32xf32>
    %158 = vector.broadcast %156 : vector<1x1x32xf32> to vector<16x16x32xf32>
    %159 = arith.mulf %157, %158 : vector<16x16x32xf32>
    %160 = arith.addf %152, %159 : vector<16x16x32xf32>
    %161 = vector.extract_strided_slice %95 {offsets = [2, 2], sizes = [16, 16], strides = [1, 1]} : vector<18x18xf32> to vector<16x16xf32>
    %162 = vector.extract_strided_slice %2 {offsets = [8, 0], sizes = [1, 32], strides = [1, 1]} : vector<9x32xf32> to vector<1x32xf32>
    %163 = vector.shape_cast %161 : vector<16x16xf32> to vector<16x16x1xf32>
    %164 = vector.shape_cast %162 : vector<1x32xf32> to vector<1x1x32xf32>
    %165 = vector.broadcast %163 : vector<16x16x1xf32> to vector<16x16x32xf32>
    %166 = vector.broadcast %164 : vector<1x1x32xf32> to vector<16x16x32xf32>
    %167 = arith.mulf %165, %166 : vector<16x16x32xf32>
    %168 = arith.addf %160, %167 : vector<16x16x32xf32>
    %169 = vector.shape_cast %3 : vector<1x32xf32> to vector<1x1x32xf32>
    %170 = vector.broadcast %169 : vector<1x1x32xf32> to vector<16x16x32xf32>
    %171 = arith.addf %168, %170 : vector<16x16x32xf32>
    %cst_13 = arith.constant 0.000000e+00 : f32
    %172 = vector.broadcast %cst_13 : f32 to vector<16x16x32xf32>
    %173 = arith.maximumf %171, %172 : vector<16x16x32xf32>
    %cst_14 = arith.constant dense<0.000000e+00> : vector<16x32xf32>
    %174 = vector.multi_reduction <add>, %173, %cst_14 [1] : vector<16x16x32xf32> to vector<16x32xf32>
    %cst_15 = arith.constant 6.250000e-02 : f32
    %175 = vector.broadcast %cst_15 : f32 to vector<16x32xf32>
    %176 = arith.mulf %174, %175 : vector<16x32xf32>
    %177 = tpu.concatenate %4, %91, %4, %176 in 0 : vector<1x32xf32>, vector<16x32xf32>, vector<1x32xf32>, vector<16x32xf32> -> vector<34x32xf32>
    %c32 = arith.constant 32 : index
    %c0_16 = arith.constant 0 : index
    %178 = vector.load %arg1[%c32, %c0_16] : memref<416x128xf32, #tpu.memory_space<vmem>>, vector<32x32xf32>
    %cst_17 = arith.constant dense<0.000000e+00> : vector<34x32xf32>
    %179 = tpu.matmul %177, %178, %cst_17 {dimension_numbers = #tpu.dot_dimension_numbers<[1], [0], [0], [1], [0, 0, 1, 1], [], []>} : vector<34x32xf32>, vector<32x32xf32>, vector<34x32xf32> -> vector<34x32xf32>
    %c64 = arith.constant 64 : index
    %c0_18 = arith.constant 0 : index
    %180 = vector.load %arg1[%c64, %c0_18] : memref<416x128xf32, #tpu.memory_space<vmem>>, vector<1x32xf32>
    %181 = vector.broadcast %180 : vector<1x32xf32> to vector<34x32xf32>
    %182 = arith.addf %179, %181 : vector<34x32xf32>
    %cst_19 = arith.constant dense<0.000000e+00> : vector<34xf32>
    %183 = vector.multi_reduction <add>, %182, %cst_19 [1] : vector<34x32xf32> to vector<34xf32>
    %184 = vector.shape_cast %183 : vector<34xf32> to vector<34x1xf32>
    %cst_20 = arith.constant 3.200000e+01 : f32
    %185 = vector.broadcast %cst_20 : f32 to vector<34x1xf32>
    %186 = arith.divf %184, %185 : vector<34x1xf32>
    %187 = vector.broadcast %186 : vector<34x1xf32> to vector<34x32xf32>
    %188 = arith.subf %182, %187 : vector<34x32xf32>
    %189 = arith.mulf %188, %188 : vector<34x32xf32>
    %cst_21 = arith.constant dense<0.000000e+00> : vector<34xf32>
    %190 = vector.multi_reduction <add>, %189, %cst_21 [1] : vector<34x32xf32> to vector<34xf32>
    %191 = vector.shape_cast %190 : vector<34xf32> to vector<34x1xf32>
    %cst_22 = arith.constant 3.200000e+01 : f32
    %192 = vector.broadcast %cst_22 : f32 to vector<34x1xf32>
    %193 = arith.divf %191, %192 : vector<34x1xf32>
    %194 = vector.broadcast %186 : vector<34x1xf32> to vector<34x32xf32>
    %195 = arith.subf %182, %194 : vector<34x32xf32>
    %cst_23 = arith.constant 9.99999974E-6 : f32
    %196 = vector.broadcast %cst_23 : f32 to vector<34x1xf32>
    %197 = arith.addf %193, %196 : vector<34x1xf32>
    %198 = math.rsqrt %197 : vector<34x1xf32>
    %199 = vector.broadcast %198 : vector<34x1xf32> to vector<34x32xf32>
    %200 = arith.mulf %195, %199 : vector<34x32xf32>
    %c72 = arith.constant 72 : index
    %c0_24 = arith.constant 0 : index
    %201 = vector.load %arg1[%c72, %c0_24] : memref<416x128xf32, #tpu.memory_space<vmem>>, vector<1x32xf32>
    %202 = vector.broadcast %201 : vector<1x32xf32> to vector<34x32xf32>
    %203 = arith.mulf %200, %202 : vector<34x32xf32>
    %c80 = arith.constant 80 : index
    %c0_25 = arith.constant 0 : index
    %204 = vector.load %arg1[%c80, %c0_25] : memref<416x128xf32, #tpu.memory_space<vmem>>, vector<1x32xf32>
    %205 = vector.broadcast %204 : vector<1x32xf32> to vector<34x32xf32>
    %206 = arith.addf %203, %205 : vector<34x32xf32>
    %c88 = arith.constant 88 : index
    %c0_26 = arith.constant 0 : index
    %207 = vector.load %arg1[%c88, %c0_26] : memref<416x128xf32, #tpu.memory_space<vmem>>, vector<32x96xf32>
    %cst_27 = arith.constant dense<0.000000e+00> : vector<34x96xf32>
    %208 = tpu.matmul %206, %207, %cst_27 {dimension_numbers = #tpu.dot_dimension_numbers<[1], [0], [0], [1], [0, 0, 1, 1], [], []>} : vector<34x32xf32>, vector<32x96xf32>, vector<34x96xf32> -> vector<34x96xf32>
    %c120 = arith.constant 120 : index
    %c0_28 = arith.constant 0 : index
    %209 = vector.load %arg1[%c120, %c0_28] : memref<416x128xf32, #tpu.memory_space<vmem>>, vector<1x96xf32>
    %210 = vector.broadcast %209 : vector<1x96xf32> to vector<34x96xf32>
    %211 = arith.addf %208, %210 : vector<34x96xf32>
    %212 = vector.extract_strided_slice %211 {offsets = [0, 0], sizes = [17, 32], strides = [1, 1]} : vector<34x96xf32> to vector<17x32xf32>
    %213 = vector.extract_strided_slice %211 {offsets = [0, 32], sizes = [17, 32], strides = [1, 1]} : vector<34x96xf32> to vector<17x32xf32>
    %214 = vector.extract_strided_slice %211 {offsets = [0, 64], sizes = [17, 32], strides = [1, 1]} : vector<34x96xf32> to vector<17x32xf32>
    %215 = tpu.transpose %213, [1, 0] : vector<17x32xf32> -> vector<32x17xf32>
    %cst_29 = arith.constant dense<0.000000e+00> : vector<17x17xf32>
    %216 = tpu.matmul %212, %215, %cst_29 {dimension_numbers = #tpu.dot_dimension_numbers<[1], [0], [0], [1], [0, 0, 1, 1], [], []>} : vector<17x32xf32>, vector<32x17xf32>, vector<17x17xf32> -> vector<17x17xf32>
    %cst_30 = arith.constant 0.176776692 : f32
    %217 = vector.broadcast %cst_30 : f32 to vector<17x17xf32>
    %218 = arith.mulf %216, %217 : vector<17x17xf32>
    %cst_31 = arith.constant dense<0xFF800000> : vector<17xf32>
    %219 = vector.multi_reduction <maximumf>, %218, %cst_31 [1] : vector<17x17xf32> to vector<17xf32>
    %220 = vector.shape_cast %219 : vector<17xf32> to vector<17x1xf32>
    %221 = vector.broadcast %220 : vector<17x1xf32> to vector<17x17xf32>
    %222 = arith.subf %218, %221 : vector<17x17xf32>
    %223 = math.exp %222 : vector<17x17xf32>
    %cst_32 = arith.constant dense<0.000000e+00> : vector<17xf32>
    %224 = vector.multi_reduction <add>, %223, %cst_32 [1] : vector<17x17xf32> to vector<17xf32>
    %225 = vector.shape_cast %224 : vector<17xf32> to vector<17x1xf32>
    %226 = tpu.reciprocal %225 {approx = true} : vector<17x1xf32> -> vector<17x1xf32>
    %227 = vector.broadcast %226 : vector<17x1xf32> to vector<17x17xf32>
    %228 = arith.mulf %223, %227 : vector<17x17xf32>
    %cst_33 = arith.constant dense<0.000000e+00> : vector<17x32xf32>
    %229 = tpu.matmul %228, %214, %cst_33 {dimension_numbers = #tpu.dot_dimension_numbers<[1], [0], [0], [1], [0, 0, 1, 1], [], []>} : vector<17x17xf32>, vector<17x32xf32>, vector<17x32xf32> -> vector<17x32xf32>
    %230 = vector.extract_strided_slice %211 {offsets = [17, 0], sizes = [17, 32], strides = [1, 1]} : vector<34x96xf32> to vector<17x32xf32>
    %231 = vector.extract_strided_slice %211 {offsets = [17, 32], sizes = [17, 32], strides = [1, 1]} : vector<34x96xf32> to vector<17x32xf32>
    %232 = vector.extract_strided_slice %211 {offsets = [17, 64], sizes = [17, 32], strides = [1, 1]} : vector<34x96xf32> to vector<17x32xf32>
    %233 = tpu.transpose %231, [1, 0] : vector<17x32xf32> -> vector<32x17xf32>
    %cst_34 = arith.constant dense<0.000000e+00> : vector<17x17xf32>
    %234 = tpu.matmul %230, %233, %cst_34 {dimension_numbers = #tpu.dot_dimension_numbers<[1], [0], [0], [1], [0, 0, 1, 1], [], []>} : vector<17x32xf32>, vector<32x17xf32>, vector<17x17xf32> -> vector<17x17xf32>
    %cst_35 = arith.constant 0.176776692 : f32
    %235 = vector.broadcast %cst_35 : f32 to vector<17x17xf32>
    %236 = arith.mulf %234, %235 : vector<17x17xf32>
    %cst_36 = arith.constant dense<0xFF800000> : vector<17xf32>
    %237 = vector.multi_reduction <maximumf>, %236, %cst_36 [1] : vector<17x17xf32> to vector<17xf32>
    %238 = vector.shape_cast %237 : vector<17xf32> to vector<17x1xf32>
    %239 = vector.broadcast %238 : vector<17x1xf32> to vector<17x17xf32>
    %240 = arith.subf %236, %239 : vector<17x17xf32>
    %241 = math.exp %240 : vector<17x17xf32>
    %cst_37 = arith.constant dense<0.000000e+00> : vector<17xf32>
    %242 = vector.multi_reduction <add>, %241, %cst_37 [1] : vector<17x17xf32> to vector<17xf32>
    %243 = vector.shape_cast %242 : vector<17xf32> to vector<17x1xf32>
    %244 = tpu.reciprocal %243 {approx = true} : vector<17x1xf32> -> vector<17x1xf32>
    %245 = vector.broadcast %244 : vector<17x1xf32> to vector<17x17xf32>
    %246 = arith.mulf %241, %245 : vector<17x17xf32>
    %cst_38 = arith.constant dense<0.000000e+00> : vector<17x32xf32>
    %247 = tpu.matmul %246, %232, %cst_38 {dimension_numbers = #tpu.dot_dimension_numbers<[1], [0], [0], [1], [0, 0, 1, 1], [], []>} : vector<17x17xf32>, vector<17x32xf32>, vector<17x32xf32> -> vector<17x32xf32>
    %248 = tpu.concatenate %229, %247 in 0 : vector<17x32xf32>, vector<17x32xf32> -> vector<34x32xf32>
    %c128 = arith.constant 128 : index
    %c0_39 = arith.constant 0 : index
    %249 = vector.load %arg1[%c128, %c0_39] : memref<416x128xf32, #tpu.memory_space<vmem>>, vector<32x32xf32>
    %cst_40 = arith.constant dense<0.000000e+00> : vector<34x32xf32>
    %250 = tpu.matmul %248, %249, %cst_40 {dimension_numbers = #tpu.dot_dimension_numbers<[1], [0], [0], [1], [0, 0, 1, 1], [], []>} : vector<34x32xf32>, vector<32x32xf32>, vector<34x32xf32> -> vector<34x32xf32>
    %251 = arith.addf %182, %250 : vector<34x32xf32>
    %c160 = arith.constant 160 : index
    %c0_41 = arith.constant 0 : index
    %252 = vector.load %arg1[%c160, %c0_41] : memref<416x128xf32, #tpu.memory_space<vmem>>, vector<1x32xf32>
    %253 = vector.broadcast %252 : vector<1x32xf32> to vector<34x32xf32>
    %254 = arith.addf %251, %253 : vector<34x32xf32>
    %cst_42 = arith.constant dense<0.000000e+00> : vector<34xf32>
    %255 = vector.multi_reduction <add>, %254, %cst_42 [1] : vector<34x32xf32> to vector<34xf32>
    %256 = vector.shape_cast %255 : vector<34xf32> to vector<34x1xf32>
    %cst_43 = arith.constant 3.200000e+01 : f32
    %257 = vector.broadcast %cst_43 : f32 to vector<34x1xf32>
    %258 = arith.divf %256, %257 : vector<34x1xf32>
    %259 = vector.broadcast %258 : vector<34x1xf32> to vector<34x32xf32>
    %260 = arith.subf %254, %259 : vector<34x32xf32>
    %261 = arith.mulf %260, %260 : vector<34x32xf32>
    %cst_44 = arith.constant dense<0.000000e+00> : vector<34xf32>
    %262 = vector.multi_reduction <add>, %261, %cst_44 [1] : vector<34x32xf32> to vector<34xf32>
    %263 = vector.shape_cast %262 : vector<34xf32> to vector<34x1xf32>
    %cst_45 = arith.constant 3.200000e+01 : f32
    %264 = vector.broadcast %cst_45 : f32 to vector<34x1xf32>
    %265 = arith.divf %263, %264 : vector<34x1xf32>
    %266 = vector.broadcast %258 : vector<34x1xf32> to vector<34x32xf32>
    %267 = arith.subf %254, %266 : vector<34x32xf32>
    %cst_46 = arith.constant 9.99999974E-6 : f32
    %268 = vector.broadcast %cst_46 : f32 to vector<34x1xf32>
    %269 = arith.addf %265, %268 : vector<34x1xf32>
    %270 = math.rsqrt %269 : vector<34x1xf32>
    %271 = vector.broadcast %270 : vector<34x1xf32> to vector<34x32xf32>
    %272 = arith.mulf %267, %271 : vector<34x32xf32>
    %c168 = arith.constant 168 : index
    %c0_47 = arith.constant 0 : index
    %273 = vector.load %arg1[%c168, %c0_47] : memref<416x128xf32, #tpu.memory_space<vmem>>, vector<1x32xf32>
    %274 = vector.broadcast %273 : vector<1x32xf32> to vector<34x32xf32>
    %275 = arith.mulf %272, %274 : vector<34x32xf32>
    %c176 = arith.constant 176 : index
    %c0_48 = arith.constant 0 : index
    %276 = vector.load %arg1[%c176, %c0_48] : memref<416x128xf32, #tpu.memory_space<vmem>>, vector<1x32xf32>
    %277 = vector.broadcast %276 : vector<1x32xf32> to vector<34x32xf32>
    %278 = arith.addf %275, %277 : vector<34x32xf32>
    %c184 = arith.constant 184 : index
    %c0_49 = arith.constant 0 : index
    %279 = vector.load %arg1[%c184, %c0_49] : memref<416x128xf32, #tpu.memory_space<vmem>>, vector<32x128xf32>
    %cst_50 = arith.constant dense<0.000000e+00> : vector<34x128xf32>
    %280 = tpu.matmul %278, %279, %cst_50 {dimension_numbers = #tpu.dot_dimension_numbers<[1], [0], [0], [1], [0, 0, 1, 1], [], []>} : vector<34x32xf32>, vector<32x128xf32>, vector<34x128xf32> -> vector<34x128xf32>
    %c216 = arith.constant 216 : index
    %c0_51 = arith.constant 0 : index
    %281 = vector.load %arg1[%c216, %c0_51] : memref<416x128xf32, #tpu.memory_space<vmem>>, vector<1x128xf32>
    %282 = vector.broadcast %281 : vector<1x128xf32> to vector<34x128xf32>
    %283 = arith.addf %280, %282 : vector<34x128xf32>
    %284 = arith.negf %283 : vector<34x128xf32>
    %285 = math.exp %284 : vector<34x128xf32>
    %cst_52 = arith.constant 1.000000e+00 : f32
    %286 = vector.broadcast %cst_52 : f32 to vector<34x128xf32>
    %287 = arith.addf %286, %285 : vector<34x128xf32>
    %288 = arith.divf %286, %287 : vector<34x128xf32>
    %289 = arith.mulf %283, %288 : vector<34x128xf32>
    %c224 = arith.constant 224 : index
    %c0_53 = arith.constant 0 : index
    %290 = vector.load %arg1[%c224, %c0_53] : memref<416x128xf32, #tpu.memory_space<vmem>>, vector<128x32xf32>
    %cst_54 = arith.constant dense<0.000000e+00> : vector<34x32xf32>
    %291 = tpu.matmul %289, %290, %cst_54 {dimension_numbers = #tpu.dot_dimension_numbers<[1], [0], [0], [1], [0, 0, 1, 1], [], []>} : vector<34x128xf32>, vector<128x32xf32>, vector<34x32xf32> -> vector<34x32xf32>
    %292 = arith.addf %254, %291 : vector<34x32xf32>
    %c352 = arith.constant 352 : index
    %c0_55 = arith.constant 0 : index
    %293 = vector.load %arg1[%c352, %c0_55] : memref<416x128xf32, #tpu.memory_space<vmem>>, vector<1x32xf32>
    %294 = vector.broadcast %293 : vector<1x32xf32> to vector<34x32xf32>
    %295 = arith.addf %292, %294 : vector<34x32xf32>
    %cst_56 = arith.constant dense<0.000000e+00> : vector<34xf32>
    %296 = vector.multi_reduction <add>, %295, %cst_56 [1] : vector<34x32xf32> to vector<34xf32>
    %297 = vector.shape_cast %296 : vector<34xf32> to vector<34x1xf32>
    %cst_57 = arith.constant 3.200000e+01 : f32
    %298 = vector.broadcast %cst_57 : f32 to vector<34x1xf32>
    %299 = arith.divf %297, %298 : vector<34x1xf32>
    %300 = vector.broadcast %299 : vector<34x1xf32> to vector<34x32xf32>
    %301 = arith.subf %295, %300 : vector<34x32xf32>
    %302 = arith.mulf %301, %301 : vector<34x32xf32>
    %cst_58 = arith.constant dense<0.000000e+00> : vector<34xf32>
    %303 = vector.multi_reduction <add>, %302, %cst_58 [1] : vector<34x32xf32> to vector<34xf32>
    %304 = vector.shape_cast %303 : vector<34xf32> to vector<34x1xf32>
    %cst_59 = arith.constant 3.200000e+01 : f32
    %305 = vector.broadcast %cst_59 : f32 to vector<34x1xf32>
    %306 = arith.divf %304, %305 : vector<34x1xf32>
    %307 = vector.broadcast %299 : vector<34x1xf32> to vector<34x32xf32>
    %308 = arith.subf %295, %307 : vector<34x32xf32>
    %cst_60 = arith.constant 9.99999974E-6 : f32
    %309 = vector.broadcast %cst_60 : f32 to vector<34x1xf32>
    %310 = arith.addf %306, %309 : vector<34x1xf32>
    %311 = math.rsqrt %310 : vector<34x1xf32>
    %312 = vector.broadcast %311 : vector<34x1xf32> to vector<34x32xf32>
    %313 = arith.mulf %308, %312 : vector<34x32xf32>
    %c360 = arith.constant 360 : index
    %c0_61 = arith.constant 0 : index
    %314 = vector.load %arg1[%c360, %c0_61] : memref<416x128xf32, #tpu.memory_space<vmem>>, vector<1x32xf32>
    %315 = vector.broadcast %314 : vector<1x32xf32> to vector<34x32xf32>
    %316 = arith.mulf %313, %315 : vector<34x32xf32>
    %c368 = arith.constant 368 : index
    %c0_62 = arith.constant 0 : index
    %317 = vector.load %arg1[%c368, %c0_62] : memref<416x128xf32, #tpu.memory_space<vmem>>, vector<1x32xf32>
    %318 = vector.broadcast %317 : vector<1x32xf32> to vector<34x32xf32>
    %319 = arith.addf %316, %318 : vector<34x32xf32>
    %c376 = arith.constant 376 : index
    %c0_63 = arith.constant 0 : index
    %320 = vector.load %arg1[%c376, %c0_63] : memref<416x128xf32, #tpu.memory_space<vmem>>, vector<32x128xf32>
    %cst_64 = arith.constant dense<0.000000e+00> : vector<34x128xf32>
    %321 = tpu.matmul %319, %320, %cst_64 {dimension_numbers = #tpu.dot_dimension_numbers<[1], [0], [0], [1], [0, 0, 1, 1], [], []>} : vector<34x32xf32>, vector<32x128xf32>, vector<34x128xf32> -> vector<34x128xf32>
    %c408 = arith.constant 408 : index
    %c0_65 = arith.constant 0 : index
    %322 = vector.load %arg1[%c408, %c0_65] : memref<416x128xf32, #tpu.memory_space<vmem>>, vector<1x128xf32>
    %323 = vector.broadcast %322 : vector<1x128xf32> to vector<34x128xf32>
    %324 = arith.addf %321, %323 : vector<34x128xf32>
    %c0_66 = arith.constant 0 : index
    %c0_67 = arith.constant 0 : index
    %325 = vector.load %arg2[%c0_66, %c0_67] : memref<34x128xf32, #tpu.memory_space<vmem>>, vector<34x128xf32>
    tpu.vector_store %arg2[%c0_66, %c0_67], %324 {strides = array<i32>} : memref<34x128xf32, #tpu.memory_space<vmem>>, vector<34x128xf32>,
    return
  }
}

</mosaic_0001>

<llo_original>
// kernel: sed_forward.1
$region0: #{sed_forward.1}
  #allocation0 [shape = 'u32[]', space=smem, size = 0x4, offset = 0x4, fixed_abs, tag = 'smem constant byte address 0x4 - core index']
  #allocation1 [shape = 'u32[144,128]{1,0:T(1,128)}', space=vmem, size = 0x12000, scoped, tag = 'internal scratch']
  %s0 = inlined_call_operand.hbm [shape: f32[2,1,16,16], index: 0, kind: input, shape index: {}]
  %s1 = inlined_call_operand.hbm [shape: f32[416,128], index: 1, kind: input, shape index: {}]
  %s2 = inlined_call_operand.vmem [shape: f32[34,128], index: 2, kind: output, shape index: {}]
  %s3 = sld [smem:[#allocation0]]
  $region26: #{sed_forward.1} parent=0
    _
  %s5 = ssub.s32 1, %s3
  %s6 = scalar_select 0, %s5, %s3
  $region1: #{sed_forward.1} parent=0
    #allocation2 [shape = 'u8[16384]{0}', space=vmem, size = 0x4000, scoped, tag = 'input window, operand 0, single buffered']
    #allocation3 [shape = 's32[1]{0}', space=sflag, size = 0x4, scoped, tag = 'scoped memory for sed_forward.1']
    #allocation4 [shape = 'u8[212992]{0}', space=vmem, size = 0x34000, scoped, tag = 'input window, operand 1, single buffered']
    #allocation5 [shape = 's32[1]{0}', space=sflag, size = 0x4, scoped, tag = 'scoped memory for sed_forward.1']
    %7 = vsyncpa [#allocation3], 0
    %8 = vsyncpa [#allocation5], 0
    // Predicated region
    $region2: #{sed_forward.1} parent=1 // pred_check
      _
    $region3: #{sed_forward.1} parent=1 // pred_check_branch
      %10 = sbr.rel (0) target = $region5
    $region4: #{sed_forward.1} parent=1 // pred_region
      %s12 = ssub.s32 512, 512
      %13 = vsyncadd [#allocation3], %s12
      %s14 = sshll.u32 [#allocation2], 4
      %s15 = int_to_ptr.vmem [resolvable:$true] %s14
      %20 = dma.hbm_to_vmem [thread:$0]  %s0, 512, %s15, [#allocation3], 128, 128, 8
    $region5: #{sed_forward.1} parent=1 // pred_fallthru
      _
    // Predicated region
    $region6: #{sed_forward.1} parent=1 // pred_check
      _
    $region7: #{sed_forward.1} parent=1 // pred_check_branch
      %22 = sbr.rel (0) target = $region9
    $region8: #{sed_forward.1} parent=1 // pred_region
      %s24 = ssub.s32 6656, 6656
      %25 = vsyncadd [#allocation5], %s24
      %s26 = sshll.u32 [#allocation4], 4
      %s27 = int_to_ptr.vmem [resolvable:$true] %s26
      %32 = dma.hbm_to_vmem [thread:$0]  %s1, 6656, %s27, [#allocation5], 128, 128, 8
    $region9: #{sed_forward.1} parent=1 // pred_fallthru
      _
    // Predicated region
    $region10: #{sed_forward.1} parent=1 // pred_check
      _
    $region11: #{sed_forward.1} parent=1 // pred_check_branch
      %34 = sbr.rel (0) target = $region13
    $region12: #{sed_forward.1} parent=1 // pred_region
      %35 = dma.done [#allocation3], 512
    $region13: #{sed_forward.1} parent=1 // pred_fallthru
      _
    // Predicated region
    $region14: #{sed_forward.1} parent=1 // pred_check
      _
    $region15: #{sed_forward.1} parent=1 // pred_check_branch
      %37 = sbr.rel (0) target = $region17
    $region16: #{sed_forward.1} parent=1 // pred_region
      %38 = dma.done [#allocation5], 6656
    $region17: #{sed_forward.1} parent=1 // pred_fallthru
      _
    %v39 = vld [vmem:[#allocation2] sm:$0xff]
    %v40 = vld [vmem:[#allocation2 + $0x8] sm:$0xff]
    %v41 = vld [vmem:[#allocation2 + $0x10] sm:$0xff]
    %v42 = vld [vmem:[#allocation2 + $0x18] sm:$0xff]
    %v43 = vld [vmem:[#allocation4] sm:$0xff]
    %v44 = vld [vmem:[#allocation4 + $0x8] sm:$0x1]
    %v45 = vld [vmem:[#allocation4 + $0x10] sm:$0x1]
    %v46 = vld [vmem:[#allocation4 + $0x18] sm:$0x1]
    %vm49 = vcmask 1040384
    %v50 = vrot.slane %v39, 7
    %v51 = vrot.slane %v40, 7
    %v52 = vsel %vm49, %v50, %v51
    %v55 = vsel %vm49, 0.0, %v50
    %v56 = vsel %vm49, %v51, 0.0
    %59 = vrot.lane.b32.xlu0 %v55, 1
    %v60 = vpop.permute.xlu0 %59
    %61 = vrot.lane.b32.xlu0 %v52, 1
    %v62 = vpop.permute.xlu0 %61
    %63 = vrot.lane.b32.xlu0 %v56, 1
    %v64 = vpop.permute.xlu0 %63
    %vm68 = vcmask 7168
    %v69 = vsel %vm68, 0.0, %v60
    %v70 = vsel %vm68, 0.0, %v62
    %v71 = vsel %vm68, 0.0, %v64
    %vm72 = vcmask 138240
    %v73 = vsel %vm72, %v69, 0.0
    %v74 = vsel %vm72, %v70, 0.0
    %v75 = vsel %vm72, %v71, 0.0
    %v76 = vlaneseq
    %v77 = vshrl.u32 %v76, 7
    %v78 = vsub.s32 0, %v77
    %v79 = vrot.slane %v73, %v78
    %81 = vbcast.lane.b32.xlu0 %v79, 256
    %v82 = vpop.permute.xlu0 %81
    %s84 = sor.u32 256, 8
    %85 = vbcast.lane.b32.xlu0 %v79, %s84
    %v86 = vpop.permute.xlu0 %85
    %v87 = vlaneseq
    %v88 = vshrl.u32 %v87, 7
    %v89 = vsub.s32 1, %v88
    %v90 = vrot.slane %v73, %v89
    %92 = vbcast.lane.b32.xlu0 %v90, 256
    %v93 = vpop.permute.xlu0 %92
    %s95 = sor.u32 256, 8
    %96 = vbcast.lane.b32.xlu0 %v90, %s95
    %v97 = vpop.permute.xlu0 %96
    %v98 = vlaneseq
    %v99 = vshrl.u32 %v98, 7
    %v100 = vsub.s32 2, %v99
    %v101 = vrot.slane %v73, %v100
    %103 = vbcast.lane.b32.xlu0 %v101, 256
    %v104 = vpop.permute.xlu0 %103
    %s106 = sor.u32 256, 8
    %107 = vbcast.lane.b32.xlu0 %v101, %s106
    %v108 = vpop.permute.xlu0 %107
    %v109 = vlaneseq
    %v110 = vshrl.u32 %v109, 7
    %v111 = vsub.s32 3, %v110
    %v112 = vrot.slane %v73, %v111
    %114 = vbcast.lane.b32.xlu0 %v112, 256
    %v115 = vpop.permute.xlu0 %114
    %s117 = sor.u32 256, 8
    %118 = vbcast.lane.b32.xlu0 %v112, %s117
    %v119 = vpop.permute.xlu0 %118
    %v120 = vlaneseq
    %v121 = vshrl.u32 %v120, 7
    %v122 = vsub.s32 4, %v121
    %v123 = vrot.slane %v73, %v122
    %125 = vbcast.lane.b32.xlu0 %v123, 256
    %v126 = vpop.permute.xlu0 %125
    %s128 = sor.u32 256, 8
    %129 = vbcast.lane.b32.xlu0 %v123, %s128
    %v130 = vpop.permute.xlu0 %129
    %v131 = vlaneseq
    %v132 = vshrl.u32 %v131, 7
    %v133 = vsub.s32 5, %v132
    %v134 = vrot.slane %v73, %v133
    %136 = vbcast.lane.b32.xlu0 %v134, 256
    %v137 = vpop.permute.xlu0 %136
    %s139 = sor.u32 256, 8
    %140 = vbcast.lane.b32.xlu0 %v134, %s139
    %v141 = vpop.permute.xlu0 %140
    %v142 = vlaneseq
    %v143 = vshrl.u32 %v142, 7
    %v144 = vsub.s32 6, %v143
    %v145 = vrot.slane %v73, %v144
    %147 = vbcast.lane.b32.xlu0 %v145, 256
    %v148 = vpop.permute.xlu0 %147
    %s150 = sor.u32 256, 8
    %151 = vbcast.lane.b32.xlu0 %v145, %s150
    %v152 = vpop.permute.xlu0 %151
    %v153 = vlaneseq
    %v154 = vshrl.u32 %v153, 7
    %v155 = vsub.s32 7, %v154
    %v156 = vrot.slane %v73, %v155
    %158 = vbcast.lane.b32.xlu0 %v156, 256
    %v159 = vpop.permute.xlu0 %158
    %s161 = sor.u32 256, 8
    %162 = vbcast.lane.b32.xlu0 %v156, %s161
    %v163 = vpop.permute.xlu0 %162
    %v164 = vlaneseq
    %v165 = vshrl.u32 %v164, 7
    %v166 = vsub.s32 0, %v165
    %v167 = vrot.slane %v74, %v166
    %169 = vbcast.lane.b32.xlu0 %v167, 256
    %v170 = vpop.permute.xlu0 %169
    %s172 = sor.u32 256, 8
    %173 = vbcast.lane.b32.xlu0 %v167, %s172
    %v174 = vpop.permute.xlu0 %173
    %v175 = vlaneseq
    %v176 = vshrl.u32 %v175, 7
    %v177 = vsub.s32 1, %v176
    %v178 = vrot.slane %v74, %v177
    %180 = vbcast.lane.b32.xlu0 %v178, 256
    %v181 = vpop.permute.xlu0 %180
    %s183 = sor.u32 256, 8
    %184 = vbcast.lane.b32.xlu0 %v178, %s183
    %v185 = vpop.permute.xlu0 %184
    %v186 = vlaneseq
    %v187 = vshrl.u32 %v186, 7
    %v188 = vsub.s32 2, %v187
    %v189 = vrot.slane %v74, %v188
    %191 = vbcast.lane.b32.xlu0 %v189, 256
    %v192 = vpop.permute.xlu0 %191
    %s194 = sor.u32 256, 8
    %195 = vbcast.lane.b32.xlu0 %v189, %s194
    %v196 = vpop.permute.xlu0 %195
    %v197 = vlaneseq
    %v198 = vshrl.u32 %v197, 7
    %v199 = vsub.s32 3, %v198
    %v200 = vrot.slane %v74, %v199
    %202 = vbcast.lane.b32.xlu0 %v200, 256
    %v203 = vpop.permute.xlu0 %202
    %s205 = sor.u32 256, 8
    %206 = vbcast.lane.b32.xlu0 %v200, %s205
    %v207 = vpop.permute.xlu0 %206
    %v208 = vlaneseq
    %v209 = vshrl.u32 %v208, 7
    %v210 = vsub.s32 4, %v209
    %v211 = vrot.slane %v74, %v210
    %213 = vbcast.lane.b32.xlu0 %v211, 256
    %v214 = vpop.permute.xlu0 %213
    %s216 = sor.u32 256, 8
    %217 = vbcast.lane.b32.xlu0 %v211, %s216
    %v218 = vpop.permute.xlu0 %217
    %v219 = vlaneseq
    %v220 = vshrl.u32 %v219, 7
    %v221 = vsub.s32 5, %v220
    %v222 = vrot.slane %v74, %v221
    %224 = vbcast.lane.b32.xlu0 %v222, 256
    %v225 = vpop.permute.xlu0 %224
    %s227 = sor.u32 256, 8
    %228 = vbcast.lane.b32.xlu0 %v222, %s227
    %v229 = vpop.permute.xlu0 %228
    %v230 = vlaneseq
    %v231 = vshrl.u32 %v230, 7
    %v232 = vsub.s32 6, %v231
    %v233 = vrot.slane %v74, %v232
    %235 = vbcast.lane.b32.xlu0 %v233, 256
    %v236 = vpop.permute.xlu0 %235
    %s238 = sor.u32 256, 8
    %239 = vbcast.lane.b32.xlu0 %v233, %s238
    %v240 = vpop.permute.xlu0 %239
    %v241 = vlaneseq
    %v242 = vshrl.u32 %v241, 7
    %v243 = vsub.s32 7, %v242
    %v244 = vrot.slane %v74, %v243
    %246 = vbcast.lane.b32.xlu0 %v244, 256
    %v247 = vpop.permute.xlu0 %246
    %s249 = sor.u32 256, 8
    %250 = vbcast.lane.b32.xlu0 %v244, %s249
    %v251 = vpop.permute.xlu0 %250
    %v252 = vlaneseq
    %v253 = vshrl.u32 %v252, 7
    %v254 = vsub.s32 0, %v253
    %v255 = vrot.slane %v43, %v254
    %v256 = vmul.f32 %v82, %v255
    %v257 = vmul.f32 %v86, %v255
    %v258 = vmul.f32 %v93, %v255
    %v259 = vmul.f32 %v97, %v255
    %v260 = vmul.f32 %v104, %v255
    %v261 = vmul.f32 %v108, %v255
    %v262 = vmul.f32 %v115, %v255
    %v263 = vmul.f32 %v119, %v255
    %v264 = vmul.f32 %v126, %v255
    %v265 = vmul.f32 %v130, %v255
    %v266 = vmul.f32 %v137, %v255
    %v267 = vmul.f32 %v141, %v255
    %v268 = vmul.f32 %v148, %v255
    %v269 = vmul.f32 %v152, %v255
    %v270 = vmul.f32 %v159, %v255
    %v271 = vmul.f32 %v163, %v255
    %v272 = vmul.f32 %v170, %v255
    %v273 = vmul.f32 %v174, %v255
    %v274 = vmul.f32 %v181, %v255
    %v275 = vmul.f32 %v185, %v255
    %v276 = vmul.f32 %v192, %v255
    %v277 = vmul.f32 %v196, %v255
    %v278 = vmul.f32 %v203, %v255
    %v279 = vmul.f32 %v207, %v255
    %v280 = vmul.f32 %v214, %v255
    %v281 = vmul.f32 %v218, %v255
    %v282 = vmul.f32 %v225, %v255
    %v283 = vmul.f32 %v229, %v255
    %v284 = vmul.f32 %v236, %v255
    %v285 = vmul.f32 %v240, %v255
    %v286 = vmul.f32 %v247, %v255
    %v287 = vmul.f32 %v251, %v255
    %v288 = vadd.f32 %v256, 0.0
    %v289 = vadd.f32 %v257, 0.0
    %v290 = vadd.f32 %v258, 0.0
    %v291 = vadd.f32 %v259, 0.0
    %v292 = vadd.f32 %v260, 0.0
    %v293 = vadd.f32 %v261, 0.0
    %v294 = vadd.f32 %v262, 0.0
    %v295 = vadd.f32 %v263, 0.0
    %v296 = vadd.f32 %v264, 0.0
    %v297 = vadd.f32 %v265, 0.0
    %v298 = vadd.f32 %v266, 0.0
    %v299 = vadd.f32 %v267, 0.0
    %v300 = vadd.f32 %v268, 0.0
    %v301 = vadd.f32 %v269, 0.0
    %v302 = vadd.f32 %v270, 0.0
    %v303 = vadd.f32 %v271, 0.0
    %v304 = vadd.f32 %v272, 0.0
    %v305 = vadd.f32 %v273, 0.0
    %v306 = vadd.f32 %v274, 0.0
    %v307 = vadd.f32 %v275, 0.0
    %v308 = vadd.f32 %v276, 0.0
    %v309 = vadd.f32 %v277, 0.0
    %v310 = vadd.f32 %v278, 0.0
    %v311 = vadd.f32 %v279, 0.0
    %v312 = vadd.f32 %v280, 0.0
    %v313 = vadd.f32 %v281, 0.0
    %v314 = vadd.f32 %v282, 0.0
    %v315 = vadd.f32 %v283, 0.0
    %v316 = vadd.f32 %v284, 0.0
    %v317 = vadd.f32 %v285, 0.0
    %v318 = vadd.f32 %v286, 0.0
    %v319 = vadd.f32 %v287, 0.0
    %s321 = sor.u32 256, 1
    %322 = vbcast.lane.b32.xlu0 %v79, %s321
    %v323 = vpop.permute.xlu0 %322
    %s325 = sor.u32 256, 9
    %326 = vbcast.lane.b32.xlu0 %v79, %s325
    %v327 = vpop.permute.xlu0 %326
    %s329 = sor.u32 256, 1
    %330 = vbcast.lane.b32.xlu0 %v90, %s329
    %v331 = vpop.permute.xlu0 %330
    %s333 = sor.u32 256, 9
    %334 = vbcast.lane.b32.xlu0 %v90, %s333
    %v335 = vpop.permute.xlu0 %334
    %s337 = sor.u32 256, 1
    %338 = vbcast.lane.b32.xlu0 %v101, %s337
    %v339 = vpop.permute.xlu0 %338
    %s341 = sor.u32 256, 9
    %342 = vbcast.lane.b32.xlu0 %v101, %s341
    %v343 = vpop.permute.xlu0 %342
    %s345 = sor.u32 256, 1
    %346 = vbcast.lane.b32.xlu0 %v112, %s345
    %v347 = vpop.permute.xlu0 %346
    %s349 = sor.u32 256, 9
    %350 = vbcast.lane.b32.xlu0 %v112, %s349
    %v351 = vpop.permute.xlu0 %350
    %s353 = sor.u32 256, 1
    %354 = vbcast.lane.b32.xlu0 %v123, %s353
    %v355 = vpop.permute.xlu0 %354
    %s357 = sor.u32 256, 9
    %358 = vbcast.lane.b32.xlu0 %v123, %s357
    %v359 = vpop.permute.xlu0 %358
    %s361 = sor.u32 256, 1
    %362 = vbcast.lane.b32.xlu0 %v134, %s361
    %v363 = vpop.permute.xlu0 %362
    %s365 = sor.u32 256, 9
    %366 = vbcast.lane.b32.xlu0 %v134, %s365
    %v367 = vpop.permute.xlu0 %366
    %s369 = sor.u32 256, 1
    %370 = vbcast.lane.b32.xlu0 %v145, %s369
    %v371 = vpop.permute.xlu0 %370
    %s373 = sor.u32 256, 9
    %374 = vbcast.lane.b32.xlu0 %v145, %s373
    %v375 = vpop.permute.xlu0 %374
    %s377 = sor.u32 256, 1
    %378 = vbcast.lane.b32.xlu0 %v156, %s377
    %v379 = vpop.permute.xlu0 %378
    %s381 = sor.u32 256, 9
    %382 = vbcast.lane.b32.xlu0 %v156, %s381
    %v383 = vpop.permute.xlu0 %382
    %s385 = sor.u32 256, 1
    %386 = vbcast.lane.b32.xlu0 %v167, %s385
    %v387 = vpop.permute.xlu0 %386
    %s389 = sor.u32 256, 9
    %390 = vbcast.lane.b32.xlu0 %v167, %s389
    %v391 = vpop.permute.xlu0 %390
    %s393 = sor.u32 256, 1
    %394 = vbcast.lane.b32.xlu0 %v178, %s393
    %v395 = vpop.permute.xlu0 %394
    %s397 = sor.u32 256, 9
    %398 = vbcast.lane.b32.xlu0 %v178, %s397
    %v399 = vpop.permute.xlu0 %398
    %s401 = sor.u32 256, 1
    %402 = vbcast.lane.b32.xlu0 %v189, %s401
    %v403 = vpop.permute.xlu0 %402
    %s405 = sor.u32 256, 9
    %406 = vbcast.lane.b32.xlu0 %v189, %s405
    %v407 = vpop.permute.xlu0 %406
    %s409 = sor.u32 256, 1
    %410 = vbcast.lane.b32.xlu0 %v200, %s409
    %v411 = vpop.permute.xlu0 %410
    %s413 = sor.u32 256, 9
    %414 = vbcast.lane.b32.xlu0 %v200, %s413
    %v415 = vpop.permute.xlu0 %414
    %s417 = sor.u32 256, 1
    %418 = vbcast.lane.b32.xlu0 %v211, %s417
    %v419 = vpop.permute.xlu0 %418
    %s421 = sor.u32 256, 9
    %422 = vbcast.lane.b32.xlu0 %v211, %s421
    %v423 = vpop.permute.xlu0 %422
    %s425 = sor.u32 256, 1
    %426 = vbcast.lane.b32.xlu0 %v222, %s425
    %v427 = vpop.permute.xlu0 %426
    %s429 = sor.u32 256, 9
    %430 = vbcast.lane.b32.xlu0 %v222, %s429
    %v431 = vpop.permute.xlu0 %430
    %s433 = sor.u32 256, 1
    %434 = vbcast.lane.b32.xlu0 %v233, %s433
    %v435 = vpop.permute.xlu0 %434
    %s437 = sor.u32 256, 9
    %438 = vbcast.lane.b32.xlu0 %v233, %s437
    %v439 = vpop.permute.xlu0 %438
    %s441 = sor.u32 256, 1
    %442 = vbcast.lane.b32.xlu0 %v244, %s441
    %v443 = vpop.permute.xlu0 %442
    %s445 = sor.u32 256, 9
    %446 = vbcast.lane.b32.xlu0 %v244, %s445
    %v447 = vpop.permute.xlu0 %446
    %v448 = vlaneseq
    %v449 = vshrl.u32 %v448, 7
    %v450 = vsub.s32 1, %v449
    %v451 = vrot.slane %v43, %v450
    %v452 = vmul.f32 %v323, %v451
    %v453 = vmul.f32 %v327, %v451
    %v454 = vmul.f32 %v331, %v451
    %v455 = vmul.f32 %v335, %v451
    %v456 = vmul.f32 %v339, %v451
    %v457 = vmul.f32 %v343, %v451
    %v458 = vmul.f32 %v347, %v451
    %v459 = vmul.f32 %v351, %v451
    %v460 = vmul.f32 %v355, %v451
    %v461 = vmul.f32 %v359, %v451
    %v462 = vmul.f32 %v363, %v451
    %v463 = vmul.f32 %v367, %v451
    %v464 = vmul.f32 %v371, %v451
    %v465 = vmul.f32 %v375, %v451
    %v466 = vmul.f32 %v379, %v451
    %v467 = vmul.f32 %v383, %v451
    %v468 = vmul.f32 %v387, %v451
    %v469 = vmul.f32 %v391, %v451
    %v470 = vmul.f32 %v395, %v451
    %v471 = vmul.f32 %v399, %v451
    %v472 = vmul.f32 %v403, %v451
    %v473 = vmul.f32 %v407, %v451
    %v474 = vmul.f32 %v411, %v451
    %v475 = vmul.f32 %v415, %v451
    %v476 = vmul.f32 %v419, %v451
    %v477 = vmul.f32 %v423, %v451
    %v478 = vmul.f32 %v427, %v451
    %v479 = vmul.f32 %v431, %v451
    %v480 = vmul.f32 %v435, %v451
    %v481 = vmul.f32 %v439, %v451
    %v482 = vmul.f32 %v443, %v451
    %v483 = vmul.f32 %v447, %v451
    %v484 = vadd.f32 %v288, %v452
    %v485 = vadd.f32 %v289, %v453
    %v486 = vadd.f32 %v290, %v454
    %v487 = vadd.f32 %v291, %v455
    %v488 = vadd.f32 %v292, %v456
    %v489 = vadd.f32 %v293, %v457
    %v490 = vadd.f32 %v294, %v458
    %v491 = vadd.f32 %v295, %v459
    %v492 = vadd.f32 %v296, %v460
    %v493 = vadd.f32 %v297, %v461
    %v494 = vadd.f32 %v298, %v462
    %v495 = vadd.f32 %v299, %v463
    %v496 = vadd.f32 %v300, %v464
    %v497 = vadd.f32 %v301, %v465
    %v498 = vadd.f32 %v302, %v466
    %v499 = vadd.f32 %v303, %v467
    %v500 = vadd.f32 %v304, %v468
    %v501 = vadd.f32 %v305, %v469
    %v502 = vadd.f32 %v306, %v470
    %v503 = vadd.f32 %v307, %v471
    %v504 = vadd.f32 %v308, %v472
    %v505 = vadd.f32 %v309, %v473
    %v506 = vadd.f32 %v310, %v474
    %v507 = vadd.f32 %v311, %v475
    %v508 = vadd.f32 %v312, %v476
    %v509 = vadd.f32 %v313, %v477
    %v510 = vadd.f32 %v314, %v478
    %v511 = vadd.f32 %v315, %v479
    %v512 = vadd.f32 %v316, %v480
    %v513 = vadd.f32 %v317, %v481
    %v514 = vadd.f32 %v318, %v482
    %v515 = vadd.f32 %v319, %v483
    %s517 = sor.u32 256, 2
    %518 = vbcast.lane.b32.xlu0 %v79, %s517
    %v519 = vpop.permute.xlu0 %518
    %s521 = sor.u32 256, 10
    %522 = vbcast.lane.b32.xlu0 %v79, %s521
    %v523 = vpop.permute.xlu0 %522
    %s525 = sor.u32 256, 2
    %526 = vbcast.lane.b32.xlu0 %v90, %s525
    %v527 = vpop.permute.xlu0 %526
    %s529 = sor.u32 256, 10
    %530 = vbcast.lane.b32.xlu0 %v90, %s529
    %v531 = vpop.permute.xlu0 %530
    %s533 = sor.u32 256, 2
    %534 = vbcast.lane.b32.xlu0 %v101, %s533
    %v535 = vpop.permute.xlu0 %534
    %s537 = sor.u32 256, 10
    %538 = vbcast.lane.b32.xlu0 %v101, %s537
    %v539 = vpop.permute.xlu0 %538
    %s541 = sor.u32 256, 2
    %542 = vbcast.lane.b32.xlu0 %v112, %s541
    %v543 = vpop.permute.xlu0 %542
    %s545 = sor.u32 256, 10
    %546 = vbcast.lane.b32.xlu0 %v112, %s545
    %v547 = vpop.permute.xlu0 %546
    %s549 = sor.u32 256, 2
    %550 = vbcast.lane.b32.xlu0 %v123, %s549
    %v551 = vpop.permute.xlu0 %550
    %s553 = sor.u32 256, 10
    %554 = vbcast.lane.b32.xlu0 %v123, %s553
    %v555 = vpop.permute.xlu0 %554
    %s557 = sor.u32 256, 2
    %558 = vbcast.lane.b32.xlu0 %v134, %s557
    %v559 = vpop.permute.xlu0 %558
    %s561 = sor.u32 256, 10
    %562 = vbcast.lane.b32.xlu0 %v134, %s561
    %v563 = vpop.permute.xlu0 %562
    %s565 = sor.u32 256, 2
    %566 = vbcast.lane.b32.xlu0 %v145, %s565
    %v567 = vpop.permute.xlu0 %566
    %s569 = sor.u32 256, 10
    %570 = vbcast.lane.b32.xlu0 %v145, %s569
    %v571 = vpop.permute.xlu0 %570
    %s573 = sor.u32 256, 2
    %574 = vbcast.lane.b32.xlu0 %v156, %s573
    %v575 = vpop.permute.xlu0 %574
    %s577 = sor.u32 256, 10
    %578 = vbcast.lane.b32.xlu0 %v156, %s577
    %v579 = vpop.permute.xlu0 %578
    %s581 = sor.u32 256, 2
    %582 = vbcast.lane.b32.xlu0 %v167, %s581
    %v583 = vpop.permute.xlu0 %582
    %s585 = sor.u32 256, 10
    %586 = vbcast.lane.b32.xlu0 %v167, %s585
    %v587 = vpop.permute.xlu0 %586
    %s589 = sor.u32 256, 2
    %590 = vbcast.lane.b32.xlu0 %v178, %s589
    %v591 = vpop.permute.xlu0 %590
    %s593 = sor.u32 256, 10
    %594 = vbcast.lane.b32.xlu0 %v178, %s593
    %v595 = vpop.permute.xlu0 %594
    %s597 = sor.u32 256, 2
    %598 = vbcast.lane.b32.xlu0 %v189, %s597
    %v599 = vpop.permute.xlu0 %598
    %s601 = sor.u32 256, 10
    %602 = vbcast.lane.b32.xlu0 %v189, %s601
    %v603 = vpop.permute.xlu0 %602
    %s605 = sor.u32 256, 2
    %606 = vbcast.lane.b32.xlu0 %v200, %s605
    %v607 = vpop.permute.xlu0 %606
    %s609 = sor.u32 256, 10
    %610 = vbcast.lane.b32.xlu0 %v200, %s609
    %v611 = vpop.permute.xlu0 %610
    %s613 = sor.u32 256, 2
    %614 = vbcast.lane.b32.xlu0 %v211, %s613
    %v615 = vpop.permute.xlu0 %614
    %s617 = sor.u32 256, 10
    %618 = vbcast.lane.b32.xlu0 %v211, %s617
    %v619 = vpop.permute.xlu0 %618
    %s621 = sor.u32 256, 2
    %622 = vbcast.lane.b32.xlu0 %v222, %s621
    %v623 = vpop.permute.xlu0 %622
    %s625 = sor.u32 256, 10
    %626 = vbcast.lane.b32.xlu0 %v222, %s625
    %v627 = vpop.permute.xlu0 %626
    %s629 = sor.u32 256, 2
    %630 = vbcast.lane.b32.xlu0 %v233, %s629
    %v631 = vpop.permute.xlu0 %630
    %s633 = sor.u32 256, 10
    %634 = vbcast.lane.b32.xlu0 %v233, %s633
    %v635 = vpop.permute.xlu0 %634
    %s637 = sor.u32 256, 2
    %638 = vbcast.lane.b32.xlu0 %v244, %s637
    %v639 = vpop.permute.xlu0 %638
    %s641 = sor.u32 256, 10
    %642 = vbcast.lane.b32.xlu0 %v244, %s641
    %v643 = vpop.permute.xlu0 %642
    %v644 = vlaneseq
    %v645 = vshrl.u32 %v644, 7
    %v646 = vsub.s32 2, %v645
    %v647 = vrot.slane %v43, %v646
    %v648 = vmul.f32 %v519, %v647
    %v649 = vmul.f32 %v523, %v647
    %v650 = vmul.f32 %v527, %v647
    %v651 = vmul.f32 %v531, %v647
    %v652 = vmul.f32 %v535, %v647
    %v653 = vmul.f32 %v539, %v647
    %v654 = vmul.f32 %v543, %v647
    %v655 = vmul.f32 %v547, %v647
    %v656 = vmul.f32 %v551, %v647
    %v657 = vmul.f32 %v555, %v647
    %v658 = vmul.f32 %v559, %v647
    %v659 = vmul.f32 %v563, %v647
    %v660 = vmul.f32 %v567, %v647
    %v661 = vmul.f32 %v571, %v647
    %v662 = vmul.f32 %v575, %v647
    %v663 = vmul.f32 %v579, %v647
    %v664 = vmul.f32 %v583, %v647
    %v665 = vmul.f32 %v587, %v647
    %v666 = vmul.f32 %v591, %v647
    %v667 = vmul.f32 %v595, %v647
    %v668 = vmul.f32 %v599, %v647
    %v669 = vmul.f32 %v603, %v647
    %v670 = vmul.f32 %v607, %v647
    %v671 = vmul.f32 %v611, %v647
    %v672 = vmul.f32 %v615, %v647
    %v673 = vmul.f32 %v619, %v647
    %v674 = vmul.f32 %v623, %v647
    %v675 = vmul.f32 %v627, %v647
    %v676 = vmul.f32 %v631, %v647
    %v677 = vmul.f32 %v635, %v647
    %v678 = vmul.f32 %v639, %v647
    %v679 = vmul.f32 %v643, %v647
    %v680 = vadd.f32 %v484, %v648
    %v681 = vadd.f32 %v485, %v649
    %v682 = vadd.f32 %v486, %v650
    %v683 = vadd.f32 %v487, %v651
    %v684 = vadd.f32 %v488, %v652
    %v685 = vadd.f32 %v489, %v653
    %v686 = vadd.f32 %v490, %v654
    %v687 = vadd.f32 %v491, %v655
    %v688 = vadd.f32 %v492, %v656
    %v689 = vadd.f32 %v493, %v657
    %v690 = vadd.f32 %v494, %v658
    %v691 = vadd.f32 %v495, %v659
    %v692 = vadd.f32 %v496, %v660
    %v693 = vadd.f32 %v497, %v661
    %v694 = vadd.f32 %v498, %v662
    %v695 = vadd.f32 %v499, %v663
    %v696 = vadd.f32 %v500, %v664
    %v697 = vadd.f32 %v501, %v665
    %v698 = vadd.f32 %v502, %v666
    %v699 = vadd.f32 %v503, %v667
    %v700 = vadd.f32 %v504, %v668
    %v701 = vadd.f32 %v505, %v669
    %v702 = vadd.f32 %v506, %v670
    %v703 = vadd.f32 %v507, %v671
    %v704 = vadd.f32 %v508, %v672
    %v705 = vadd.f32 %v509, %v673
    %v706 = vadd.f32 %v510, %v674
    %v707 = vadd.f32 %v511, %v675
    %v708 = vadd.f32 %v512, %v676
    %v709 = vadd.f32 %v513, %v677
    %v710 = vadd.f32 %v514, %v678
    %v711 = vadd.f32 %v515, %v679
    %v712 = vlaneseq
    %v713 = vshrl.u32 %v712, 7
    %v714 = vsub.s32 0, %v713
    %v715 = vrot.slane %v75, %v714
    %717 = vbcast.lane.b32.xlu0 %v715, 256
    %v718 = vpop.permute.xlu0 %717
    %s720 = sor.u32 256, 8
    %721 = vbcast.lane.b32.xlu0 %v715, %s720
    %v722 = vpop.permute.xlu0 %721
    %v723 = vlaneseq
    %v724 = vshrl.u32 %v723, 7
    %v725 = vsub.s32 3, %v724
    %v726 = vrot.slane %v43, %v725
    %v727 = vmul.f32 %v93, %v726
    %v728 = vmul.f32 %v97, %v726
    %v729 = vmul.f32 %v104, %v726
    %v730 = vmul.f32 %v108, %v726
    %v731 = vmul.f32 %v115, %v726
    %v732 = vmul.f32 %v119, %v726
    %v733 = vmul.f32 %v126, %v726
    %v734 = vmul.f32 %v130, %v726
    %v735 = vmul.f32 %v137, %v726
    %v736 = vmul.f32 %v141, %v726
    %v737 = vmul.f32 %v148, %v726
    %v738 = vmul.f32 %v152, %v726
    %v739 = vmul.f32 %v159, %v726
    %v740 = vmul.f32 %v163, %v726
    %v741 = vmul.f32 %v170, %v726
    %v742 = vmul.f32 %v174, %v726
    %v743 = vmul.f32 %v181, %v726
    %v744 = vmul.f32 %v185, %v726
    %v745 = vmul.f32 %v192, %v726
    %v746 = vmul.f32 %v196, %v726
    %v747 = vmul.f32 %v203, %v726
    %v748 = vmul.f32 %v207, %v726
    %v749 = vmul.f32 %v214, %v726
    %v750 = vmul.f32 %v218, %v726
    %v751 = vmul.f32 %v225, %v726
    %v752 = vmul.f32 %v229, %v726
    %v753 = vmul.f32 %v236, %v726
    %v754 = vmul.f32 %v240, %v726
    %v755 = vmul.f32 %v247, %v726
    %v756 = vmul.f32 %v251, %v726
    %v757 = vmul.f32 %v718, %v726
    %v758 = vmul.f32 %v722, %v726
    %v759 = vadd.f32 %v680, %v727
    %v760 = vadd.f32 %v681, %v728
    %v761 = vadd.f32 %v682, %v729
    %v762 = vadd.f32 %v683, %v730
    %v763 = vadd.f32 %v684, %v731
    %v764 = vadd.f32 %v685, %v732
    %v765 = vadd.f32 %v686, %v733
    %v766 = vadd.f32 %v687, %v734
    %v767 = vadd.f32 %v688, %v735
    %v768 = vadd.f32 %v689, %v736
    %v769 = vadd.f32 %v690, %v737
    %v770 = vadd.f32 %v691, %v738
    %v771 = vadd.f32 %v692, %v739
    %v772 = vadd.f32 %v693, %v740
    %v773 = vadd.f32 %v694, %v741
    %v774 = vadd.f32 %v695, %v742
    %v775 = vadd.f32 %v696, %v743
    %v776 = vadd.f32 %v697, %v744
    %v777 = vadd.f32 %v698, %v745
    %v778 = vadd.f32 %v699, %v746
    %v779 = vadd.f32 %v700, %v747
    %v780 = vadd.f32 %v701, %v748
    %v781 = vadd.f32 %v702, %v749
    %v782 = vadd.f32 %v703, %v750
    %v783 = vadd.f32 %v704, %v751
    %v784 = vadd.f32 %v705, %v752
    %v785 = vadd.f32 %v706, %v753
    %v786 = vadd.f32 %v707, %v754
    %v787 = vadd.f32 %v708, %v755
    %v788 = vadd.f32 %v709, %v756
    %v789 = vadd.f32 %v710, %v757
    %v790 = vadd.f32 %v711, %v758
    %s792 = sor.u32 256, 1
    %793 = vbcast.lane.b32.xlu0 %v715, %s792
    %v794 = vpop.permute.xlu0 %793
    %s796 = sor.u32 256, 9
    %797 = vbcast.lane.b32.xlu0 %v715, %s796
    %v798 = vpop.permute.xlu0 %797
    %v799 = vlaneseq
    %v800 = vshrl.u32 %v799, 7
    %v801 = vsub.s32 4, %v800
    %v802 = vrot.slane %v43, %v801
    %v803 = vmul.f32 %v331, %v802
    %v804 = vmul.f32 %v335, %v802
    %v805 = vmul.f32 %v339, %v802
    %v806 = vmul.f32 %v343, %v802
    %v807 = vmul.f32 %v347, %v802
    %v808 = vmul.f32 %v351, %v802
    %v809 = vmul.f32 %v355, %v802
    %v810 = vmul.f32 %v359, %v802
    %v811 = vmul.f32 %v363, %v802
    %v812 = vmul.f32 %v367, %v802
    %v813 = vmul.f32 %v371, %v802
    %v814 = vmul.f32 %v375, %v802
    %v815 = vmul.f32 %v379, %v802
    %v816 = vmul.f32 %v383, %v802
    %v817 = vmul.f32 %v387, %v802
    %v818 = vmul.f32 %v391, %v802
    %v819 = vmul.f32 %v395, %v802
    %v820 = vmul.f32 %v399, %v802
    %v821 = vmul.f32 %v403, %v802
    %v822 = vmul.f32 %v407, %v802
    %v823 = vmul.f32 %v411, %v802
    %v824 = vmul.f32 %v415, %v802
    %v825 = vmul.f32 %v419, %v802
    %v826 = vmul.f32 %v423, %v802
    %v827 = vmul.f32 %v427, %v802
    %v828 = vmul.f32 %v431, %v802
    %v829 = vmul.f32 %v435, %v802
    %v830 = vmul.f32 %v439, %v802
    %v831 = vmul.f32 %v443, %v802
    %v832 = vmul.f32 %v447, %v802
    %v833 = vmul.f32 %v794, %v802
    %v834 = vmul.f32 %v798, %v802
    %v835 = vadd.f32 %v759, %v803
    %v836 = vadd.f32 %v760, %v804
    %v837 = vadd.f32 %v761, %v805
    %v838 = vadd.f32 %v762, %v806
    %v839 = vadd.f32 %v763, %v807
    %v840 = vadd.f32 %v764, %v808
    %v841 = vadd.f32 %v765, %v809
    %v842 = vadd.f32 %v766, %v810
    %v843 = vadd.f32 %v767, %v811
    %v844 = vadd.f32 %v768, %v812
    %v845 = vadd.f32 %v769, %v813
    %v846 = vadd.f32 %v770, %v814
    %v847 = vadd.f32 %v771, %v815
    %v848 = vadd.f32 %v772, %v816
    %v849 = vadd.f32 %v773, %v817
    %v850 = vadd.f32 %v774, %v818
    %v851 = vadd.f32 %v775, %v819
    %v852 = vadd.f32 %v776, %v820
    %v853 = vadd.f32 %v777, %v821
    %v854 = vadd.f32 %v778, %v822
    %v855 = vadd.f32 %v779, %v823
    %v856 = vadd.f32 %v780, %v824
    %v857 = vadd.f32 %v781, %v825
    %v858 = vadd.f32 %v782, %v826
    %v859 = vadd.f32 %v783, %v827
    %v860 = vadd.f32 %v784, %v828
    %v861 = vadd.f32 %v785, %v829
    %v862 = vadd.f32 %v786, %v830
    %v863 = vadd.f32 %v787, %v831
    %v864 = vadd.f32 %v788, %v832
    %v865 = vadd.f32 %v789, %v833
    %v866 = vadd.f32 %v790, %v834
    %s868 = sor.u32 256, 2
    %869 = vbcast.lane.b32.xlu0 %v715, %s868
    %v870 = vpop.permute.xlu0 %869
    %s872 = sor.u32 256, 10
    %873 = vbcast.lane.b32.xlu0 %v715, %s872
    %v874 = vpop.permute.xlu0 %873
    %v875 = vlaneseq
    %v876 = vshrl.u32 %v875, 7
    %v877 = vsub.s32 5, %v876
    %v878 = vrot.slane %v43, %v877
    %v879 = vmul.f32 %v527, %v878
    %v880 = vmul.f32 %v531, %v878
    %v881 = vmul.f32 %v535, %v878
    %v882 = vmul.f32 %v539, %v878
    %v883 = vmul.f32 %v543, %v878
    %v884 = vmul.f32 %v547, %v878
    %v885 = vmul.f32 %v551, %v878
    %v886 = vmul.f32 %v555, %v878
    %v887 = vmul.f32 %v559, %v878
    %v888 = vmul.f32 %v563, %v878
    %v889 = vmul.f32 %v567, %v878
    %v890 = vmul.f32 %v571, %v878
    %v891 = vmul.f32 %v575, %v878
    %v892 = vmul.f32 %v579, %v878
    %v893 = vmul.f32 %v583, %v878
    %v894 = vmul.f32 %v587, %v878
    %v895 = vmul.f32 %v591, %v878
    %v896 = vmul.f32 %v595, %v878
    %v897 = vmul.f32 %v599, %v878
    %v898 = vmul.f32 %v603, %v878
    %v899 = vmul.f32 %v607, %v878
    %v900 = vmul.f32 %v611, %v878
    %v901 = vmul.f32 %v615, %v878
    %v902 = vmul.f32 %v619, %v878
    %v903 = vmul.f32 %v623, %v878
    %v904 = vmul.f32 %v627, %v878
    %v905 = vmul.f32 %v631, %v878
    %v906 = vmul.f32 %v635, %v878
    %v907 = vmul.f32 %v639, %v878
    %v908 = vmul.f32 %v643, %v878
    %v909 = vmul.f32 %v870, %v878
    %v910 = vmul.f32 %v874, %v878
    %v911 = vadd.f32 %v835, %v879
    %v912 = vadd.f32 %v836, %v880
    %v913 = vadd.f32 %v837, %v881
    %v914 = vadd.f32 %v838, %v882
    %v915 = vadd.f32 %v839, %v883
    %v916 = vadd.f32 %v840, %v884
    %v917 = vadd.f32 %v841, %v885
    %v918 = vadd.f32 %v842, %v886
    %v919 = vadd.f32 %v843, %v887
    %v920 = vadd.f32 %v844, %v888
    %v921 = vadd.f32 %v845, %v889
    %v922 = vadd.f32 %v846, %v890
    %v923 = vadd.f32 %v847, %v891
    %v924 = vadd.f32 %v848, %v892
    %v925 = vadd.f32 %v849, %v893
    %v926 = vadd.f32 %v850, %v894
    %v927 = vadd.f32 %v851, %v895
    %v928 = vadd.f32 %v852, %v896
    %v929 = vadd.f32 %v853, %v897
    %v930 = vadd.f32 %v854, %v898
    %v931 = vadd.f32 %v855, %v899
    %v932 = vadd.f32 %v856, %v900
    %v933 = vadd.f32 %v857, %v901
    %v934 = vadd.f32 %v858, %v902
    %v935 = vadd.f32 %v859, %v903
    %v936 = vadd.f32 %v860, %v904
    %v937 = vadd.f32 %v861, %v905
    %v938 = vadd.f32 %v862, %v906
    %v939 = vadd.f32 %v863, %v907
    %v940 = vadd.f32 %v864, %v908
    %v941 = vadd.f32 %v865, %v909
    %v942 = vadd.f32 %v866, %v910
    %v943 = vlaneseq
    %v944 = vshrl.u32 %v943, 7
    %v945 = vsub.s32 1, %v944
    %v946 = vrot.slane %v75, %v945
    %948 = vbcast.lane.b32.xlu0 %v946, 256
    %v949 = vpop.permute.xlu0 %948
    %s951 = sor.u32 256, 8
    %952 = vbcast.lane.b32.xlu0 %v946, %s951
    %v953 = vpop.permute.xlu0 %952
    %v954 = vlaneseq
    %v955 = vshrl.u32 %v954, 7
    %v956 = vsub.s32 6, %v955
    %v957 = vrot.slane %v43, %v956
    %v958 = vmul.f32 %v104, %v957
    %v959 = vmul.f32 %v108, %v957
    %v960 = vmul.f32 %v115, %v957
    %v961 = vmul.f32 %v119, %v957
    %v962 = vmul.f32 %v126, %v957
    %v963 = vmul.f32 %v130, %v957
    %v964 = vmul.f32 %v137, %v957
    %v965 = vmul.f32 %v141, %v957
    %v966 = vmul.f32 %v148, %v957
    %v967 = vmul.f32 %v152, %v957
    %v968 = vmul.f32 %v159, %v957
    %v969 = vmul.f32 %v163, %v957
    %v970 = vmul.f32 %v170, %v957
    %v971 = vmul.f32 %v174, %v957
    %v972 = vmul.f32 %v181, %v957
    %v973 = vmul.f32 %v185, %v957
    %v974 = vmul.f32 %v192, %v957
    %v975 = vmul.f32 %v196, %v957
    %v976 = vmul.f32 %v203, %v957
    %v977 = vmul.f32 %v207, %v957
    %v978 = vmul.f32 %v214, %v957
    %v979 = vmul.f32 %v218, %v957
    %v980 = vmul.f32 %v225, %v957
    %v981 = vmul.f32 %v229, %v957
    %v982 = vmul.f32 %v236, %v957
    %v983 = vmul.f32 %v240, %v957
    %v984 = vmul.f32 %v247, %v957
    %v985 = vmul.f32 %v251, %v957
    %v986 = vmul.f32 %v718, %v957
    %v987 = vmul.f32 %v722, %v957
    %v988 = vmul.f32 %v949, %v957
    %v989 = vmul.f32 %v953, %v957
    %v990 = vadd.f32 %v911, %v958
    %v991 = vadd.f32 %v912, %v959
    %v992 = vadd.f32 %v913, %v960
    %v993 = vadd.f32 %v914, %v961
    %v994 = vadd.f32 %v915, %v962
    %v995 = vadd.f32 %v916, %v963
    %v996 = vadd.f32 %v917, %v964
    %v997 = vadd.f32 %v918, %v965
    %v998 = vadd.f32 %v919, %v966
    %v999 = vadd.f32 %v920, %v967
    %v1000 = vadd.f32 %v921, %v968
    %v1001 = vadd.f32 %v922, %v969
    %v1002 = vadd.f32 %v923, %v970
    %v1003 = vadd.f32 %v924, %v971
    %v1004 = vadd.f32 %v925, %v972
    %v1005 = vadd.f32 %v926, %v973
    %v1006 = vadd.f32 %v927, %v974
    %v1007 = vadd.f32 %v928, %v975
    %v1008 = vadd.f32 %v929, %v976
    %v1009 = vadd.f32 %v930, %v977
    %v1010 = vadd.f32 %v931, %v978
    %v1011 = vadd.f32 %v932, %v979
    %v1012 = vadd.f32 %v933, %v980
    %v1013 = vadd.f32 %v934, %v981
    %v1014 = vadd.f32 %v935, %v982
    %v1015 = vadd.f32 %v936, %v983
    %v1016 = vadd.f32 %v937, %v984
    %v1017 = vadd.f32 %v938, %v985
    %v1018 = vadd.f32 %v939, %v986
    %v1019 = vadd.f32 %v940, %v987
    %v1020 = vadd.f32 %v941, %v988
    %v1021 = vadd.f32 %v942, %v989
    %s1023 = sor.u32 256, 1
    %1024 = vbcast.lane.b32.xlu0 %v946, %s1023
    %v1025 = vpop.permute.xlu0 %1024
    %s1027 = sor.u32 256, 9
    %1028 = vbcast.lane.b32.xlu0 %v946, %s1027
    %v1029 = vpop.permute.xlu0 %1028
    %v1030 = vlaneseq
    %v1031 = vshrl.u32 %v1030, 7
    %v1032 = vsub.s32 7, %v1031
    %v1033 = vrot.slane %v43, %v1032
    %v1034 = vmul.f32 %v339, %v1033
    %v1035 = vmul.f32 %v343, %v1033
    %v1036 = vmul.f32 %v347, %v1033
    %v1037 = vmul.f32 %v351, %v1033
    %v1038 = vmul.f32 %v355, %v1033
    %v1039 = vmul.f32 %v359, %v1033
    %v1040 = vmul.f32 %v363, %v1033
    %v1041 = vmul.f32 %v367, %v1033
    %v1042 = vmul.f32 %v371, %v1033
    %v1043 = vmul.f32 %v375, %v1033
    %v1044 = vmul.f32 %v379, %v1033
    %v1045 = vmul.f32 %v383, %v1033
    %v1046 = vmul.f32 %v387, %v1033
    %v1047 = vmul.f32 %v391, %v1033
    %v1048 = vmul.f32 %v395, %v1033
    %v1049 = vmul.f32 %v399, %v1033
    %v1050 = vmul.f32 %v403, %v1033
    %v1051 = vmul.f32 %v407, %v1033
    %v1052 = vmul.f32 %v411, %v1033
    %v1053 = vmul.f32 %v415, %v1033
    %v1054 = vmul.f32 %v419, %v1033
    %v1055 = vmul.f32 %v423, %v1033
    %v1056 = vmul.f32 %v427, %v1033
    %v1057 = vmul.f32 %v431, %v1033
    %v1058 = vmul.f32 %v435, %v1033
    %v1059 = vmul.f32 %v439, %v1033
    %v1060 = vmul.f32 %v443, %v1033
    %v1061 = vmul.f32 %v447, %v1033
    %v1062 = vmul.f32 %v794, %v1033
    %v1063 = vmul.f32 %v798, %v1033
    %v1064 = vmul.f32 %v1025, %v1033
    %v1065 = vmul.f32 %v1029, %v1033
    %v1066 = vadd.f32 %v990, %v1034
    %v1067 = vadd.f32 %v991, %v1035
    %v1068 = vadd.f32 %v992, %v1036
    %v1069 = vadd.f32 %v993, %v1037
    %v1070 = vadd.f32 %v994, %v1038
    %v1071 = vadd.f32 %v995, %v1039
    %v1072 = vadd.f32 %v996, %v1040
    %v1073 = vadd.f32 %v997, %v1041
    %v1074 = vadd.f32 %v998, %v1042
    %v1075 = vadd.f32 %v999, %v1043
    %v1076 = vadd.f32 %v1000, %v1044
    %v1077 = vadd.f32 %v1001, %v1045
    %v1078 = vadd.f32 %v1002, %v1046
    %v1079 = vadd.f32 %v1003, %v1047
    %v1080 = vadd.f32 %v1004, %v1048
    %v1081 = vadd.f32 %v1005, %v1049
    %v1082 = vadd.f32 %v1006, %v1050
    %v1083 = vadd.f32 %v1007, %v1051
    %v1084 = vadd.f32 %v1008, %v1052
    %v1085 = vadd.f32 %v1009, %v1053
    %v1086 = vadd.f32 %v1010, %v1054
    %v1087 = vadd.f32 %v1011, %v1055
    %v1088 = vadd.f32 %v1012, %v1056
    %v1089 = vadd.f32 %v1013, %v1057
    %v1090 = vadd.f32 %v1014, %v1058
    %v1091 = vadd.f32 %v1015, %v1059
    %v1092 = vadd.f32 %v1016, %v1060
    %v1093 = vadd.f32 %v1017, %v1061
    %v1094 = vadd.f32 %v1018, %v1062
    %v1095 = vadd.f32 %v1019, %v1063
    %v1096 = vadd.f32 %v1020, %v1064
    %v1097 = vadd.f32 %v1021, %v1065
    %s1099 = sor.u32 256, 2
    %1100 = vbcast.lane.b32.xlu0 %v946, %s1099
    %v1101 = vpop.permute.xlu0 %1100
    %s1103 = sor.u32 256, 10
    %1104 = vbcast.lane.b32.xlu0 %v946, %s1103
    %v1105 = vpop.permute.xlu0 %1104
    %v1106 = vlaneseq
    %v1107 = vshrl.u32 %v1106, 7
    %v1108 = vsub.s32 0, %v1107
    %v1109 = vrot.slane %v44, %v1108
    %v1110 = vmul.f32 %v535, %v1109
    %v1111 = vmul.f32 %v539, %v1109
    %v1112 = vmul.f32 %v543, %v1109
    %v1113 = vmul.f32 %v547, %v1109
    %v1114 = vmul.f32 %v551, %v1109
    %v1115 = vmul.f32 %v555, %v1109
    %v1116 = vmul.f32 %v559, %v1109
    %v1117 = vmul.f32 %v563, %v1109
    %v1118 = vmul.f32 %v567, %v1109
    %v1119 = vmul.f32 %v571, %v1109
    %v1120 = vmul.f32 %v575, %v1109
    %v1121 = vmul.f32 %v579, %v1109
    %v1122 = vmul.f32 %v583, %v1109
    %v1123 = vmul.f32 %v587, %v1109
    %v1124 = vmul.f32 %v591, %v1109
    %v1125 = vmul.f32 %v595, %v1109
    %v1126 = vmul.f32 %v599, %v1109
    %v1127 = vmul.f32 %v603, %v1109
    %v1128 = vmul.f32 %v607, %v1109
    %v1129 = vmul.f32 %v611, %v1109
    %v1130 = vmul.f32 %v615, %v1109
    %v1131 = vmul.f32 %v619, %v1109
    %v1132 = vmul.f32 %v623, %v1109
    %v1133 = vmul.f32 %v627, %v1109
    %v1134 = vmul.f32 %v631, %v1109
    %v1135 = vmul.f32 %v635, %v1109
    %v1136 = vmul.f32 %v639, %v1109
    %v1137 = vmul.f32 %v643, %v1109
    %v1138 = vmul.f32 %v870, %v1109
    %v1139 = vmul.f32 %v874, %v1109
    %v1140 = vmul.f32 %v1101, %v1109
    %v1141 = vmul.f32 %v1105, %v1109
    %v1142 = vadd.f32 %v1066, %v1110
    %v1143 = vadd.f32 %v1067, %v1111
    %v1144 = vadd.f32 %v1068, %v1112
    %v1145 = vadd.f32 %v1069, %v1113
    %v1146 = vadd.f32 %v1070, %v1114
    %v1147 = vadd.f32 %v1071, %v1115
    %v1148 = vadd.f32 %v1072, %v1116
    %v1149 = vadd.f32 %v1073, %v1117
    %v1150 = vadd.f32 %v1074, %v1118
    %v1151 = vadd.f32 %v1075, %v1119
    %v1152 = vadd.f32 %v1076, %v1120
    %v1153 = vadd.f32 %v1077, %v1121
    %v1154 = vadd.f32 %v1078, %v1122
    %v1155 = vadd.f32 %v1079, %v1123
    %v1156 = vadd.f32 %v1080, %v1124
    %v1157 = vadd.f32 %v1081, %v1125
    %v1158 = vadd.f32 %v1082, %v1126
    %v1159 = vadd.f32 %v1083, %v1127
    %v1160 = vadd.f32 %v1084, %v1128
    %v1161 = vadd.f32 %v1085, %v1129
    %v1162 = vadd.f32 %v1086, %v1130
    %v1163 = vadd.f32 %v1087, %v1131
    %v1164 = vadd.f32 %v1088, %v1132
    %v1165 = vadd.f32 %v1089, %v1133
    %v1166 = vadd.f32 %v1090, %v1134
    %v1167 = vadd.f32 %v1091, %v1135
    %v1168 = vadd.f32 %v1092, %v1136
    %v1169 = vadd.f32 %v1093, %v1137
    %v1170 = vadd.f32 %v1094, %v1138
    %v1171 = vadd.f32 %v1095, %v1139
    %v1172 = vadd.f32 %v1096, %v1140
    %v1173 = vadd.f32 %v1097, %v1141
    %v1174 = vlaneseq
    %v1175 = vshrl.u32 %v1174, 7
    %v1176 = vsub.s32 0, %v1175
    %v1177 = vrot.slane %v45, %v1176
    %v1178 = vadd.f32 %v1142, %v1177
    %v1179 = vadd.f32 %v1143, %v1177
    %v1180 = vadd.f32 %v1144, %v1177
    %v1181 = vadd.f32 %v1145, %v1177
    %v1182 = vadd.f32 %v1146, %v1177
    %v1183 = vadd.f32 %v1147, %v1177
    %v1184 = vadd.f32 %v1148, %v1177
    %v1185 = vadd.f32 %v1149, %v1177
    %v1186 = vadd.f32 %v1150, %v1177
    %v1187 = vadd.f32 %v1151, %v1177
    %v1188 = vadd.f32 %v1152, %v1177
    %v1189 = vadd.f32 %v1153, %v1177
    %v1190 = vadd.f32 %v1154, %v1177
    %v1191 = vadd.f32 %v1155, %v1177
    %v1192 = vadd.f32 %v1156, %v1177
    %v1193 = vadd.f32 %v1157, %v1177
    %v1194 = vadd.f32 %v1158, %v1177
    %v1195 = vadd.f32 %v1159, %v1177
    %v1196 = vadd.f32 %v1160, %v1177
    %v1197 = vadd.f32 %v1161, %v1177
    %v1198 = vadd.f32 %v1162, %v1177
    %v1199 = vadd.f32 %v1163, %v1177
    %v1200 = vadd.f32 %v1164, %v1177
    %v1201 = vadd.f32 %v1165, %v1177
    %v1202 = vadd.f32 %v1166, %v1177
    %v1203 = vadd.f32 %v1167, %v1177
    %v1204 = vadd.f32 %v1168, %v1177
    %v1205 = vadd.f32 %v1169, %v1177
    %v1206 = vadd.f32 %v1170, %v1177
    %v1207 = vadd.f32 %v1171, %v1177
    %v1208 = vadd.f32 %v1172, %v1177
    %v1209 = vadd.f32 %v1173, %v1177
    %v1210 = vmax.f32 %v1178, 0.0
    %v1211 = vmax.f32 %v1179, 0.0
    %v1212 = vmax.f32 %v1180, 0.0
    %v1213 = vmax.f32 %v1181, 0.0
    %v1214 = vmax.f32 %v1182, 0.0
    %v1215 = vmax.f32 %v1183, 0.0
    %v1216 = vmax.f32 %v1184, 0.0
    %v1217 = vmax.f32 %v1185, 0.0
    %v1218 = vmax.f32 %v1186, 0.0
    %v1219 = vmax.f32 %v1187, 0.0
    %v1220 = vmax.f32 %v1188, 0.0
    %v1221 = vmax.f32 %v1189, 0.0
    %v1222 = vmax.f32 %v1190, 0.0
    %v1223 = vmax.f32 %v1191, 0.0
    %v1224 = vmax.f32 %v1192, 0.0
    %v1225 = vmax.f32 %v1193, 0.0
    %v1226 = vmax.f32 %v1194, 0.0
    %v1227 = vmax.f32 %v1195, 0.0
    %v1228 = vmax.f32 %v1196, 0.0
    %v1229 = vmax.f32 %v1197, 0.0
    %v1230 = vmax.f32 %v1198, 0.0
    %v1231 = vmax.f32 %v1199, 0.0
    %v1232 = vmax.f32 %v1200, 0.0
    %v1233 = vmax.f32 %v1201, 0.0
    %v1234 = vmax.f32 %v1202, 0.0
    %v1235 = vmax.f32 %v1203, 0.0
    %v1236 = vmax.f32 %v1204, 0.0
    %v1237 = vmax.f32 %v1205, 0.0
    %v1238 = vmax.f32 %v1206, 0.0
    %v1239 = vmax.f32 %v1207, 0.0
    %v1240 = vmax.f32 %v1208, 0.0
    %v1241 = vmax.f32 %v1209, 0.0
    %vm1242 = vcmask 261120
    %v1243 = vsel %vm1242, %v1210, 0.0
    %v1244 = vsel %vm1242, %v1211, 0.0
    %v1245 = vadd.f32 %v1243, %v1244
    %v1246 = vrot.slane %v1245, 4
    %v1247 = vadd.f32 %v1245, %v1246
    %v1248 = vrot.slane %v1247, 2
    %v1249 = vadd.f32 %v1247, %v1248
    %v1250 = vrot.slane %v1249, 1
    %v1251 = vadd.f32 %v1249, %v1250
    %v1252 = vsel %vm1242, %v1212, 0.0
    %v1253 = vsel %vm1242, %v1213, 0.0
    %v1254 = vadd.f32 %v1252, %v1253
    %v1255 = vrot.slane %v1254, 4
    %v1256 = vadd.f32 %v1254, %v1255
    %v1257 = vrot.slane %v1256, 2
    %v1258 = vadd.f32 %v1256, %v1257
    %v1259 = vrot.slane %v1258, 1
    %v1260 = vadd.f32 %v1258, %v1259
    %v1261 = vsel %vm1242, %v1214, 0.0
    %v1262 = vsel %vm1242, %v1215, 0.0
    %v1263 = vadd.f32 %v1261, %v1262
    %v1264 = vrot.slane %v1263, 4
    %v1265 = vadd.f32 %v1263, %v1264
    %v1266 = vrot.slane %v1265, 2
    %v1267 = vadd.f32 %v1265, %v1266
    %v1268 = vrot.slane %v1267, 1
    %v1269 = vadd.f32 %v1267, %v1268
    %v1270 = vsel %vm1242, %v1216, 0.0
    %v1271 = vsel %vm1242, %v1217, 0.0
    %v1272 = vadd.f32 %v1270, %v1271
    %v1273 = vrot.slane %v1272, 4
    %v1274 = vadd.f32 %v1272, %v1273
    %v1275 = vrot.slane %v1274, 2
    %v1276 = vadd.f32 %v1274, %v1275
    %v1277 = vrot.slane %v1276, 1
    %v1278 = vadd.f32 %v1276, %v1277
    %v1279 = vsel %vm1242, %v1218, 0.0
    %v1280 = vsel %vm1242, %v1219, 0.0
    %v1281 = vadd.f32 %v1279, %v1280
    %v1282 = vrot.slane %v1281, 4
    %v1283 = vadd.f32 %v1281, %v1282
    %v1284 = vrot.slane %v1283, 2
    %v1285 = vadd.f32 %v1283, %v1284
    %v1286 = vrot.slane %v1285, 1
    %v1287 = vadd.f32 %v1285, %v1286
    %v1288 = vsel %vm1242, %v1220, 0.0
    %v1289 = vsel %vm1242, %v1221, 0.0
    %v1290 = vadd.f32 %v1288, %v1289
    %v1291 = vrot.slane %v1290, 4
    %v1292 = vadd.f32 %v1290, %v1291
    %v1293 = vrot.slane %v1292, 2
    %v1294 = vadd.f32 %v1292, %v1293
    %v1295 = vrot.slane %v1294, 1
    %v1296 = vadd.f32 %v1294, %v1295
    %v1297 = vsel %vm1242, %v1222, 0.0
    %v1298 = vsel %vm1242, %v1223, 0.0
    %v1299 = vadd.f32 %v1297, %v1298
    %v1300 = vrot.slane %v1299, 4
    %v1301 = vadd.f32 %v1299, %v1300
    %v1302 = vrot.slane %v1301, 2
    %v1303 = vadd.f32 %v1301, %v1302
    %v1304 = vrot.slane %v1303, 1
    %v1305 = vadd.f32 %v1303, %v1304
    %v1306 = vsel %vm1242, %v1224, 0.0
    %v1307 = vsel %vm1242, %v1225, 0.0
    %v1308 = vadd.f32 %v1306, %v1307
    %v1309 = vrot.slane %v1308, 4
    %v1310 = vadd.f32 %v1308, %v1309
    %v1311 = vrot.slane %v1310, 2
    %v1312 = vadd.f32 %v1310, %v1311
    %v1313 = vrot.slane %v1312, 1
    %v1314 = vadd.f32 %v1312, %v1313
    %v1315 = vsel %vm1242, %v1226, 0.0
    %v1316 = vsel %vm1242, %v1227, 0.0
    %v1317 = vadd.f32 %v1315, %v1316
    %v1318 = vrot.slane %v1317, 4
    %v1319 = vadd.f32 %v1317, %v1318
    %v1320 = vrot.slane %v1319, 2
    %v1321 = vadd.f32 %v1319, %v1320
    %v1322 = vrot.slane %v1321, 1
    %v1323 = vadd.f32 %v1321, %v1322
    %v1324 = vsel %vm1242, %v1228, 0.0
    %v1325 = vsel %vm1242, %v1229, 0.0
    %v1326 = vadd.f32 %v1324, %v1325
    %v1327 = vrot.slane %v1326, 4
    %v1328 = vadd.f32 %v1326, %v1327
    %v1329 = vrot.slane %v1328, 2
    %v1330 = vadd.f32 %v1328, %v1329
    %v1331 = vrot.slane %v1330, 1
    %v1332 = vadd.f32 %v1330, %v1331
    %v1333 = vsel %vm1242, %v1230, 0.0
    %v1334 = vsel %vm1242, %v1231, 0.0
    %v1335 = vadd.f32 %v1333, %v1334
    %v1336 = vrot.slane %v1335, 4
    %v1337 = vadd.f32 %v1335, %v1336
    %v1338 = vrot.slane %v1337, 2
    %v1339 = vadd.f32 %v1337, %v1338
    %v1340 = vrot.slane %v1339, 1
    %v1341 = vadd.f32 %v1339, %v1340
    %v1342 = vsel %vm1242, %v1232, 0.0
    %v1343 = vsel %vm1242, %v1233, 0.0
    %v1344 = vadd.f32 %v1342, %v1343
    %v1345 = vrot.slane %v1344, 4
    %v1346 = vadd.f32 %v1344, %v1345
    %v1347 = vrot.slane %v1346, 2
    %v1348 = vadd.f32 %v1346, %v1347
    %v1349 = vrot.slane %v1348, 1
    %v1350 = vadd.f32 %v1348, %v1349
    %v1351 = vsel %vm1242, %v1234, 0.0
    %v1352 = vsel %vm1242, %v1235, 0.0
    %v1353 = vadd.f32 %v1351, %v1352
    %v1354 = vrot.slane %v1353, 4
    %v1355 = vadd.f32 %v1353, %v1354
    %v1356 = vrot.slane %v1355, 2
    %v1357 = vadd.f32 %v1355, %v1356
    %v1358 = vrot.slane %v1357, 1
    %v1359 = vadd.f32 %v1357, %v1358
    %v1360 = vsel %vm1242, %v1236, 0.0
    %v1361 = vsel %vm1242, %v1237, 0.0
    %v1362 = vadd.f32 %v1360, %v1361
    %v1363 = vrot.slane %v1362, 4
    %v1364 = vadd.f32 %v1362, %v1363
    %v1365 = vrot.slane %v1364, 2
    %v1366 = vadd.f32 %v1364, %v1365
    %v1367 = vrot.slane %v1366, 1
    %v1368 = vadd.f32 %v1366, %v1367
    %v1369 = vsel %vm1242, %v1238, 0.0
    %v1370 = vsel %vm1242, %v1239, 0.0
    %v1371 = vadd.f32 %v1369, %v1370
    %v1372 = vrot.slane %v1371, 4
    %v1373 = vadd.f32 %v1371, %v1372
    %v1374 = vrot.slane %v1373, 2
    %v1375 = vadd.f32 %v1373, %v1374
    %v1376 = vrot.slane %v1375, 1
    %v1377 = vadd.f32 %v1375, %v1376
    %v1378 = vsel %vm1242, %v1240, 0.0
    %v1379 = vsel %vm1242, %v1241, 0.0
    %v1380 = vadd.f32 %v1378, %v1379
    %v1381 = vrot.slane %v1380, 4
    %v1382 = vadd.f32 %v1380, %v1381
    %v1383 = vrot.slane %v1382, 2
    %v1384 = vadd.f32 %v1382, %v1383
    %v1385 = vrot.slane %v1384, 1
    %v1386 = vadd.f32 %v1384, %v1385
    %v1387 = vmul.f32 %v1251, 0.0625
    %v1388 = vmul.f32 %v1260, 0.0625
    %v1389 = vmul.f32 %v1269, 0.0625
    %v1390 = vmul.f32 %v1278, 0.0625
    %v1391 = vmul.f32 %v1287, 0.0625
    %v1392 = vmul.f32 %v1296, 0.0625
    %v1393 = vmul.f32 %v1305, 0.0625
    %v1394 = vmul.f32 %v1314, 0.0625
    %v1395 = vmul.f32 %v1323, 0.0625
    %v1396 = vmul.f32 %v1332, 0.0625
    %v1397 = vmul.f32 %v1341, 0.0625
    %v1398 = vmul.f32 %v1350, 0.0625
    %v1399 = vmul.f32 %v1359, 0.0625
    %v1400 = vmul.f32 %v1368, 0.0625
    %v1401 = vmul.f32 %v1377, 0.0625
    %v1402 = vmul.f32 %v1386, 0.0625
    %v1405 = vrot.slane %v41, 7
    %v1406 = vrot.slane %v42, 7
    %v1407 = vsel %vm49, %v1405, %v1406
    %v1410 = vsel %vm49, 0.0, %v1405
    %v1411 = vsel %vm49, %v1406, 0.0
    %1414 = vrot.lane.b32.xlu0 %v1410, 1
    %v1415 = vpop.permute.xlu0 %1414
    %1416 = vrot.lane.b32.xlu0 %v1407, 1
    %v1417 = vpop.permute.xlu0 %1416
    %1418 = vrot.lane.b32.xlu0 %v1411, 1
    %v1419 = vpop.permute.xlu0 %1418
    %v1423 = vsel %vm68, 0.0, %v1415
    %v1424 = vsel %vm68, 0.0, %v1417
    %v1425 = vsel %vm68, 0.0, %v1419
    %v1426 = vsel %vm72, %v1423, 0.0
    %v1427 = vsel %vm72, %v1424, 0.0
    %v1428 = vsel %vm72, %v1425, 0.0
    %v1429 = vlaneseq
    %v1430 = vshrl.u32 %v1429, 7
    %v1431 = vsub.s32 0, %v1430
    %v1432 = vrot.slane %v1426, %v1431
    %1434 = vbcast.lane.b32.xlu0 %v1432, 256
    %v1435 = vpop.permute.xlu0 %1434
    %s1437 = sor.u32 256, 8
    %1438 = vbcast.lane.b32.xlu0 %v1432, %s1437
    %v1439 = vpop.permute.xlu0 %1438
    %v1440 = vlaneseq
    %v1441 = vshrl.u32 %v1440, 7
    %v1442 = vsub.s32 1, %v1441
    %v1443 = vrot.slane %v1426, %v1442
    %1445 = vbcast.lane.b32.xlu0 %v1443, 256
    %v1446 = vpop.permute.xlu0 %1445
    %s1448 = sor.u32 256, 8
    %1449 = vbcast.lane.b32.xlu0 %v1443, %s1448
    %v1450 = vpop.permute.xlu0 %1449
    %v1451 = vlaneseq
    %v1452 = vshrl.u32 %v1451, 7
    %v1453 = vsub.s32 2, %v1452
    %v1454 = vrot.slane %v1426, %v1453
    %1456 = vbcast.lane.b32.xlu0 %v1454, 256
    %v1457 = vpop.permute.xlu0 %1456
    %s1459 = sor.u32 256, 8
    %1460 = vbcast.lane.b32.xlu0 %v1454, %s1459
    %v1461 = vpop.permute.xlu0 %1460
    %v1462 = vlaneseq
    %v1463 = vshrl.u32 %v1462, 7
    %v1464 = vsub.s32 3, %v1463
    %v1465 = vrot.slane %v1426, %v1464
    %1467 = vbcast.lane.b32.xlu0 %v1465, 256
    %v1468 = vpop.permute.xlu0 %1467
    %s1470 = sor.u32 256, 8
    %1471 = vbcast.lane.b32.xlu0 %v1465, %s1470
    %v1472 = vpop.permute.xlu0 %1471
    %v1473 = vlaneseq
    %v1474 = vshrl.u32 %v1473, 7
    %v1475 = vsub.s32 4, %v1474
    %v1476 = vrot.slane %v1426, %v1475
    %1478 = vbcast.lane.b32.xlu0 %v1476, 256
    %v1479 = vpop.permute.xlu0 %1478
    %s1481 = sor.u32 256, 8
    %1482 = vbcast.lane.b32.xlu0 %v1476, %s1481
    %v1483 = vpop.permute.xlu0 %1482
    %v1484 = vlaneseq
    %v1485 = vshrl.u32 %v1484, 7
    %v1486 = vsub.s32 5, %v1485
    %v1487 = vrot.slane %v1426, %v1486
    %1489 = vbcast.lane.b32.xlu0 %v1487, 256
    %v1490 = vpop.permute.xlu0 %1489
    %s1492 = sor.u32 256, 8
    %1493 = vbcast.lane.b32.xlu0 %v1487, %s1492
    %v1494 = vpop.permute.xlu0 %1493
    %v1495 = vlaneseq
    %v1496 = vshrl.u32 %v1495, 7
    %v1497 = vsub.s32 6, %v1496
    %v1498 = vrot.slane %v1426, %v1497
    %1500 = vbcast.lane.b32.xlu0 %v1498, 256
    %v1501 = vpop.permute.xlu0 %1500
    %s1503 = sor.u32 256, 8
    %1504 = vbcast.lane.b32.xlu0 %v1498, %s1503
    %v1505 = vpop.permute.xlu0 %1504
    %v1506 = vlaneseq
    %v1507 = vshrl.u32 %v1506, 7
    %v1508 = vsub.s32 7, %v1507
    %v1509 = vrot.slane %v1426, %v1508
    %1511 = vbcast.lane.b32.xlu0 %v1509, 256
    %v1512 = vpop.permute.xlu0 %1511
    %s1514 = sor.u32 256, 8
    %1515 = vbcast.lane.b32.xlu0 %v1509, %s1514
    %v1516 = vpop.permute.xlu0 %1515
    %v1517 = vlaneseq
    %v1518 = vshrl.u32 %v1517, 7
    %v1519 = vsub.s32 0, %v1518
    %v1520 = vrot.slane %v1427, %v1519
    %1522 = vbcast.lane.b32.xlu0 %v1520, 256
    %v1523 = vpop.permute.xlu0 %1522
    %s1525 = sor.u32 256, 8
    %1526 = vbcast.lane.b32.xlu0 %v1520, %s1525
    %v1527 = vpop.permute.xlu0 %1526
    %v1528 = vlaneseq
    %v1529 = vshrl.u32 %v1528, 7
    %v1530 = vsub.s32 1, %v1529
    %v1531 = vrot.slane %v1427, %v1530
    %1533 = vbcast.lane.b32.xlu0 %v1531, 256
    %v1534 = vpop.permute.xlu0 %1533
    %s1536 = sor.u32 256, 8
    %1537 = vbcast.lane.b32.xlu0 %v1531, %s1536
    %v1538 = vpop.permute.xlu0 %1537
    %v1539 = vlaneseq
    %v1540 = vshrl.u32 %v1539, 7
    %v1541 = vsub.s32 2, %v1540
    %v1542 = vrot.slane %v1427, %v1541
    %1544 = vbcast.lane.b32.xlu0 %v1542, 256
    %v1545 = vpop.permute.xlu0 %1544
    %s1547 = sor.u32 256, 8
    %1548 = vbcast.lane.b32.xlu0 %v1542, %s1547
    %v1549 = vpop.permute.xlu0 %1548
    %v1550 = vlaneseq
    %v1551 = vshrl.u32 %v1550, 7
    %v1552 = vsub.s32 3, %v1551
    %v1553 = vrot.slane %v1427, %v1552
    %1555 = vbcast.lane.b32.xlu0 %v1553, 256
    %v1556 = vpop.permute.xlu0 %1555
    %s1558 = sor.u32 256, 8
    %1559 = vbcast.lane.b32.xlu0 %v1553, %s1558
    %v1560 = vpop.permute.xlu0 %1559
    %v1561 = vlaneseq
    %v1562 = vshrl.u32 %v1561, 7
    %v1563 = vsub.s32 4, %v1562
    %v1564 = vrot.slane %v1427, %v1563
    %1566 = vbcast.lane.b32.xlu0 %v1564, 256
    %v1567 = vpop.permute.xlu0 %1566
    %s1569 = sor.u32 256, 8
    %1570 = vbcast.lane.b32.xlu0 %v1564, %s1569
    %v1571 = vpop.permute.xlu0 %1570
    %v1572 = vlaneseq
    %v1573 = vshrl.u32 %v1572, 7
    %v1574 = vsub.s32 5, %v1573
    %v1575 = vrot.slane %v1427, %v1574
    %1577 = vbcast.lane.b32.xlu0 %v1575, 256
    %v1578 = vpop.permute.xlu0 %1577
    %s1580 = sor.u32 256, 8
    %1581 = vbcast.lane.b32.xlu0 %v1575, %s1580
    %v1582 = vpop.permute.xlu0 %1581
    %v1583 = vlaneseq
    %v1584 = vshrl.u32 %v1583, 7
    %v1585 = vsub.s32 6, %v1584
    %v1586 = vrot.slane %v1427, %v1585
    %1588 = vbcast.lane.b32.xlu0 %v1586, 256
    %v1589 = vpop.permute.xlu0 %1588
    %s1591 = sor.u32 256, 8
    %1592 = vbcast.lane.b32.xlu0 %v1586, %s1591
    %v1593 = vpop.permute.xlu0 %1592
    %v1594 = vlaneseq
    %v1595 = vshrl.u32 %v1594, 7
    %v1596 = vsub.s32 7, %v1595
    %v1597 = vrot.slane %v1427, %v1596
    %1599 = vbcast.lane.b32.xlu0 %v1597, 256
    %v1600 = vpop.permute.xlu0 %1599
    %s1602 = sor.u32 256, 8
    %1603 = vbcast.lane.b32.xlu0 %v1597, %s1602
    %v1604 = vpop.permute.xlu0 %1603
    %v1605 = vmul.f32 %v1435, %v255
    %v1606 = vmul.f32 %v1439, %v255
    %v1607 = vmul.f32 %v1446, %v255
    %v1608 = vmul.f32 %v1450, %v255
    %v1609 = vmul.f32 %v1457, %v255
    %v1610 = vmul.f32 %v1461, %v255
    %v1611 = vmul.f32 %v1468, %v255
    %v1612 = vmul.f32 %v1472, %v255
    %v1613 = vmul.f32 %v1479, %v255
    %v1614 = vmul.f32 %v1483, %v255
    %v1615 = vmul.f32 %v1490, %v255
    %v1616 = vmul.f32 %v1494, %v255
    %v1617 = vmul.f32 %v1501, %v255
    %v1618 = vmul.f32 %v1505, %v255
    %v1619 = vmul.f32 %v1512, %v255
    %v1620 = vmul.f32 %v1516, %v255
    %v1621 = vmul.f32 %v1523, %v255
    %v1622 = vmul.f32 %v1527, %v255
    %v1623 = vmul.f32 %v1534, %v255
    %v1624 = vmul.f32 %v1538, %v255
    %v1625 = vmul.f32 %v1545, %v255
    %v1626 = vmul.f32 %v1549, %v255
    %v1627 = vmul.f32 %v1556, %v255
    %v1628 = vmul.f32 %v1560, %v255
    %v1629 = vmul.f32 %v1567, %v255
    %v1630 = vmul.f32 %v1571, %v255
    %v1631 = vmul.f32 %v1578, %v255
    %v1632 = vmul.f32 %v1582, %v255
    %v1633 = vmul.f32 %v1589, %v255
    %v1634 = vmul.f32 %v1593, %v255
    %v1635 = vmul.f32 %v1600, %v255
    %v1636 = vmul.f32 %v1604, %v255
    %v1637 = vadd.f32 %v1605, 0.0
    %v1638 = vadd.f32 %v1606, 0.0
    %v1639 = vadd.f32 %v1607, 0.0
    %v1640 = vadd.f32 %v1608, 0.0
    %v1641 = vadd.f32 %v1609, 0.0
    %v1642 = vadd.f32 %v1610, 0.0
    %v1643 = vadd.f32 %v1611, 0.0
    %v1644 = vadd.f32 %v1612, 0.0
    %v1645 = vadd.f32 %v1613, 0.0
    %v1646 = vadd.f32 %v1614, 0.0
    %v1647 = vadd.f32 %v1615, 0.0
    %v1648 = vadd.f32 %v1616, 0.0
    %v1649 = vadd.f32 %v1617, 0.0
    %v1650 = vadd.f32 %v1618, 0.0
    %v1651 = vadd.f32 %v1619, 0.0
    %v1652 = vadd.f32 %v1620, 0.0
    %v1653 = vadd.f32 %v1621, 0.0
    %v1654 = vadd.f32 %v1622, 0.0
    %v1655 = vadd.f32 %v1623, 0.0
    %v1656 = vadd.f32 %v1624, 0.0
    %v1657 = vadd.f32 %v1625, 0.0
    %v1658 = vadd.f32 %v1626, 0.0
    %v1659 = vadd.f32 %v1627, 0.0
    %v1660 = vadd.f32 %v1628, 0.0
    %v1661 = vadd.f32 %v1629, 0.0
    %v1662 = vadd.f32 %v1630, 0.0
    %v1663 = vadd.f32 %v1631, 0.0
    %v1664 = vadd.f32 %v1632, 0.0
    %v1665 = vadd.f32 %v1633, 0.0
    %v1666 = vadd.f32 %v1634, 0.0
    %v1667 = vadd.f32 %v1635, 0.0
    %v1668 = vadd.f32 %v1636, 0.0
    %s1670 = sor.u32 256, 1
    %1671 = vbcast.lane.b32.xlu0 %v1432, %s1670
    %v1672 = vpop.permute.xlu0 %1671
    %s1674 = sor.u32 256, 9
    %1675 = vbcast.lane.b32.xlu0 %v1432, %s1674
    %v1676 = vpop.permute.xlu0 %1675
    %s1678 = sor.u32 256, 1
    %1679 = vbcast.lane.b32.xlu0 %v1443, %s1678
    %v1680 = vpop.permute.xlu0 %1679
    %s1682 = sor.u32 256, 9
    %1683 = vbcast.lane.b32.xlu0 %v1443, %s1682
    %v1684 = vpop.permute.xlu0 %1683
    %s1686 = sor.u32 256, 1
    %1687 = vbcast.lane.b32.xlu0 %v1454, %s1686
    %v1688 = vpop.permute.xlu0 %1687
    %s1690 = sor.u32 256, 9
    %1691 = vbcast.lane.b32.xlu0 %v1454, %s1690
    %v1692 = vpop.permute.xlu0 %1691
    %s1694 = sor.u32 256, 1
    %1695 = vbcast.lane.b32.xlu0 %v1465, %s1694
    %v1696 = vpop.permute.xlu0 %1695
    %s1698 = sor.u32 256, 9
    %1699 = vbcast.lane.b32.xlu0 %v1465, %s1698
    %v1700 = vpop.permute.xlu0 %1699
    %s1702 = sor.u32 256, 1
    %1703 = vbcast.lane.b32.xlu0 %v1476, %s1702
    %v1704 = vpop.permute.xlu0 %1703
    %s1706 = sor.u32 256, 9
    %1707 = vbcast.lane.b32.xlu0 %v1476, %s1706
    %v1708 = vpop.permute.xlu0 %1707
    %s1710 = sor.u32 256, 1
    %1711 = vbcast.lane.b32.xlu0 %v1487, %s1710
    %v1712 = vpop.permute.xlu0 %1711
    %s1714 = sor.u32 256, 9
    %1715 = vbcast.lane.b32.xlu0 %v1487, %s1714
    %v1716 = vpop.permute.xlu0 %1715
    %s1718 = sor.u32 256, 1
    %1719 = vbcast.lane.b32.xlu0 %v1498, %s1718
    %v1720 = vpop.permute.xlu0 %1719
    %s1722 = sor.u32 256, 9
    %1723 = vbcast.lane.b32.xlu0 %v1498, %s1722
    %v1724 = vpop.permute.xlu0 %1723
    %s1726 = sor.u32 256, 1
    %1727 = vbcast.lane.b32.xlu0 %v1509, %s1726
    %v1728 = vpop.permute.xlu0 %1727
    %s1730 = sor.u32 256, 9
    %1731 = vbcast.lane.b32.xlu0 %v1509, %s1730
    %v1732 = vpop.permute.xlu0 %1731
    %s1734 = sor.u32 256, 1
    %1735 = vbcast.lane.b32.xlu0 %v1520, %s1734
    %v1736 = vpop.permute.xlu0 %1735
    %s1738 = sor.u32 256, 9
    %1739 = vbcast.lane.b32.xlu0 %v1520, %s1738
    %v1740 = vpop.permute.xlu0 %1739
    %s1742 = sor.u32 256, 1
    %1743 = vbcast.lane.b32.xlu0 %v1531, %s1742
    %v1744 = vpop.permute.xlu0 %1743
    %s1746 = sor.u32 256, 9
    %1747 = vbcast.lane.b32.xlu0 %v1531, %s1746
    %v1748 = vpop.permute.xlu0 %1747
    %s1750 = sor.u32 256, 1
    %1751 = vbcast.lane.b32.xlu0 %v1542, %s1750
    %v1752 = vpop.permute.xlu0 %1751
    %s1754 = sor.u32 256, 9
    %1755 = vbcast.lane.b32.xlu0 %v1542, %s1754
    %v1756 = vpop.permute.xlu0 %1755
    %s1758 = sor.u32 256, 1
    %1759 = vbcast.lane.b32.xlu0 %v1553, %s1758
    %v1760 = vpop.permute.xlu0 %1759
    %s1762 = sor.u32 256, 9
    %1763 = vbcast.lane.b32.xlu0 %v1553, %s1762
    %v1764 = vpop.permute.xlu0 %1763
    %s1766 = sor.u32 256, 1
    %1767 = vbcast.lane.b32.xlu0 %v1564, %s1766
    %v1768 = vpop.permute.xlu0 %1767
    %s1770 = sor.u32 256, 9
    %1771 = vbcast.lane.b32.xlu0 %v1564, %s1770
    %v1772 = vpop.permute.xlu0 %1771
    %s1774 = sor.u32 256, 1
    %1775 = vbcast.lane.b32.xlu0 %v1575, %s1774
    %v1776 = vpop.permute.xlu0 %1775
    %s1778 = sor.u32 256, 9
    %1779 = vbcast.lane.b32.xlu0 %v1575, %s1778
    %v1780 = vpop.permute.xlu0 %1779
    %s1782 = sor.u32 256, 1
    %1783 = vbcast.lane.b32.xlu0 %v1586, %s1782
    %v1784 = vpop.permute.xlu0 %1783
    %s1786 = sor.u32 256, 9
    %1787 = vbcast.lane.b32.xlu0 %v1586, %s1786
    %v1788 = vpop.permute.xlu0 %1787
    %s1790 = sor.u32 256, 1
    %1791 = vbcast.lane.b32.xlu0 %v1597, %s1790
    %v1792 = vpop.permute.xlu0 %1791
    %s1794 = sor.u32 256, 9
    %1795 = vbcast.lane.b32.xlu0 %v1597, %s1794
    %v1796 = vpop.permute.xlu0 %1795
    %v1797 = vmul.f32 %v1672, %v451
    %v1798 = vmul.f32 %v1676, %v451
    %v1799 = vmul.f32 %v1680, %v451
    %v1800 = vmul.f32 %v1684, %v451
    %v1801 = vmul.f32 %v1688, %v451
    %v1802 = vmul.f32 %v1692, %v451
    %v1803 = vmul.f32 %v1696, %v451
    %v1804 = vmul.f32 %v1700, %v451
    %v1805 = vmul.f32 %v1704, %v451
    %v1806 = vmul.f32 %v1708, %v451
    %v1807 = vmul.f32 %v1712, %v451
    %v1808 = vmul.f32 %v1716, %v451
    %v1809 = vmul.f32 %v1720, %v451
    %v1810 = vmul.f32 %v1724, %v451
    %v1811 = vmul.f32 %v1728, %v451
    %v1812 = vmul.f32 %v1732, %v451
    %v1813 = vmul.f32 %v1736, %v451
    %v1814 = vmul.f32 %v1740, %v451
    %v1815 = vmul.f32 %v1744, %v451
    %v1816 = vmul.f32 %v1748, %v451
    %v1817 = vmul.f32 %v1752, %v451
    %v1818 = vmul.f32 %v1756, %v451
    %v1819 = vmul.f32 %v1760, %v451
    %v1820 = vmul.f32 %v1764, %v451
    %v1821 = vmul.f32 %v1768, %v451
    %v1822 = vmul.f32 %v1772, %v451
    %v1823 = vmul.f32 %v1776, %v451
    %v1824 = vmul.f32 %v1780, %v451
    %v1825 = vmul.f32 %v1784, %v451
    %v1826 = vmul.f32 %v1788, %v451
    %v1827 = vmul.f32 %v1792, %v451
    %v1828 = vmul.f32 %v1796, %v451
    %v1829 = vadd.f32 %v1637, %v1797
    %v1830 = vadd.f32 %v1638, %v1798
    %v1831 = vadd.f32 %v1639, %v1799
    %v1832 = vadd.f32 %v1640, %v1800
    %v1833 = vadd.f32 %v1641, %v1801
    %v1834 = vadd.f32 %v1642, %v1802
    %v1835 = vadd.f32 %v1643, %v1803
    %v1836 = vadd.f32 %v1644, %v1804
    %v1837 = vadd.f32 %v1645, %v1805
    %v1838 = vadd.f32 %v1646, %v1806
    %v1839 = vadd.f32 %v1647, %v1807
    %v1840 = vadd.f32 %v1648, %v1808
    %v1841 = vadd.f32 %v1649, %v1809
    %v1842 = vadd.f32 %v1650, %v1810
    %v1843 = vadd.f32 %v1651, %v1811
    %v1844 = vadd.f32 %v1652, %v1812
    %v1845 = vadd.f32 %v1653, %v1813
    %v1846 = vadd.f32 %v1654, %v1814
    %v1847 = vadd.f32 %v1655, %v1815
    %v1848 = vadd.f32 %v1656, %v1816
    %v1849 = vadd.f32 %v1657, %v1817
    %v1850 = vadd.f32 %v1658, %v1818
    %v1851 = vadd.f32 %v1659, %v1819
    %v1852 = vadd.f32 %v1660, %v1820
    %v1853 = vadd.f32 %v1661, %v1821
    %v1854 = vadd.f32 %v1662, %v1822
    %v1855 = vadd.f32 %v1663, %v1823
    %v1856 = vadd.f32 %v1664, %v1824
    %v1857 = vadd.f32 %v1665, %v1825
    %v1858 = vadd.f32 %v1666, %v1826
    %v1859 = vadd.f32 %v1667, %v1827
    %v1860 = vadd.f32 %v1668, %v1828
    %s1862 = sor.u32 256, 2
    %1863 = vbcast.lane.b32.xlu0 %v1432, %s1862
    %v1864 = vpop.permute.xlu0 %1863
    %s1866 = sor.u32 256, 10
    %1867 = vbcast.lane.b32.xlu0 %v1432, %s1866
    %v1868 = vpop.permute.xlu0 %1867
    %s1870 = sor.u32 256, 2
    %1871 = vbcast.lane.b32.xlu0 %v1443, %s1870
    %v1872 = vpop.permute.xlu0 %1871
    %s1874 = sor.u32 256, 10
    %1875 = vbcast.lane.b32.xlu0 %v1443, %s1874
    %v1876 = vpop.permute.xlu0 %1875
    %s1878 = sor.u32 256, 2
    %1879 = vbcast.lane.b32.xlu0 %v1454, %s1878
    %v1880 = vpop.permute.xlu0 %1879
    %s1882 = sor.u32 256, 10
    %1883 = vbcast.lane.b32.xlu0 %v1454, %s1882
    %v1884 = vpop.permute.xlu0 %1883
    %s1886 = sor.u32 256, 2
    %1887 = vbcast.lane.b32.xlu0 %v1465, %s1886
    %v1888 = vpop.permute.xlu0 %1887
    %s1890 = sor.u32 256, 10
    %1891 = vbcast.lane.b32.xlu0 %v1465, %s1890
    %v1892 = vpop.permute.xlu0 %1891
    %s1894 = sor.u32 256, 2
    %1895 = vbcast.lane.b32.xlu0 %v1476, %s1894
    %v1896 = vpop.permute.xlu0 %1895
    %s1898 = sor.u32 256, 10
    %1899 = vbcast.lane.b32.xlu0 %v1476, %s1898
    %v1900 = vpop.permute.xlu0 %1899
    %s1902 = sor.u32 256, 2
    %1903 = vbcast.lane.b32.xlu0 %v1487, %s1902
    %v1904 = vpop.permute.xlu0 %1903
    %s1906 = sor.u32 256, 10
    %1907 = vbcast.lane.b32.xlu0 %v1487, %s1906
    %v1908 = vpop.permute.xlu0 %1907
    %s1910 = sor.u32 256, 2
    %1911 = vbcast.lane.b32.xlu0 %v1498, %s1910
    %v1912 = vpop.permute.xlu0 %1911
    %s1914 = sor.u32 256, 10
    %1915 = vbcast.lane.b32.xlu0 %v1498, %s1914
    %v1916 = vpop.permute.xlu0 %1915
    %s1918 = sor.u32 256, 2
    %1919 = vbcast.lane.b32.xlu0 %v1509, %s1918
    %v1920 = vpop.permute.xlu0 %1919
    %s1922 = sor.u32 256, 10
    %1923 = vbcast.lane.b32.xlu0 %v1509, %s1922
    %v1924 = vpop.permute.xlu0 %1923
    %s1926 = sor.u32 256, 2
    %1927 = vbcast.lane.b32.xlu0 %v1520, %s1926
    %v1928 = vpop.permute.xlu0 %1927
    %s1930 = sor.u32 256, 10
    %1931 = vbcast.lane.b32.xlu0 %v1520, %s1930
    %v1932 = vpop.permute.xlu0 %1931
    %s1934 = sor.u32 256, 2
    %1935 = vbcast.lane.b32.xlu0 %v1531, %s1934
    %v1936 = vpop.permute.xlu0 %1935
    %s1938 = sor.u32 256, 10
    %1939 = vbcast.lane.b32.xlu0 %v1531, %s1938
    %v1940 = vpop.permute.xlu0 %1939
    %s1942 = sor.u32 256, 2
    %1943 = vbcast.lane.b32.xlu0 %v1542, %s1942
    %v1944 = vpop.permute.xlu0 %1943
    %s1946 = sor.u32 256, 10
    %1947 = vbcast.lane.b32.xlu0 %v1542, %s1946
    %v1948 = vpop.permute.xlu0 %1947
    %s1950 = sor.u32 256, 2
    %1951 = vbcast.lane.b32.xlu0 %v1553, %s1950
    %v1952 = vpop.permute.xlu0 %1951
    %s1954 = sor.u32 256, 10
    %1955 = vbcast.lane.b32.xlu0 %v1553, %s1954
    %v1956 = vpop.permute.xlu0 %1955
    %s1958 = sor.u32 256, 2
    %1959 = vbcast.lane.b32.xlu0 %v1564, %s1958
    %v1960 = vpop.permute.xlu0 %1959
    %s1962 = sor.u32 256, 10
    %1963 = vbcast.lane.b32.xlu0 %v1564, %s1962
    %v1964 = vpop.permute.xlu0 %1963
    %s1966 = sor.u32 256, 2
    %1967 = vbcast.lane.b32.xlu0 %v1575, %s1966
    %v1968 = vpop.permute.xlu0 %1967
    %s1970 = sor.u32 256, 10
    %1971 = vbcast.lane.b32.xlu0 %v1575, %s1970
    %v1972 = vpop.permute.xlu0 %1971
    %s1974 = sor.u32 256, 2
    %1975 = vbcast.lane.b32.xlu0 %v1586, %s1974
    %v1976 = vpop.permute.xlu0 %1975
    %s1978 = sor.u32 256, 10
    %1979 = vbcast.lane.b32.xlu0 %v1586, %s1978
    %v1980 = vpop.permute.xlu0 %1979
    %s1982 = sor.u32 256, 2
    %1983 = vbcast.lane.b32.xlu0 %v1597, %s1982
    %v1984 = vpop.permute.xlu0 %1983
    %s1986 = sor.u32 256, 10
    %1987 = vbcast.lane.b32.xlu0 %v1597, %s1986
    %v1988 = vpop.permute.xlu0 %1987
    %v1989 = vmul.f32 %v1864, %v647
    %v1990 = vmul.f32 %v1868, %v647
    %v1991 = vmul.f32 %v1872, %v647
    %v1992 = vmul.f32 %v1876, %v647
    %v1993 = vmul.f32 %v1880, %v647
    %v1994 = vmul.f32 %v1884, %v647
    %v1995 = vmul.f32 %v1888, %v647
    %v1996 = vmul.f32 %v1892, %v647
    %v1997 = vmul.f32 %v1896, %v647
    %v1998 = vmul.f32 %v1900, %v647
    %v1999 = vmul.f32 %v1904, %v647
    %v2000 = vmul.f32 %v1908, %v647
    %v2001 = vmul.f32 %v1912, %v647
    %v2002 = vmul.f32 %v1916, %v647
    %v2003 = vmul.f32 %v1920, %v647
    %v2004 = vmul.f32 %v1924, %v647
    %v2005 = vmul.f32 %v1928, %v647
    %v2006 = vmul.f32 %v1932, %v647
    %v2007 = vmul.f32 %v1936, %v647
    %v2008 = vmul.f32 %v1940, %v647
    %v2009 = vmul.f32 %v1944, %v647
    %v2010 = vmul.f32 %v1948, %v647
    %v2011 = vmul.f32 %v1952, %v647
    %v2012 = vmul.f32 %v1956, %v647
    %v2013 = vmul.f32 %v1960, %v647
    %v2014 = vmul.f32 %v1964, %v647
    %v2015 = vmul.f32 %v1968, %v647
    %v2016 = vmul.f32 %v1972, %v647
    %v2017 = vmul.f32 %v1976, %v647
    %v2018 = vmul.f32 %v1980, %v647
    %v2019 = vmul.f32 %v1984, %v647
    %v2020 = vmul.f32 %v1988, %v647
    %v2021 = vadd.f32 %v1829, %v1989
    %v2022 = vadd.f32 %v1830, %v1990
    %v2023 = vadd.f32 %v1831, %v1991
    %v2024 = vadd.f32 %v1832, %v1992
    %v2025 = vadd.f32 %v1833, %v1993
    %v2026 = vadd.f32 %v1834, %v1994
    %v2027 = vadd.f32 %v1835, %v1995
    %v2028 = vadd.f32 %v1836, %v1996
    %v2029 = vadd.f32 %v1837, %v1997
    %v2030 = vadd.f32 %v1838, %v1998
    %v2031 = vadd.f32 %v1839, %v1999
    %v2032 = vadd.f32 %v1840, %v2000
    %v2033 = vadd.f32 %v1841, %v2001
    %v2034 = vadd.f32 %v1842, %v2002
    %v2035 = vadd.f32 %v1843, %v2003
    %v2036 = vadd.f32 %v1844, %v2004
    %v2037 = vadd.f32 %v1845, %v2005
    %v2038 = vadd.f32 %v1846, %v2006
    %v2039 = vadd.f32 %v1847, %v2007
    %v2040 = vadd.f32 %v1848, %v2008
    %v2041 = vadd.f32 %v1849, %v2009
    %v2042 = vadd.f32 %v1850, %v2010
    %v2043 = vadd.f32 %v1851, %v2011
    %v2044 = vadd.f32 %v1852, %v2012
    %v2045 = vadd.f32 %v1853, %v2013
    %v2046 = vadd.f32 %v1854, %v2014
    %v2047 = vadd.f32 %v1855, %v2015
    %v2048 = vadd.f32 %v1856, %v2016
    %v2049 = vadd.f32 %v1857, %v2017
    %v2050 = vadd.f32 %v1858, %v2018
    %v2051 = vadd.f32 %v1859, %v2019
    %v2052 = vadd.f32 %v1860, %v2020
    %v2053 = vlaneseq
    %v2054 = vshrl.u32 %v2053, 7
    %v2055 = vsub.s32 0, %v2054
    %v2056 = vrot.slane %v1428, %v2055
    %2058 = vbcast.lane.b32.xlu0 %v2056, 256
    %v2059 = vpop.permute.xlu0 %2058
    %s2061 = sor.u32 256, 8
    %2062 = vbcast.lane.b32.xlu0 %v2056, %s2061
    %v2063 = vpop.permute.xlu0 %2062
    %v2064 = vmul.f32 %v1446, %v726
    %v2065 = vmul.f32 %v1450, %v726
    %v2066 = vmul.f32 %v1457, %v726
    %v2067 = vmul.f32 %v1461, %v726
    %v2068 = vmul.f32 %v1468, %v726
    %v2069 = vmul.f32 %v1472, %v726
    %v2070 = vmul.f32 %v1479, %v726
    %v2071 = vmul.f32 %v1483, %v726
    %v2072 = vmul.f32 %v1490, %v726
    %v2073 = vmul.f32 %v1494, %v726
    %v2074 = vmul.f32 %v1501, %v726
    %v2075 = vmul.f32 %v1505, %v726
    %v2076 = vmul.f32 %v1512, %v726
    %v2077 = vmul.f32 %v1516, %v726
    %v2078 = vmul.f32 %v1523, %v726
    %v2079 = vmul.f32 %v1527, %v726
    %v2080 = vmul.f32 %v1534, %v726
    %v2081 = vmul.f32 %v1538, %v726
    %v2082 = vmul.f32 %v1545, %v726
    %v2083 = vmul.f32 %v1549, %v726
    %v2084 = vmul.f32 %v1556, %v726
    %v2085 = vmul.f32 %v1560, %v726
    %v2086 = vmul.f32 %v1567, %v726
    %v2087 = vmul.f32 %v1571, %v726
    %v2088 = vmul.f32 %v1578, %v726
    %v2089 = vmul.f32 %v1582, %v726
    %v2090 = vmul.f32 %v1589, %v726
    %v2091 = vmul.f32 %v1593, %v726
    %v2092 = vmul.f32 %v1600, %v726
    %v2093 = vmul.f32 %v1604, %v726
    %v2094 = vmul.f32 %v2059, %v726
    %v2095 = vmul.f32 %v2063, %v726
    %v2096 = vadd.f32 %v2021, %v2064
    %v2097 = vadd.f32 %v2022, %v2065
    %v2098 = vadd.f32 %v2023, %v2066
    %v2099 = vadd.f32 %v2024, %v2067
    %v2100 = vadd.f32 %v2025, %v2068
    %v2101 = vadd.f32 %v2026, %v2069
    %v2102 = vadd.f32 %v2027, %v2070
    %v2103 = vadd.f32 %v2028, %v2071
    %v2104 = vadd.f32 %v2029, %v2072
    %v2105 = vadd.f32 %v2030, %v2073
    %v2106 = vadd.f32 %v2031, %v2074
    %v2107 = vadd.f32 %v2032, %v2075
    %v2108 = vadd.f32 %v2033, %v2076
    %v2109 = vadd.f32 %v2034, %v2077
    %v2110 = vadd.f32 %v2035, %v2078
    %v2111 = vadd.f32 %v2036, %v2079
    %v2112 = vadd.f32 %v2037, %v2080
    %v2113 = vadd.f32 %v2038, %v2081
    %v2114 = vadd.f32 %v2039, %v2082
    %v2115 = vadd.f32 %v2040, %v2083
    %v2116 = vadd.f32 %v2041, %v2084
    %v2117 = vadd.f32 %v2042, %v2085
    %v2118 = vadd.f32 %v2043, %v2086
    %v2119 = vadd.f32 %v2044, %v2087
    %v2120 = vadd.f32 %v2045, %v2088
    %v2121 = vadd.f32 %v2046, %v2089
    %v2122 = vadd.f32 %v2047, %v2090
    %v2123 = vadd.f32 %v2048, %v2091
    %v2124 = vadd.f32 %v2049, %v2092
    %v2125 = vadd.f32 %v2050, %v2093
    %v2126 = vadd.f32 %v2051, %v2094
    %v2127 = vadd.f32 %v2052, %v2095
    %s2129 = sor.u32 256, 1
    %2130 = vbcast.lane.b32.xlu0 %v2056, %s2129
    %v2131 = vpop.permute.xlu0 %2130
    %s2133 = sor.u32 256, 9
    %2134 = vbcast.lane.b32.xlu0 %v2056, %s2133
    %v2135 = vpop.permute.xlu0 %2134
    %v2136 = vmul.f32 %v1680, %v802
    %v2137 = vmul.f32 %v1684, %v802
    %v2138 = vmul.f32 %v1688, %v802
    %v2139 = vmul.f32 %v1692, %v802
    %v2140 = vmul.f32 %v1696, %v802
    %v2141 = vmul.f32 %v1700, %v802
    %v2142 = vmul.f32 %v1704, %v802
    %v2143 = vmul.f32 %v1708, %v802
    %v2144 = vmul.f32 %v1712, %v802
    %v2145 = vmul.f32 %v1716, %v802
    %v2146 = vmul.f32 %v1720, %v802
    %v2147 = vmul.f32 %v1724, %v802
    %v2148 = vmul.f32 %v1728, %v802
    %v2149 = vmul.f32 %v1732, %v802
    %v2150 = vmul.f32 %v1736, %v802
    %v2151 = vmul.f32 %v1740, %v802
    %v2152 = vmul.f32 %v1744, %v802
    %v2153 = vmul.f32 %v1748, %v802
    %v2154 = vmul.f32 %v1752, %v802
    %v2155 = vmul.f32 %v1756, %v802
    %v2156 = vmul.f32 %v1760, %v802
    %v2157 = vmul.f32 %v1764, %v802
    %v2158 = vmul.f32 %v1768, %v802
    %v2159 = vmul.f32 %v1772, %v802
    %v2160 = vmul.f32 %v1776, %v802
    %v2161 = vmul.f32 %v1780, %v802
    %v2162 = vmul.f32 %v1784, %v802
    %v2163 = vmul.f32 %v1788, %v802
    %v2164 = vmul.f32 %v1792, %v802
    %v2165 = vmul.f32 %v1796, %v802
    %v2166 = vmul.f32 %v2131, %v802
    %v2167 = vmul.f32 %v2135, %v802
    %v2168 = vadd.f32 %v2096, %v2136
    %v2169 = vadd.f32 %v2097, %v2137
    %v2170 = vadd.f32 %v2098, %v2138
    %v2171 = vadd.f32 %v2099, %v2139
    %v2172 = vadd.f32 %v2100, %v2140
    %v2173 = vadd.f32 %v2101, %v2141
    %v2174 = vadd.f32 %v2102, %v2142
    %v2175 = vadd.f32 %v2103, %v2143
    %v2176 = vadd.f32 %v2104, %v2144
    %v2177 = vadd.f32 %v2105, %v2145
    %v2178 = vadd.f32 %v2106, %v2146
    %v2179 = vadd.f32 %v2107, %v2147
    %v2180 = vadd.f32 %v2108, %v2148
    %v2181 = vadd.f32 %v2109, %v2149
    %v2182 = vadd.f32 %v2110, %v2150
    %v2183 = vadd.f32 %v2111, %v2151
    %v2184 = vadd.f32 %v2112, %v2152
    %v2185 = vadd.f32 %v2113, %v2153
    %v2186 = vadd.f32 %v2114, %v2154
    %v2187 = vadd.f32 %v2115, %v2155
    %v2188 = vadd.f32 %v2116, %v2156
    %v2189 = vadd.f32 %v2117, %v2157
    %v2190 = vadd.f32 %v2118, %v2158
    %v2191 = vadd.f32 %v2119, %v2159
    %v2192 = vadd.f32 %v2120, %v2160
    %v2193 = vadd.f32 %v2121, %v2161
    %v2194 = vadd.f32 %v2122, %v2162
    %v2195 = vadd.f32 %v2123, %v2163
    %v2196 = vadd.f32 %v2124, %v2164
    %v2197 = vadd.f32 %v2125, %v2165
    %v2198 = vadd.f32 %v2126, %v2166
    %v2199 = vadd.f32 %v2127, %v2167
    %s2201 = sor.u32 256, 2
    %2202 = vbcast.lane.b32.xlu0 %v2056, %s2201
    %v2203 = vpop.permute.xlu0 %2202
    %s2205 = sor.u32 256, 10
    %2206 = vbcast.lane.b32.xlu0 %v2056, %s2205
    %v2207 = vpop.permute.xlu0 %2206
    %v2208 = vmul.f32 %v1872, %v878
    %v2209 = vmul.f32 %v1876, %v878
    %v2210 = vmul.f32 %v1880, %v878
    %v2211 = vmul.f32 %v1884, %v878
    %v2212 = vmul.f32 %v1888, %v878
    %v2213 = vmul.f32 %v1892, %v878
    %v2214 = vmul.f32 %v1896, %v878
    %v2215 = vmul.f32 %v1900, %v878
    %v2216 = vmul.f32 %v1904, %v878
    %v2217 = vmul.f32 %v1908, %v878
    %v2218 = vmul.f32 %v1912, %v878
    %v2219 = vmul.f32 %v1916, %v878
    %v2220 = vmul.f32 %v1920, %v878
    %v2221 = vmul.f32 %v1924, %v878
    %v2222 = vmul.f32 %v1928, %v878
    %v2223 = vmul.f32 %v1932, %v878
    %v2224 = vmul.f32 %v1936, %v878
    %v2225 = vmul.f32 %v1940, %v878
    %v2226 = vmul.f32 %v1944, %v878
    %v2227 = vmul.f32 %v1948, %v878
    %v2228 = vmul.f32 %v1952, %v878
    %v2229 = vmul.f32 %v1956, %v878
    %v2230 = vmul.f32 %v1960, %v878
    %v2231 = vmul.f32 %v1964, %v878
    %v2232 = vmul.f32 %v1968, %v878
    %v2233 = vmul.f32 %v1972, %v878
    %v2234 = vmul.f32 %v1976, %v878
    %v2235 = vmul.f32 %v1980, %v878
    %v2236 = vmul.f32 %v1984, %v878
    %v2237 = vmul.f32 %v1988, %v878
    %v2238 = vmul.f32 %v2203, %v878
    %v2239 = vmul.f32 %v2207, %v878
    %v2240 = vadd.f32 %v2168, %v2208
    %v2241 = vadd.f32 %v2169, %v2209
    %v2242 = vadd.f32 %v2170, %v2210
    %v2243 = vadd.f32 %v2171, %v2211
    %v2244 = vadd.f32 %v2172, %v2212
    %v2245 = vadd.f32 %v2173, %v2213
    %v2246 = vadd.f32 %v2174, %v2214
    %v2247 = vadd.f32 %v2175, %v2215
    %v2248 = vadd.f32 %v2176, %v2216
    %v2249 = vadd.f32 %v2177, %v2217
    %v2250 = vadd.f32 %v2178, %v2218
    %v2251 = vadd.f32 %v2179, %v2219
    %v2252 = vadd.f32 %v2180, %v2220
    %v2253 = vadd.f32 %v2181, %v2221
    %v2254 = vadd.f32 %v2182, %v2222
    %v2255 = vadd.f32 %v2183, %v2223
    %v2256 = vadd.f32 %v2184, %v2224
    %v2257 = vadd.f32 %v2185, %v2225
    %v2258 = vadd.f32 %v2186, %v2226
    %v2259 = vadd.f32 %v2187, %v2227
    %v2260 = vadd.f32 %v2188, %v2228
    %v2261 = vadd.f32 %v2189, %v2229
    %v2262 = vadd.f32 %v2190, %v2230
    %v2263 = vadd.f32 %v2191, %v2231
    %v2264 = vadd.f32 %v2192, %v2232
    %v2265 = vadd.f32 %v2193, %v2233
    %v2266 = vadd.f32 %v2194, %v2234
    %v2267 = vadd.f32 %v2195, %v2235
    %v2268 = vadd.f32 %v2196, %v2236
    %v2269 = vadd.f32 %v2197, %v2237
    %v2270 = vadd.f32 %v2198, %v2238
    %v2271 = vadd.f32 %v2199, %v2239
    %v2272 = vlaneseq
    %v2273 = vshrl.u32 %v2272, 7
    %v2274 = vsub.s32 1, %v2273
    %v2275 = vrot.slane %v1428, %v2274
    %2277 = vbcast.lane.b32.xlu0 %v2275, 256
    %v2278 = vpop.permute.xlu0 %2277
    %s2280 = sor.u32 256, 8
    %2281 = vbcast.lane.b32.xlu0 %v2275, %s2280
    %v2282 = vpop.permute.xlu0 %2281
    %v2283 = vmul.f32 %v1457, %v957
    %v2284 = vmul.f32 %v1461, %v957
    %v2285 = vmul.f32 %v1468, %v957
    %v2286 = vmul.f32 %v1472, %v957
    %v2287 = vmul.f32 %v1479, %v957
    %v2288 = vmul.f32 %v1483, %v957
    %v2289 = vmul.f32 %v1490, %v957
    %v2290 = vmul.f32 %v1494, %v957
    %v2291 = vmul.f32 %v1501, %v957
    %v2292 = vmul.f32 %v1505, %v957
    %v2293 = vmul.f32 %v1512, %v957
    %v2294 = vmul.f32 %v1516, %v957
    %v2295 = vmul.f32 %v1523, %v957
    %v2296 = vmul.f32 %v1527, %v957
    %v2297 = vmul.f32 %v1534, %v957
    %v2298 = vmul.f32 %v1538, %v957
    %v2299 = vmul.f32 %v1545, %v957
    %v2300 = vmul.f32 %v1549, %v957
    %v2301 = vmul.f32 %v1556, %v957
    %v2302 = vmul.f32 %v1560, %v957
    %v2303 = vmul.f32 %v1567, %v957
    %v2304 = vmul.f32 %v1571, %v957
    %v2305 = vmul.f32 %v1578, %v957
    %v2306 = vmul.f32 %v1582, %v957
    %v2307 = vmul.f32 %v1589, %v957
    %v2308 = vmul.f32 %v1593, %v957
    %v2309 = vmul.f32 %v1600, %v957
    %v2310 = vmul.f32 %v1604, %v957
    %v2311 = vmul.f32 %v2059, %v957
    %v2312 = vmul.f32 %v2063, %v957
    %v2313 = vmul.f32 %v2278, %v957
    %v2314 = vmul.f32 %v2282, %v957
    %v2315 = vadd.f32 %v2240, %v2283
    %v2316 = vadd.f32 %v2241, %v2284
    %v2317 = vadd.f32 %v2242, %v2285
    %v2318 = vadd.f32 %v2243, %v2286
    %v2319 = vadd.f32 %v2244, %v2287
    %v2320 = vadd.f32 %v2245, %v2288
    %v2321 = vadd.f32 %v2246, %v2289
    %v2322 = vadd.f32 %v2247, %v2290
    %v2323 = vadd.f32 %v2248, %v2291
    %v2324 = vadd.f32 %v2249, %v2292
    %v2325 = vadd.f32 %v2250, %v2293
    %v2326 = vadd.f32 %v2251, %v2294
    %v2327 = vadd.f32 %v2252, %v2295
    %v2328 = vadd.f32 %v2253, %v2296
    %v2329 = vadd.f32 %v2254, %v2297
    %v2330 = vadd.f32 %v2255, %v2298
    %v2331 = vadd.f32 %v2256, %v2299
    %v2332 = vadd.f32 %v2257, %v2300
    %v2333 = vadd.f32 %v2258, %v2301
    %v2334 = vadd.f32 %v2259, %v2302
    %v2335 = vadd.f32 %v2260, %v2303
    %v2336 = vadd.f32 %v2261, %v2304
    %v2337 = vadd.f32 %v2262, %v2305
    %v2338 = vadd.f32 %v2263, %v2306
    %v2339 = vadd.f32 %v2264, %v2307
    %v2340 = vadd.f32 %v2265, %v2308
    %v2341 = vadd.f32 %v2266, %v2309
    %v2342 = vadd.f32 %v2267, %v2310
    %v2343 = vadd.f32 %v2268, %v2311
    %v2344 = vadd.f32 %v2269, %v2312
    %v2345 = vadd.f32 %v2270, %v2313
    %v2346 = vadd.f32 %v2271, %v2314
    %s2348 = sor.u32 256, 1
    %2349 = vbcast.lane.b32.xlu0 %v2275, %s2348
    %v2350 = vpop.permute.xlu0 %2349
    %s2352 = sor.u32 256, 9
    %2353 = vbcast.lane.b32.xlu0 %v2275, %s2352
    %v2354 = vpop.permute.xlu0 %2353
    %v2355 = vmul.f32 %v1688, %v1033
    %v2356 = vmul.f32 %v1692, %v1033
    %v2357 = vmul.f32 %v1696, %v1033
    %v2358 = vmul.f32 %v1700, %v1033
    %v2359 = vmul.f32 %v1704, %v1033
    %v2360 = vmul.f32 %v1708, %v1033
    %v2361 = vmul.f32 %v1712, %v1033
    %v2362 = vmul.f32 %v1716, %v1033
    %v2363 = vmul.f32 %v1720, %v1033
    %v2364 = vmul.f32 %v1724, %v1033
    %v2365 = vmul.f32 %v1728, %v1033
    %v2366 = vmul.f32 %v1732, %v1033
    %v2367 = vmul.f32 %v1736, %v1033
    %v2368 = vmul.f32 %v1740, %v1033
    %v2369 = vmul.f32 %v1744, %v1033
    %v2370 = vmul.f32 %v1748, %v1033
    %v2371 = vmul.f32 %v1752, %v1033
    %v2372 = vmul.f32 %v1756, %v1033
    %v2373 = vmul.f32 %v1760, %v1033
    %v2374 = vmul.f32 %v1764, %v1033
    %v2375 = vmul.f32 %v1768, %v1033
    %v2376 = vmul.f32 %v1772, %v1033
    %v2377 = vmul.f32 %v1776, %v1033
    %v2378 = vmul.f32 %v1780, %v1033
    %v2379 = vmul.f32 %v1784, %v1033
    %v2380 = vmul.f32 %v1788, %v1033
    %v2381 = vmul.f32 %v1792, %v1033
    %v2382 = vmul.f32 %v1796, %v1033
    %v2383 = vmul.f32 %v2131, %v1033
    %v2384 = vmul.f32 %v2135, %v1033
    %v2385 = vmul.f32 %v2350, %v1033
    %v2386 = vmul.f32 %v2354, %v1033
    %v2387 = vadd.f32 %v2315, %v2355
    %v2388 = vadd.f32 %v2316, %v2356
    %v2389 = vadd.f32 %v2317, %v2357
    %v2390 = vadd.f32 %v2318, %v2358
    %v2391 = vadd.f32 %v2319, %v2359
    %v2392 = vadd.f32 %v2320, %v2360
    %v2393 = vadd.f32 %v2321, %v2361
    %v2394 = vadd.f32 %v2322, %v2362
    %v2395 = vadd.f32 %v2323, %v2363
    %v2396 = vadd.f32 %v2324, %v2364
    %v2397 = vadd.f32 %v2325, %v2365
    %v2398 = vadd.f32 %v2326, %v2366
    %v2399 = vadd.f32 %v2327, %v2367
    %v2400 = vadd.f32 %v2328, %v2368
    %v2401 = vadd.f32 %v2329, %v2369
    %v2402 = vadd.f32 %v2330, %v2370
    %v2403 = vadd.f32 %v2331, %v2371
    %v2404 = vadd.f32 %v2332, %v2372
    %v2405 = vadd.f32 %v2333, %v2373
    %v2406 = vadd.f32 %v2334, %v2374
    %v2407 = vadd.f32 %v2335, %v2375
    %v2408 = vadd.f32 %v2336, %v2376
    %v2409 = vadd.f32 %v2337, %v2377
    %v2410 = vadd.f32 %v2338, %v2378
    %v2411 = vadd.f32 %v2339, %v2379
    %v2412 = vadd.f32 %v2340, %v2380
    %v2413 = vadd.f32 %v2341, %v2381
    %v2414 = vadd.f32 %v2342, %v2382
    %v2415 = vadd.f32 %v2343, %v2383
    %v2416 = vadd.f32 %v2344, %v2384
    %v2417 = vadd.f32 %v2345, %v2385
    %v2418 = vadd.f32 %v2346, %v2386
    %s2420 = sor.u32 256, 2
    %2421 = vbcast.lane.b32.xlu0 %v2275, %s2420
    %v2422 = vpop.permute.xlu0 %2421
    %s2424 = sor.u32 256, 10
    %2425 = vbcast.lane.b32.xlu0 %v2275, %s2424
    %v2426 = vpop.permute.xlu0 %2425
    %v2427 = vmul.f32 %v1880, %v1109
    %v2428 = vmul.f32 %v1884, %v1109
    %v2429 = vmul.f32 %v1888, %v1109
    %v2430 = vmul.f32 %v1892, %v1109
    %v2431 = vmul.f32 %v1896, %v1109
    %v2432 = vmul.f32 %v1900, %v1109
    %v2433 = vmul.f32 %v1904, %v1109
    %v2434 = vmul.f32 %v1908, %v1109
    %v2435 = vmul.f32 %v1912, %v1109
    %v2436 = vmul.f32 %v1916, %v1109
    %v2437 = vmul.f32 %v1920, %v1109
    %v2438 = vmul.f32 %v1924, %v1109
    %v2439 = vmul.f32 %v1928, %v1109
    %v2440 = vmul.f32 %v1932, %v1109
    %v2441 = vmul.f32 %v1936, %v1109
    %v2442 = vmul.f32 %v1940, %v1109
    %v2443 = vmul.f32 %v1944, %v1109
    %v2444 = vmul.f32 %v1948, %v1109
    %v2445 = vmul.f32 %v1952, %v1109
    %v2446 = vmul.f32 %v1956, %v1109
    %v2447 = vmul.f32 %v1960, %v1109
    %v2448 = vmul.f32 %v1964, %v1109
    %v2449 = vmul.f32 %v1968, %v1109
    %v2450 = vmul.f32 %v1972, %v1109
    %v2451 = vmul.f32 %v1976, %v1109
    %v2452 = vmul.f32 %v1980, %v1109
    %v2453 = vmul.f32 %v1984, %v1109
    %v2454 = vmul.f32 %v1988, %v1109
    %v2455 = vmul.f32 %v2203, %v1109
    %v2456 = vmul.f32 %v2207, %v1109
    %v2457 = vmul.f32 %v2422, %v1109
    %v2458 = vmul.f32 %v2426, %v1109
    %v2459 = vadd.f32 %v2387, %v2427
    %v2460 = vadd.f32 %v2388, %v2428
    %v2461 = vadd.f32 %v2389, %v2429
    %v2462 = vadd.f32 %v2390, %v2430
    %v2463 = vadd.f32 %v2391, %v2431
    %v2464 = vadd.f32 %v2392, %v2432
    %v2465 = vadd.f32 %v2393, %v2433
    %v2466 = vadd.f32 %v2394, %v2434
    %v2467 = vadd.f32 %v2395, %v2435
    %v2468 = vadd.f32 %v2396, %v2436
    %v2469 = vadd.f32 %v2397, %v2437
    %v2470 = vadd.f32 %v2398, %v2438
    %v2471 = vadd.f32 %v2399, %v2439
    %v2472 = vadd.f32 %v2400, %v2440
    %v2473 = vadd.f32 %v2401, %v2441
    %v2474 = vadd.f32 %v2402, %v2442
    %v2475 = vadd.f32 %v2403, %v2443
    %v2476 = vadd.f32 %v2404, %v2444
    %v2477 = vadd.f32 %v2405, %v2445
    %v2478 = vadd.f32 %v2406, %v2446
    %v2479 = vadd.f32 %v2407, %v2447
    %v2480 = vadd.f32 %v2408, %v2448
    %v2481 = vadd.f32 %v2409, %v2449
    %v2482 = vadd.f32 %v2410, %v2450
    %v2483 = vadd.f32 %v2411, %v2451
    %v2484 = vadd.f32 %v2412, %v2452
    %v2485 = vadd.f32 %v2413, %v2453
    %v2486 = vadd.f32 %v2414, %v2454
    %v2487 = vadd.f32 %v2415, %v2455
    %v2488 = vadd.f32 %v2416, %v2456
    %v2489 = vadd.f32 %v2417, %v2457
    %v2490 = vadd.f32 %v2418, %v2458
    %v2491 = vadd.f32 %v2459, %v1177
    %v2492 = vadd.f32 %v2460, %v1177
    %v2493 = vadd.f32 %v2461, %v1177
    %v2494 = vadd.f32 %v2462, %v1177
    %v2495 = vadd.f32 %v2463, %v1177
    %v2496 = vadd.f32 %v2464, %v1177
    %v2497 = vadd.f32 %v2465, %v1177
    %v2498 = vadd.f32 %v2466, %v1177
    %v2499 = vadd.f32 %v2467, %v1177
    %v2500 = vadd.f32 %v2468, %v1177
    %v2501 = vadd.f32 %v2469, %v1177
    %v2502 = vadd.f32 %v2470, %v1177
    %v2503 = vadd.f32 %v2471, %v1177
    %v2504 = vadd.f32 %v2472, %v1177
    %v2505 = vadd.f32 %v2473, %v1177
    %v2506 = vadd.f32 %v2474, %v1177
    %v2507 = vadd.f32 %v2475, %v1177
    %v2508 = vadd.f32 %v2476, %v1177
    %v2509 = vadd.f32 %v2477, %v1177
    %v2510 = vadd.f32 %v2478, %v1177
    %v2511 = vadd.f32 %v2479, %v1177
    %v2512 = vadd.f32 %v2480, %v1177
    %v2513 = vadd.f32 %v2481, %v1177
    %v2514 = vadd.f32 %v2482, %v1177
    %v2515 = vadd.f32 %v2483, %v1177
    %v2516 = vadd.f32 %v2484, %v1177
    %v2517 = vadd.f32 %v2485, %v1177
    %v2518 = vadd.f32 %v2486, %v1177
    %v2519 = vadd.f32 %v2487, %v1177
    %v2520 = vadd.f32 %v2488, %v1177
    %v2521 = vadd.f32 %v2489, %v1177
    %v2522 = vadd.f32 %v2490, %v1177
    %v2523 = vmax.f32 %v2491, 0.0
    %v2524 = vmax.f32 %v2492, 0.0
    %v2525 = vmax.f32 %v2493, 0.0
    %v2526 = vmax.f32 %v2494, 0.0
    %v2527 = vmax.f32 %v2495, 0.0
    %v2528 = vmax.f32 %v2496, 0.0
    %v2529 = vmax.f32 %v2497, 0.0
    %v2530 = vmax.f32 %v2498, 0.0
    %v2531 = vmax.f32 %v2499, 0.0
    %v2532 = vmax.f32 %v2500, 0.0
    %v2533 = vmax.f32 %v2501, 0.0
    %v2534 = vmax.f32 %v2502, 0.0
    %v2535 = vmax.f32 %v2503, 0.0
    %v2536 = vmax.f32 %v2504, 0.0
    %v2537 = vmax.f32 %v2505, 0.0
    %v2538 = vmax.f32 %v2506, 0.0
    %v2539 = vmax.f32 %v2507, 0.0
    %v2540 = vmax.f32 %v2508, 0.0
    %v2541 = vmax.f32 %v2509, 0.0
    %v2542 = vmax.f32 %v2510, 0.0
    %v2543 = vmax.f32 %v2511, 0.0
    %v2544 = vmax.f32 %v2512, 0.0
    %v2545 = vmax.f32 %v2513, 0.0
    %v2546 = vmax.f32 %v2514, 0.0
    %v2547 = vmax.f32 %v2515, 0.0
    %v2548 = vmax.f32 %v2516, 0.0
    %v2549 = vmax.f32 %v2517, 0.0
    %v2550 = vmax.f32 %v2518, 0.0
    %v2551 = vmax.f32 %v2519, 0.0
    %v2552 = vmax.f32 %v2520, 0.0
    %v2553 = vmax.f32 %v2521, 0.0
    %v2554 = vmax.f32 %v2522, 0.0
    %v2555 = vsel %vm1242, %v2523, 0.0
    %v2556 = vsel %vm1242, %v2524, 0.0
    %v2557 = vadd.f32 %v2555, %v2556
    %v2558 = vrot.slane %v2557, 4
    %v2559 = vadd.f32 %v2557, %v2558
    %v2560 = vrot.slane %v2559, 2
    %v2561 = vadd.f32 %v2559, %v2560
    %v2562 = vrot.slane %v2561, 1
    %v2563 = vadd.f32 %v2561, %v2562
    %v2564 = vsel %vm1242, %v2525, 0.0
    %v2565 = vsel %vm1242, %v2526, 0.0
    %v2566 = vadd.f32 %v2564, %v2565
    %v2567 = vrot.slane %v2566, 4
    %v2568 = vadd.f32 %v2566, %v2567
    %v2569 = vrot.slane %v2568, 2
    %v2570 = vadd.f32 %v2568, %v2569
    %v2571 = vrot.slane %v2570, 1
    %v2572 = vadd.f32 %v2570, %v2571
    %v2573 = vsel %vm1242, %v2527, 0.0
    %v2574 = vsel %vm1242, %v2528, 0.0
    %v2575 = vadd.f32 %v2573, %v2574
    %v2576 = vrot.slane %v2575, 4
    %v2577 = vadd.f32 %v2575, %v2576
    %v2578 = vrot.slane %v2577, 2
    %v2579 = vadd.f32 %v2577, %v2578
    %v2580 = vrot.slane %v2579, 1
    %v2581 = vadd.f32 %v2579, %v2580
    %v2582 = vsel %vm1242, %v2529, 0.0
    %v2583 = vsel %vm1242, %v2530, 0.0
    %v2584 = vadd.f32 %v2582, %v2583
    %v2585 = vrot.slane %v2584, 4
    %v2586 = vadd.f32 %v2584, %v2585
    %v2587 = vrot.slane %v2586, 2
    %v2588 = vadd.f32 %v2586, %v2587
    %v2589 = vrot.slane %v2588, 1
    %v2590 = vadd.f32 %v2588, %v2589
    %v2591 = vsel %vm1242, %v2531, 0.0
    %v2592 = vsel %vm1242, %v2532, 0.0
    %v2593 = vadd.f32 %v2591, %v2592
    %v2594 = vrot.slane %v2593, 4
    %v2595 = vadd.f32 %v2593, %v2594
    %v2596 = vrot.slane %v2595, 2
    %v2597 = vadd.f32 %v2595, %v2596
    %v2598 = vrot.slane %v2597, 1
    %v2599 = vadd.f32 %v2597, %v2598
    %v2600 = vsel %vm1242, %v2533, 0.0
    %v2601 = vsel %vm1242, %v2534, 0.0
    %v2602 = vadd.f32 %v2600, %v2601
    %v2603 = vrot.slane %v2602, 4
    %v2604 = vadd.f32 %v2602, %v2603
    %v2605 = vrot.slane %v2604, 2
    %v2606 = vadd.f32 %v2604, %v2605
    %v2607 = vrot.slane %v2606, 1
    %v2608 = vadd.f32 %v2606, %v2607
    %v2609 = vsel %vm1242, %v2535, 0.0
    %v2610 = vsel %vm1242, %v2536, 0.0
    %v2611 = vadd.f32 %v2609, %v2610
    %v2612 = vrot.slane %v2611, 4
    %v2613 = vadd.f32 %v2611, %v2612
    %v2614 = vrot.slane %v2613, 2
    %v2615 = vadd.f32 %v2613, %v2614
    %v2616 = vrot.slane %v2615, 1
    %v2617 = vadd.f32 %v2615, %v2616
    %v2618 = vsel %vm1242, %v2537, 0.0
    %v2619 = vsel %vm1242, %v2538, 0.0
    %v2620 = vadd.f32 %v2618, %v2619
    %v2621 = vrot.slane %v2620, 4
    %v2622 = vadd.f32 %v2620, %v2621
    %v2623 = vrot.slane %v2622, 2
    %v2624 = vadd.f32 %v2622, %v2623
    %v2625 = vrot.slane %v2624, 1
    %v2626 = vadd.f32 %v2624, %v2625
    %v2627 = vsel %vm1242, %v2539, 0.0
    %v2628 = vsel %vm1242, %v2540, 0.0
    %v2629 = vadd.f32 %v2627, %v2628
    %v2630 = vrot.slane %v2629, 4
    %v2631 = vadd.f32 %v2629, %v2630
    %v2632 = vrot.slane %v2631, 2
    %v2633 = vadd.f32 %v2631, %v2632
    %v2634 = vrot.slane %v2633, 1
    %v2635 = vadd.f32 %v2633, %v2634
    %v2636 = vsel %vm1242, %v2541, 0.0
    %v2637 = vsel %vm1242, %v2542, 0.0
    %v2638 = vadd.f32 %v2636, %v2637
    %v2639 = vrot.slane %v2638, 4
    %v2640 = vadd.f32 %v2638, %v2639
    %v2641 = vrot.slane %v2640, 2
    %v2642 = vadd.f32 %v2640, %v2641
    %v2643 = vrot.slane %v2642, 1
    %v2644 = vadd.f32 %v2642, %v2643
    %v2645 = vsel %vm1242, %v2543, 0.0
    %v2646 = vsel %vm1242, %v2544, 0.0
    %v2647 = vadd.f32 %v2645, %v2646
    %v2648 = vrot.slane %v2647, 4
    %v2649 = vadd.f32 %v2647, %v2648
    %v2650 = vrot.slane %v2649, 2
    %v2651 = vadd.f32 %v2649, %v2650
    %v2652 = vrot.slane %v2651, 1
    %v2653 = vadd.f32 %v2651, %v2652
    %v2654 = vsel %vm1242, %v2545, 0.0
    %v2655 = vsel %vm1242, %v2546, 0.0
    %v2656 = vadd.f32 %v2654, %v2655
    %v2657 = vrot.slane %v2656, 4
    %v2658 = vadd.f32 %v2656, %v2657
    %v2659 = vrot.slane %v2658, 2
    %v2660 = vadd.f32 %v2658, %v2659
    %v2661 = vrot.slane %v2660, 1
    %v2662 = vadd.f32 %v2660, %v2661
    %v2663 = vsel %vm1242, %v2547, 0.0
    %v2664 = vsel %vm1242, %v2548, 0.0
    %v2665 = vadd.f32 %v2663, %v2664
    %v2666 = vrot.slane %v2665, 4
    %v2667 = vadd.f32 %v2665, %v2666
    %v2668 = vrot.slane %v2667, 2
    %v2669 = vadd.f32 %v2667, %v2668
    %v2670 = vrot.slane %v2669, 1
    %v2671 = vadd.f32 %v2669, %v2670
    %v2672 = vsel %vm1242, %v2549, 0.0
    %v2673 = vsel %vm1242, %v2550, 0.0
    %v2674 = vadd.f32 %v2672, %v2673
    %v2675 = vrot.slane %v2674, 4
    %v2676 = vadd.f32 %v2674, %v2675
    %v2677 = vrot.slane %v2676, 2
    %v2678 = vadd.f32 %v2676, %v2677
    %v2679 = vrot.slane %v2678, 1
    %v2680 = vadd.f32 %v2678, %v2679
    %v2681 = vsel %vm1242, %v2551, 0.0
    %v2682 = vsel %vm1242, %v2552, 0.0
    %v2683 = vadd.f32 %v2681, %v2682
    %v2684 = vrot.slane %v2683, 4
    %v2685 = vadd.f32 %v2683, %v2684
    %v2686 = vrot.slane %v2685, 2
    %v2687 = vadd.f32 %v2685, %v2686
    %v2688 = vrot.slane %v2687, 1
    %v2689 = vadd.f32 %v2687, %v2688
    %v2690 = vsel %vm1242, %v2553, 0.0
    %v2691 = vsel %vm1242, %v2554, 0.0
    %v2692 = vadd.f32 %v2690, %v2691
    %v2693 = vrot.slane %v2692, 4
    %v2694 = vadd.f32 %v2692, %v2693
    %v2695 = vrot.slane %v2694, 2
    %v2696 = vadd.f32 %v2694, %v2695
    %v2697 = vrot.slane %v2696, 1
    %v2698 = vadd.f32 %v2696, %v2697
    %v2699 = vmul.f32 %v2563, 0.0625
    %v2700 = vmul.f32 %v2572, 0.0625
    %v2701 = vmul.f32 %v2581, 0.0625
    %v2702 = vmul.f32 %v2590, 0.0625
    %v2703 = vmul.f32 %v2599, 0.0625
    %v2704 = vmul.f32 %v2608, 0.0625
    %v2705 = vmul.f32 %v2617, 0.0625
    %v2706 = vmul.f32 %v2626, 0.0625
    %v2707 = vmul.f32 %v2635, 0.0625
    %v2708 = vmul.f32 %v2644, 0.0625
    %v2709 = vmul.f32 %v2653, 0.0625
    %v2710 = vmul.f32 %v2662, 0.0625
    %v2711 = vmul.f32 %v2671, 0.0625
    %v2712 = vmul.f32 %v2680, 0.0625
    %v2713 = vmul.f32 %v2689, 0.0625
    %v2714 = vmul.f32 %v2698, 0.0625
    %vm2731 = vcmask 1042434
    %v2732 = vsel %vm2731, %v1388, %v1387
    %vm2733 = vcmask 1043459
    %v2734 = vsel %vm2733, %v1389, %v2732
    %vm2735 = vcmask 1044484
    %v2736 = vsel %vm2735, %v1390, %v2734
    %vm2737 = vcmask 1045509
    %v2738 = vsel %vm2737, %v1391, %v2736
    %vm2739 = vcmask 1046534
    %v2740 = vsel %vm2739, %v1392, %v2738
    %vm2741 = vcmask 1047559
    %v2742 = vsel %vm2741, %v1393, %v2740
    %vm2743 = vcmask 1041409
    %v2744 = vsel %vm2743, %v1395, %v1394
    %v2745 = vsel %vm2731, %v1396, %v2744
    %v2746 = vsel %vm2733, %v1397, %v2745
    %v2747 = vsel %vm2735, %v1398, %v2746
    %v2748 = vsel %vm2737, %v1399, %v2747
    %v2749 = vsel %vm2739, %v1400, %v2748
    %v2750 = vsel %vm2741, %v1401, %v2749
    %v2754 = vrot.slane %v46, 7
    %v2772 = vsel %vm2733, %v2700, %v2699
    %v2773 = vsel %vm2735, %v2701, %v2772
    %v2774 = vsel %vm2737, %v2702, %v2773
    %v2775 = vsel %vm2739, %v2703, %v2774
    %v2776 = vsel %vm2741, %v2704, %v2775
    %v2777 = vsel %vm2743, %v2706, %v2705
    %v2778 = vsel %vm2731, %v2707, %v2777
    %v2779 = vsel %vm2733, %v2708, %v2778
    %v2780 = vsel %vm2735, %v2709, %v2779
    %v2781 = vsel %vm2737, %v2710, %v2780
    %v2782 = vsel %vm2739, %v2711, %v2781
    %v2783 = vsel %vm2741, %v2712, %v2782
    %v2784 = vsel %vm2743, %v2714, %v2713
    %v2786 = vsel %vm49, %v46, %v2742
    %v2787 = vsel %vm49, %v1402, %v2754
    %vm2788 = vcmask 1041408
    %v2789 = vsel %vm2788, %v2787, %v2776
    %v2790 = vld [vmem:[#allocation4 + $0x20] sm:$0xff]
    %v2791 = vld [vmem:[#allocation4 + $0x28] sm:$0xff]
    %v2792 = vld [vmem:[#allocation4 + $0x30] sm:$0xff]
    %v2793 = vld [vmem:[#allocation4 + $0x38] sm:$0xff]
    %v2794 = vld [vmem:[#allocation4 + $0x40] sm:$0x1]
    %v2795 = vlaneseq
    %v2796 = vshrl.u32 %v2795, 7
    %v2797 = vsub.s32 0, %v2796
    %v2798 = vrot.slane %v2794, %v2797
    %v2800 = vsel %vm1242, %v2786, 0
    %v2802 = vsel %vm1242, %v2750, 0
    %v2805 = vsel %vm1242, %v2789, 0
    %v2807 = vsel %vm1242, %v2783, 0
    %v2809 = vsel %vm1242, %v2784, 0
    %2811 = vmatprep.subr.mxu0 0.0
    %2812 = vmatpush1.msra.mxu0 %v2790
    %2813 = vmatprep.subr.mxu0 0.0
    %2814 = vmatpush1.msra.mxu0 %v2791
    %2815 = vmatprep.subr.mxu0 0.0
    %2816 = vmatpush1.msra.mxu0 %v2792
    %2817 = vmatprep.subr.mxu0 0.0
    %2818 = vmatpush1.msra.mxu0 %v2793
    %2819 = vmatprep.subr.mxu0 0.0
    %2820 = vmatpush1.msra.mxu0 0.0
    %2821 = vmatprep.subr.mxu0 0.0
    %2822 = vmatpush1.msra.mxu0 0.0
    %2823 = vmatprep.subr.mxu0 0.0
    %2824 = vmatpush1.msra.mxu0 0.0
    %2825 = vmatprep.subr.mxu0 0.0
    %2826 = vmatpush1.msra.mxu0 0.0
    %2827 = vmatprep.subr.mxu0 0.0
    %2828 = vmatpush1.msra.mxu0 0.0
    %2829 = vmatprep.subr.mxu0 0.0
    %2830 = vmatpush1.msra.mxu0 0.0
    %2831 = vmatprep.subr.mxu0 0.0
    %2832 = vmatpush1.msra.mxu0 0.0
    %2833 = vmatprep.subr.mxu0 0.0
    %2834 = vmatpush1.msra.mxu0 0.0
    %2835 = vmatprep.subr.mxu0 0.0
    %2836 = vmatpush1.msra.mxu0 0.0
    %2837 = vmatprep.subr.mxu0 0.0
    %2838 = vmatpush1.msra.mxu0 0.0
    %2839 = vmatprep.subr.mxu0 0.0
    %2840 = vmatpush1.msra.mxu0 0.0
    %2841 = vmatprep.subr.mxu0 0.0
    %2842 = vmatpush1.msra.mxu0 0.0
    %2843 = vmatprep.subr.mxu0 0.0
    %2844 = vmatpush1.msra.mxu0 0.0
    %2845 = vmatprep.subr.mxu0 0.0
    %2846 = vmatpush1.msra.mxu0 0.0
    %2847 = vmatprep.subr.mxu0 0.0
    %2848 = vmatpush1.msra.mxu0 0.0
    %2849 = vmatprep.subr.mxu0 0.0
    %2850 = vmatpush1.msra.mxu0 0.0
    %2851 = vmatprep.subr.mxu0 0.0
    %2852 = vmatpush1.msra.mxu0 0.0
    %2853 = vmatprep.subr.mxu0 0.0
    %2854 = vmatpush1.msra.mxu0 0.0
    %2855 = vmatprep.subr.mxu0 0.0
    %2856 = vmatpush1.msra.mxu0 0.0
    %2857 = vmatprep.subr.mxu0 0.0
    %2858 = vmatpush1.msra.mxu0 0.0
    %2859 = vmatprep.subr.mxu0 0.0
    %2860 = vmatpush1.msra.mxu0 0.0
    %2861 = vmatprep.subr.mxu0 0.0
    %2862 = vmatpush1.msra.mxu0 0.0
    %2863 = vmatprep.subr.mxu0 0.0
    %2864 = vmatpush1.msra.mxu0 0.0
    %2865 = vmatprep.subr.mxu0 0.0
    %2866 = vmatpush1.msra.mxu0 0.0
    %2867 = vmatprep.subr.mxu0 0.0
    %2868 = vmatpush1.msra.mxu0 0.0
    %2869 = vmatprep.subr.mxu0 0.0
    %2870 = vmatpush1.msra.mxu0 0.0
    %2871 = vmatprep.subr.mxu0 0.0
    %2872 = vmatpush1.msra.mxu0 0.0
    %2873 = vmatprep.subr.mxu0 0.0
    %2874 = vmatpush1.msra.mxu0 0.0
    %2875 = vmatprep.mubr.f32.mxu0 0.0
    %2876 = vmatmul.mubr.f32.gmra.mrb[0].mxu0 %v2800
    %v2877 = vpop.f32.mrb[0].mxu0
    %v2878 = vadd.f32 %v2798, %v2877
    %v2879 = vpop.f32.mrb[0].mxu0
    %2880 = vmatprep.mubr.f32.mxu0 0.0
    %2881 = vmatmul.mubr.f32.gmra.mrb[0].mxu0 %v2802
    %v2882 = vpop.f32.mrb[0].mxu0
    %v2883 = vadd.f32 %v2798, %v2882
    %v2884 = vpop.f32.mrb[0].mxu0
    %2885 = vmatprep.mubr.f32.mxu0 0.0
    %2886 = vmatmul.mubr.f32.gmra.mrb[0].mxu0 %v2805
    %v2887 = vpop.f32.mrb[0].mxu0
    %v2888 = vadd.f32 %v2798, %v2887
    %v2889 = vpop.f32.mrb[0].mxu0
    %2890 = vmatprep.mubr.f32.mxu0 0.0
    %2891 = vmatmul.mubr.f32.gmra.mrb[0].mxu0 %v2807
    %v2892 = vpop.f32.mrb[0].mxu0
    %v2893 = vadd.f32 %v2798, %v2892
    %v2894 = vpop.f32.mrb[0].mxu0
    %2895 = vmatprep.mubr.f32.mxu0 0.0
    %2896 = vmatmul.mubr.f32.gmra.mrb[0].mxu0 %v2809
    %v2897 = vpop.f32.mrb[0].mxu0
    %v2898 = vadd.f32 %v2798, %v2897
    %v2899 = vpop.f32.mrb[0].mxu0
    %2900 = vdwg.mxu0
    %v2901 = vsel %vm1242, %v2878, 0.0
    %2902 = vadd.xlane.f32.xlu0 %v2901
    %v2903 = vpop.xlane.xlu0 %2902
    %v2904 = vsel %vm1242, %v2883, 0.0
    %2905 = vadd.xlane.f32.xlu0 %v2904
    %v2906 = vpop.xlane.xlu0 %2905
    %v2907 = vsel %vm1242, %v2888, 0.0
    %2908 = vadd.xlane.f32.xlu0 %v2907
    %v2909 = vpop.xlane.xlu0 %2908
    %v2910 = vsel %vm1242, %v2893, 0.0
    %2911 = vadd.xlane.f32.xlu0 %v2910
    %v2912 = vpop.xlane.xlu0 %2911
    %vm2913 = vcmask 254976
    %v2914 = vsel %vm2913, %v2898, 0.0
    %2915 = vadd.xlane.f32.xlu0 %v2914
    %v2916 = vpop.xlane.xlu0 %2915
    %v2917 = vrcp.pop 32.0
    %v2918 = vmul.f32 %v2903, %v2917
    %v2919 = vmul.f32 %v2906, %v2917
    %v2920 = vmul.f32 %v2909, %v2917
    %v2921 = vmul.f32 %v2912, %v2917
    %v2922 = vmul.f32 %v2916, %v2917
    %v2923 = vsub.f32 %v2878, %v2918
    %v2924 = vsub.f32 %v2883, %v2919
    %v2925 = vsub.f32 %v2888, %v2920
    %v2926 = vsub.f32 %v2893, %v2921
    %v2927 = vsub.f32 %v2898, %v2922
    %v2928 = vmul.f32 %v2923, %v2923
    %v2929 = vmul.f32 %v2924, %v2924
    %v2930 = vmul.f32 %v2925, %v2925
    %v2931 = vmul.f32 %v2926, %v2926
    %v2932 = vmul.f32 %v2927, %v2927
    %v2933 = vsel %vm1242, %v2928, 0.0
    %2934 = vadd.xlane.f32.xlu0 %v2933
    %v2935 = vpop.xlane.xlu0 %2934
    %v2936 = vsel %vm1242, %v2929, 0.0
    %2937 = vadd.xlane.f32.xlu0 %v2936
    %v2938 = vpop.xlane.xlu0 %2937
    %v2939 = vsel %vm1242, %v2930, 0.0
    %2940 = vadd.xlane.f32.xlu0 %v2939
    %v2941 = vpop.xlane.xlu0 %2940
    %v2942 = vsel %vm1242, %v2931, 0.0
    %2943 = vadd.xlane.f32.xlu0 %v2942
    %v2944 = vpop.xlane.xlu0 %2943
    %v2945 = vsel %vm2913, %v2932, 0.0
    %2946 = vadd.xlane.f32.xlu0 %v2945
    %v2947 = vpop.xlane.xlu0 %2946
    %v2948 = vmul.f32 %v2935, %v2917
    %v2949 = vmul.f32 %v2938, %v2917
    %v2950 = vmul.f32 %v2941, %v2917
    %v2951 = vmul.f32 %v2944, %v2917
    %v2952 = vmul.f32 %v2947, %v2917
    %v2953 = vadd.f32 %v2948, 1e-05
    %v2954 = vadd.f32 %v2949, 1e-05
    %v2955 = vadd.f32 %v2950, 1e-05
    %v2956 = vadd.f32 %v2951, 1e-05
    %v2957 = vadd.f32 %v2952, 1e-05
    %v2958 = vrsqrt.pop %v2953
    %v2959 = vrsqrt.pop %v2954
    %v2960 = vrsqrt.pop %v2955
    %v2961 = vrsqrt.pop %v2956
    %v2962 = vrsqrt.pop %v2957
    %v2963 = vmul.f32 %v2923, %v2958
    %v2964 = vmul.f32 %v2924, %v2959
    %v2965 = vmul.f32 %v2925, %v2960
    %v2966 = vmul.f32 %v2926, %v2961
    %v2967 = vmul.f32 %v2927, %v2962
    %v2968 = vld [vmem:[#allocation4 + $0x48] sm:$0x1]
    %v2969 = vlaneseq
    %v2970 = vshrl.u32 %v2969, 7
    %v2971 = vsub.s32 0, %v2970
    %v2972 = vrot.slane %v2968, %v2971
    %v2973 = vmul.f32 %v2963, %v2972
    %v2974 = vmul.f32 %v2964, %v2972
    %v2975 = vmul.f32 %v2965, %v2972
    %v2976 = vmul.f32 %v2966, %v2972
    %v2977 = vmul.f32 %v2967, %v2972
    %v2978 = vld [vmem:[#allocation4 + $0x50] sm:$0x1]
    %v2979 = vlaneseq
    %v2980 = vshrl.u32 %v2979, 7
    %v2981 = vsub.s32 0, %v2980
    %v2982 = vrot.slane %v2978, %v2981
    %v2983 = vadd.f32 %v2973, %v2982
    %v2984 = vadd.f32 %v2974, %v2982
    %v2985 = vadd.f32 %v2975, %v2982
    %v2986 = vadd.f32 %v2976, %v2982
    %v2987 = vadd.f32 %v2977, %v2982
    %v2988 = vld [vmem:[#allocation4 + $0x58] sm:$0xff]
    %v2989 = vld [vmem:[#allocation4 + $0x60] sm:$0xff]
    %v2990 = vld [vmem:[#allocation4 + $0x68] sm:$0xff]
    %v2991 = vld [vmem:[#allocation4 + $0x70] sm:$0xff]
    %v2992 = vld [vmem:[#allocation4 + $0x78] sm:$0x1]
    %v2993 = vlaneseq
    %v2994 = vshrl.u32 %v2993, 7
    %v2995 = vsub.s32 0, %v2994
    %v2996 = vrot.slane %v2992, %v2995
    %v2998 = vsel %vm1242, %v2983, 0
    %v3001 = vsel %vm1242, %v2984, 0
    %v3004 = vsel %vm1242, %v2985, 0
    %v3007 = vsel %vm1242, %v2986, 0
    %v3010 = vsel %vm1242, %v2987, 0
    %3012 = vmatprep.subr.mxu0 0.0
    %3013 = vmatpush1.msra.mxu0 %v2988
    %3014 = vmatprep.subr.mxu0 0.0
    %3015 = vmatpush1.msra.mxu0 %v2989
    %3016 = vmatprep.subr.mxu0 0.0
    %3017 = vmatpush1.msra.mxu0 %v2990
    %3018 = vmatprep.subr.mxu0 0.0
    %3019 = vmatpush1.msra.mxu0 %v2991
    %3020 = vmatprep.subr.mxu0 0.0
    %3021 = vmatpush1.msra.mxu0 0.0
    %3022 = vmatprep.subr.mxu0 0.0
    %3023 = vmatpush1.msra.mxu0 0.0
    %3024 = vmatprep.subr.mxu0 0.0
    %3025 = vmatpush1.msra.mxu0 0.0
    %3026 = vmatprep.subr.mxu0 0.0
    %3027 = vmatpush1.msra.mxu0 0.0
    %3028 = vmatprep.subr.mxu0 0.0
    %3029 = vmatpush1.msra.mxu0 0.0
    %3030 = vmatprep.subr.mxu0 0.0
    %3031 = vmatpush1.msra.mxu0 0.0
    %3032 = vmatprep.subr.mxu0 0.0
    %3033 = vmatpush1.msra.mxu0 0.0
    %3034 = vmatprep.subr.mxu0 0.0
    %3035 = vmatpush1.msra.mxu0 0.0
    %3036 = vmatprep.subr.mxu0 0.0
    %3037 = vmatpush1.msra.mxu0 0.0
    %3038 = vmatprep.subr.mxu0 0.0
    %3039 = vmatpush1.msra.mxu0 0.0
    %3040 = vmatprep.subr.mxu0 0.0
    %3041 = vmatpush1.msra.mxu0 0.0
    %3042 = vmatprep.subr.mxu0 0.0
    %3043 = vmatpush1.msra.mxu0 0.0
    %3044 = vmatprep.subr.mxu0 0.0
    %3045 = vmatpush1.msra.mxu0 0.0
    %3046 = vmatprep.subr.mxu0 0.0
    %3047 = vmatpush1.msra.mxu0 0.0
    %3048 = vmatprep.subr.mxu0 0.0
    %3049 = vmatpush1.msra.mxu0 0.0
    %3050 = vmatprep.subr.mxu0 0.0
    %3051 = vmatpush1.msra.mxu0 0.0
    %3052 = vmatprep.subr.mxu0 0.0
    %3053 = vmatpush1.msra.mxu0 0.0
    %3054 = vmatprep.subr.mxu0 0.0
    %3055 = vmatpush1.msra.mxu0 0.0
    %3056 = vmatprep.subr.mxu0 0.0
    %3057 = vmatpush1.msra.mxu0 0.0
    %3058 = vmatprep.subr.mxu0 0.0
    %3059 = vmatpush1.msra.mxu0 0.0
    %3060 = vmatprep.subr.mxu0 0.0
    %3061 = vmatpush1.msra.mxu0 0.0
    %3062 = vmatprep.subr.mxu0 0.0
    %3063 = vmatpush1.msra.mxu0 0.0
    %3064 = vmatprep.subr.mxu0 0.0
    %3065 = vmatpush1.msra.mxu0 0.0
    %3066 = vmatprep.subr.mxu0 0.0
    %3067 = vmatpush1.msra.mxu0 0.0
    %3068 = vmatprep.subr.mxu0 0.0
    %3069 = vmatpush1.msra.mxu0 0.0
    %3070 = vmatprep.subr.mxu0 0.0
    %3071 = vmatpush1.msra.mxu0 0.0
    %3072 = vmatprep.subr.mxu0 0.0
    %3073 = vmatpush1.msra.mxu0 0.0
    %3074 = vmatprep.subr.mxu0 0.0
    %3075 = vmatpush1.msra.mxu0 0.0
    %3076 = vmatprep.mubr.f32.mxu0 0.0
    %3077 = vmatmul.mubr.f32.gmra.mrb[0].mxu0 %v2998
    %v3078 = vpop.f32.mrb[0].mxu0
    %v3079 = vadd.f32 %v2996, %v3078
    %v3080 = vpop.f32.mrb[0].mxu0
    %3081 = vmatprep.mubr.f32.mxu0 0.0
    %3082 = vmatmul.mubr.f32.gmra.mrb[0].mxu0 %v3001
    %v3083 = vpop.f32.mrb[0].mxu0
    %v3084 = vadd.f32 %v2996, %v3083
    %v3085 = vpop.f32.mrb[0].mxu0
    %3086 = vmatprep.mubr.f32.mxu0 0.0
    %3087 = vmatmul.mubr.f32.gmra.mrb[0].mxu0 %v3004
    %v3088 = vpop.f32.mrb[0].mxu0
    %v3089 = vadd.f32 %v2996, %v3088
    %v3090 = vpop.f32.mrb[0].mxu0
    %3091 = vmatprep.mubr.f32.mxu0 0.0
    %3092 = vmatmul.mubr.f32.gmra.mrb[0].mxu0 %v3007
    %v3093 = vpop.f32.mrb[0].mxu0
    %v3094 = vadd.f32 %v2996, %v3093
    %v3095 = vpop.f32.mrb[0].mxu0
    %3096 = vmatprep.mubr.f32.mxu0 0.0
    %3097 = vmatmul.mubr.f32.gmra.mrb[0].mxu0 %v3010
    %v3098 = vpop.f32.mrb[0].mxu0
    %v3099 = vadd.f32 %v2996, %v3098
    %v3100 = vpop.f32.mrb[0].mxu0
    %3101 = vdwg.mxu0
    %3105 = vrot.lane.b32.xlu0 %v3079, 96
    %v3106 = vpop.permute.xlu0 %3105
    %3107 = vrot.lane.b32.xlu0 %v3084, 96
    %v3108 = vpop.permute.xlu0 %3107
    %3109 = vrot.lane.b32.xlu0 %v3089, 96
    %v3110 = vpop.permute.xlu0 %3109
    %v3111 = vsel %vm1242, %v3079, 0
    %v3113 = vsel %vm1242, %v3084, 0
    %v3115 = vsel %vm1242, %v3089, 0
    %v3117 = vsel %vm1242, %v3106, 0
    %v3119 = vsel %vm1242, %v3108, 0
    %v3121 = vsel %vm1242, %v3110, 0
    %3123 = vmatprep.subr.mxu0 0.0
    %3124 = vmatpush1.xpose.msra.mxu0 %v3117
    %3125 = vmatprep.subr.mxu0 0.0
    %3126 = vmatpush1.xpose.msra.mxu0 %v3119
    %3127 = vmatprep.subr.mxu0 0.0
    %3128 = vmatpush1.xpose.msra.mxu0 %v3121
    %3129 = vmatprep.subr.mxu0 0.0
    %3130 = vmatpush1.xpose.msra.mxu0 0.0
    %3131 = vmatprep.subr.mxu0 0.0
    %3132 = vmatpush1.xpose.msra.mxu0 0.0
    %3133 = vmatprep.subr.mxu0 0.0
    %3134 = vmatpush1.xpose.msra.mxu0 0.0
    %3135 = vmatprep.subr.mxu0 0.0
    %3136 = vmatpush1.xpose.msra.mxu0 0.0
    %3137 = vmatprep.subr.mxu0 0.0
    %3138 = vmatpush1.xpose.msra.mxu0 0.0
    %3139 = vmatprep.subr.mxu0 0.0
    %3140 = vmatpush1.xpose.msra.mxu0 0.0
    %3141 = vmatprep.subr.mxu0 0.0
    %3142 = vmatpush1.xpose.msra.mxu0 0.0
    %3143 = vmatprep.subr.mxu0 0.0
    %3144 = vmatpush1.xpose.msra.mxu0 0.0
    %3145 = vmatprep.subr.mxu0 0.0
    %3146 = vmatpush1.xpose.msra.mxu0 0.0
    %3147 = vmatprep.subr.mxu0 0.0
    %3148 = vmatpush1.xpose.msra.mxu0 0.0
    %3149 = vmatprep.subr.mxu0 0.0
    %3150 = vmatpush1.xpose.msra.mxu0 0.0
    %3151 = vmatprep.subr.mxu0 0.0
    %3152 = vmatpush1.xpose.msra.mxu0 0.0
    %3153 = vmatprep.subr.mxu0 0.0
    %3154 = vmatpush1.xpose.msra.mxu0 0.0
    %3155 = vmatprep.subr.mxu0 0.0
    %3156 = vmatpush1.xpose.msra.mxu0 0.0
    %3157 = vmatprep.subr.mxu0 0.0
    %3158 = vmatpush1.xpose.msra.mxu0 0.0
    %3159 = vmatprep.subr.mxu0 0.0
    %3160 = vmatpush1.xpose.msra.mxu0 0.0
    %3161 = vmatprep.subr.mxu0 0.0
    %3162 = vmatpush1.xpose.msra.mxu0 0.0
    %3163 = vmatprep.subr.mxu0 0.0
    %3164 = vmatpush1.xpose.msra.mxu0 0.0
    %3165 = vmatprep.subr.mxu0 0.0
    %3166 = vmatpush1.xpose.msra.mxu0 0.0
    %3167 = vmatprep.subr.mxu0 0.0
    %3168 = vmatpush1.xpose.msra.mxu0 0.0
    %3169 = vmatprep.subr.mxu0 0.0
    %3170 = vmatpush1.xpose.msra.mxu0 0.0
    %3171 = vmatprep.subr.mxu0 0.0
    %3172 = vmatpush1.xpose.msra.mxu0 0.0
    %3173 = vmatprep.subr.mxu0 0.0
    %3174 = vmatpush1.xpose.msra.mxu0 0.0
    %3175 = vmatprep.subr.mxu0 0.0
    %3176 = vmatpush1.xpose.msra.mxu0 0.0
    %3177 = vmatprep.subr.mxu0 0.0
    %3178 = vmatpush1.xpose.msra.mxu0 0.0
    %3179 = vmatprep.subr.mxu0 0.0
    %3180 = vmatpush1.xpose.msra.mxu0 0.0
    %3181 = vmatprep.subr.mxu0 0.0
    %3182 = vmatpush1.xpose.msra.mxu0 0.0
    %3183 = vmatprep.subr.mxu0 0.0
    %3184 = vmatpush1.xpose.msra.mxu0 0.0
    %3185 = vmatprep.subr.mxu0 0.0
    %3186 = vmatpush1.xpose.msra.mxu0 0.0
    %3187 = vmatprep.mubr.f32.mxu0 0.0
    %3188 = vmatmul.mubr.f32.gmra.mrb[0].mxu0 %v3111
    %v3189 = vpop.f32.mrb[0].mxu0
    %v3190 = vadd.f32 0.0, %v3189
    %v3191 = vpop.f32.mrb[0].mxu0
    %3192 = vmatprep.mubr.f32.mxu0 0.0
    %3193 = vmatmul.mubr.f32.gmra.mrb[0].mxu0 %v3113
    %v3194 = vpop.f32.mrb[0].mxu0
    %v3195 = vadd.f32 0.0, %v3194
    %v3196 = vpop.f32.mrb[0].mxu0
    %3197 = vmatprep.mubr.f32.mxu0 0.0
    %3198 = vmatmul.mubr.f32.gmra.mrb[0].mxu0 %v3115
    %v3199 = vpop.f32.mrb[0].mxu0
    %v3200 = vadd.f32 0.0, %v3199
    %v3201 = vpop.f32.mrb[0].mxu0
    %3202 = vdwg.mxu0
    %v3203 = vmul.f32 %v3190, 0.17677669
    %v3204 = vmul.f32 %v3195, 0.17677669
    %v3205 = vmul.f32 %v3200, 0.17677669
    %v3206 = vsel %vm72, %v3203, -inf
    %3207 = vmax.xlane.f32.xlu0 %v3206
    %v3208 = vpop.xlane.xlu0 %3207
    %v3209 = vsel %vm72, %v3204, -inf
    %3210 = vmax.xlane.f32.xlu0 %v3209
    %v3211 = vpop.xlane.xlu0 %3210
    %vm3212 = vcmask 131072
    %v3213 = vsel %vm3212, %v3205, -inf
    %3214 = vmax.xlane.f32.xlu0 %v3213
    %v3215 = vpop.xlane.xlu0 %3214
    %v3216 = vsub.f32 %v3203, %v3208
    %v3217 = vsub.f32 %v3204, %v3211
    %v3218 = vsub.f32 %v3205, %v3215
    %v3219 = vmul.f32 %v3216, 1.442695
    %v3220 = vpow.pop %v3219
    %v3221 = vmul.f32 %v3217, 1.442695
    %v3222 = vpow.pop %v3221
    %v3223 = vmul.f32 %v3218, 1.442695
    %v3224 = vpow.pop %v3223
    %v3225 = vsel %vm72, %v3220, 0.0
    %3226 = vadd.xlane.f32.xlu0 %v3225
    %v3227 = vpop.xlane.xlu0 %3226
    %v3228 = vsel %vm72, %v3222, 0.0
    %3229 = vadd.xlane.f32.xlu0 %v3228
    %v3230 = vpop.xlane.xlu0 %3229
    %v3231 = vsel %vm3212, %v3224, 0.0
    %3232 = vadd.xlane.f32.xlu0 %v3231
    %v3233 = vpop.xlane.xlu0 %3232
    %v3234 = vrcp.pop %v3227
    %v3235 = vrcp.pop %v3230
    %v3236 = vrcp.pop %v3233
    %v3237 = vmul.f32 %v3220, %v3234
    %v3238 = vmul.f32 %v3222, %v3235
    %v3239 = vmul.f32 %v3224, %v3236
    %3240 = vrot.lane.b32.xlu0 %v3079, 64
    %v3241 = vpop.permute.xlu0 %3240
    %3242 = vrot.lane.b32.xlu0 %v3084, 64
    %v3243 = vpop.permute.xlu0 %3242
    %3244 = vrot.lane.b32.xlu0 %v3089, 64
    %v3245 = vpop.permute.xlu0 %3244
    %v3249 = vsel %vm72, %v3237, 0
    %v3252 = vsel %vm72, %v3238, 0
    %v3255 = vsel %vm72, %v3239, 0
    %v3257 = vsel %vm49, %v3245, 0
    %3259 = vmatprep.subr.mxu0 0.0
    %3260 = vmatpush1.msra.mxu0 %v3241
    %3261 = vmatprep.subr.mxu0 0.0
    %3262 = vmatpush1.msra.mxu0 %v3243
    %3263 = vmatprep.subr.mxu0 0.0
    %3264 = vmatpush1.msra.mxu0 %v3257
    %3265 = vmatprep.subr.mxu0 0.0
    %3266 = vmatpush1.msra.mxu0 0.0
    %3267 = vmatprep.subr.mxu0 0.0
    %3268 = vmatpush1.msra.mxu0 0.0
    %3269 = vmatprep.subr.mxu0 0.0
    %3270 = vmatpush1.msra.mxu0 0.0
    %3271 = vmatprep.subr.mxu0 0.0
    %3272 = vmatpush1.msra.mxu0 0.0
    %3273 = vmatprep.subr.mxu0 0.0
    %3274 = vmatpush1.msra.mxu0 0.0
    %3275 = vmatprep.subr.mxu0 0.0
    %3276 = vmatpush1.msra.mxu0 0.0
    %3277 = vmatprep.subr.mxu0 0.0
    %3278 = vmatpush1.msra.mxu0 0.0
    %3279 = vmatprep.subr.mxu0 0.0
    %3280 = vmatpush1.msra.mxu0 0.0
    %3281 = vmatprep.subr.mxu0 0.0
    %3282 = vmatpush1.msra.mxu0 0.0
    %3283 = vmatprep.subr.mxu0 0.0
    %3284 = vmatpush1.msra.mxu0 0.0
    %3285 = vmatprep.subr.mxu0 0.0
    %3286 = vmatpush1.msra.mxu0 0.0
    %3287 = vmatprep.subr.mxu0 0.0
    %3288 = vmatpush1.msra.mxu0 0.0
    %3289 = vmatprep.subr.mxu0 0.0
    %3290 = vmatpush1.msra.mxu0 0.0
    %3291 = vmatprep.subr.mxu0 0.0
    %3292 = vmatpush1.msra.mxu0 0.0
    %3293 = vmatprep.subr.mxu0 0.0
    %3294 = vmatpush1.msra.mxu0 0.0
    %3295 = vmatprep.subr.mxu0 0.0
    %3296 = vmatpush1.msra.mxu0 0.0
    %3297 = vmatprep.subr.mxu0 0.0
    %3298 = vmatpush1.msra.mxu0 0.0
    %3299 = vmatprep.subr.mxu0 0.0
    %3300 = vmatpush1.msra.mxu0 0.0
    %3301 = vmatprep.subr.mxu0 0.0
    %3302 = vmatpush1.msra.mxu0 0.0
    %3303 = vmatprep.subr.mxu0 0.0
    %3304 = vmatpush1.msra.mxu0 0.0
    %3305 = vmatprep.subr.mxu0 0.0
    %3306 = vmatpush1.msra.mxu0 0.0
    %3307 = vmatprep.subr.mxu0 0.0
    %3308 = vmatpush1.msra.mxu0 0.0
    %3309 = vmatprep.subr.mxu0 0.0
    %3310 = vmatpush1.msra.mxu0 0.0
    %3311 = vmatprep.subr.mxu0 0.0
    %3312 = vmatpush1.msra.mxu0 0.0
    %3313 = vmatprep.subr.mxu0 0.0
    %3314 = vmatpush1.msra.mxu0 0.0
    %3315 = vmatprep.subr.mxu0 0.0
    %3316 = vmatpush1.msra.mxu0 0.0
    %3317 = vmatprep.subr.mxu0 0.0
    %3318 = vmatpush1.msra.mxu0 0.0
    %3319 = vmatprep.subr.mxu0 0.0
    %3320 = vmatpush1.msra.mxu0 0.0
    %3321 = vmatprep.subr.mxu0 0.0
    %3322 = vmatpush1.msra.mxu0 0.0
    %3323 = vmatprep.mubr.f32.mxu0 0.0
    %3324 = vmatmul.mubr.f32.gmra.mrb[0].mxu0 %v3249
    %v3325 = vpop.f32.mrb[0].mxu0
    %v3326 = vadd.f32 0.0, %v3325
    %v3327 = vpop.f32.mrb[0].mxu0
    %3328 = vmatprep.mubr.f32.mxu0 0.0
    %3329 = vmatmul.mubr.f32.gmra.mrb[0].mxu0 %v3252
    %v3330 = vpop.f32.mrb[0].mxu0
    %v3331 = vadd.f32 0.0, %v3330
    %v3332 = vpop.f32.mrb[0].mxu0
    %3333 = vmatprep.mubr.f32.mxu0 0.0
    %3334 = vmatmul.mubr.f32.gmra.mrb[0].mxu0 %v3255
    %v3335 = vpop.f32.mrb[0].mxu0
    %v3336 = vadd.f32 0.0, %v3335
    %v3337 = vpop.f32.mrb[0].mxu0
    %3338 = vdwg.mxu0
    %vm3341 = vcmask 1046528
    %v3342 = vrot.slane %v3089, 1
    %v3343 = vrot.slane %v3094, 1
    %v3344 = vsel %vm3341, %v3342, %v3343
    %v3345 = vrot.slane %v3099, 1
    %v3346 = vsel %vm3341, %v3343, %v3345
    %3347 = vrot.lane.b32.xlu0 %v3344, 96
    %v3348 = vpop.permute.xlu0 %3347
    %3349 = vrot.lane.b32.xlu0 %v3346, 96
    %v3350 = vpop.permute.xlu0 %3349
    %3351 = vrot.lane.b32.xlu0 %v3345, 96
    %v3352 = vpop.permute.xlu0 %3351
    %v3353 = vsel %vm1242, %v3344, 0
    %v3355 = vsel %vm1242, %v3346, 0
    %v3357 = vsel %vm1242, %v3345, 0
    %v3359 = vsel %vm1242, %v3348, 0
    %v3361 = vsel %vm1242, %v3350, 0
    %v3363 = vsel %vm1242, %v3352, 0
    %3365 = vmatprep.subr.mxu0 0.0
    %3366 = vmatpush1.xpose.msra.mxu0 %v3359
    %3367 = vmatprep.subr.mxu0 0.0
    %3368 = vmatpush1.xpose.msra.mxu0 %v3361
    %3369 = vmatprep.subr.mxu0 0.0
    %3370 = vmatpush1.xpose.msra.mxu0 %v3363
    %3371 = vmatprep.subr.mxu0 0.0
    %3372 = vmatpush1.xpose.msra.mxu0 0.0
    %3373 = vmatprep.subr.mxu0 0.0
    %3374 = vmatpush1.xpose.msra.mxu0 0.0
    %3375 = vmatprep.subr.mxu0 0.0
    %3376 = vmatpush1.xpose.msra.mxu0 0.0
    %3377 = vmatprep.subr.mxu0 0.0
    %3378 = vmatpush1.xpose.msra.mxu0 0.0
    %3379 = vmatprep.subr.mxu0 0.0
    %3380 = vmatpush1.xpose.msra.mxu0 0.0
    %3381 = vmatprep.subr.mxu0 0.0
    %3382 = vmatpush1.xpose.msra.mxu0 0.0
    %3383 = vmatprep.subr.mxu0 0.0
    %3384 = vmatpush1.xpose.msra.mxu0 0.0
    %3385 = vmatprep.subr.mxu0 0.0
    %3386 = vmatpush1.xpose.msra.mxu0 0.0
    %3387 = vmatprep.subr.mxu0 0.0
    %3388 = vmatpush1.xpose.msra.mxu0 0.0
    %3389 = vmatprep.subr.mxu0 0.0
    %3390 = vmatpush1.xpose.msra.mxu0 0.0
    %3391 = vmatprep.subr.mxu0 0.0
    %3392 = vmatpush1.xpose.msra.mxu0 0.0
    %3393 = vmatprep.subr.mxu0 0.0
    %3394 = vmatpush1.xpose.msra.mxu0 0.0
    %3395 = vmatprep.subr.mxu0 0.0
    %3396 = vmatpush1.xpose.msra.mxu0 0.0
    %3397 = vmatprep.subr.mxu0 0.0
    %3398 = vmatpush1.xpose.msra.mxu0 0.0
    %3399 = vmatprep.subr.mxu0 0.0
    %3400 = vmatpush1.xpose.msra.mxu0 0.0
    %3401 = vmatprep.subr.mxu0 0.0
    %3402 = vmatpush1.xpose.msra.mxu0 0.0
    %3403 = vmatprep.subr.mxu0 0.0
    %3404 = vmatpush1.xpose.msra.mxu0 0.0
    %3405 = vmatprep.subr.mxu0 0.0
    %3406 = vmatpush1.xpose.msra.mxu0 0.0
    %3407 = vmatprep.subr.mxu0 0.0
    %3408 = vmatpush1.xpose.msra.mxu0 0.0
    %3409 = vmatprep.subr.mxu0 0.0
    %3410 = vmatpush1.xpose.msra.mxu0 0.0
    %3411 = vmatprep.subr.mxu0 0.0
    %3412 = vmatpush1.xpose.msra.mxu0 0.0
    %3413 = vmatprep.subr.mxu0 0.0
    %3414 = vmatpush1.xpose.msra.mxu0 0.0
    %3415 = vmatprep.subr.mxu0 0.0
    %3416 = vmatpush1.xpose.msra.mxu0 0.0
    %3417 = vmatprep.subr.mxu0 0.0
    %3418 = vmatpush1.xpose.msra.mxu0 0.0
    %3419 = vmatprep.subr.mxu0 0.0
    %3420 = vmatpush1.xpose.msra.mxu0 0.0
    %3421 = vmatprep.subr.mxu0 0.0
    %3422 = vmatpush1.xpose.msra.mxu0 0.0
    %3423 = vmatprep.subr.mxu0 0.0
    %3424 = vmatpush1.xpose.msra.mxu0 0.0
    %3425 = vmatprep.subr.mxu0 0.0
    %3426 = vmatpush1.xpose.msra.mxu0 0.0
    %3427 = vmatprep.subr.mxu0 0.0
    %3428 = vmatpush1.xpose.msra.mxu0 0.0
    %3429 = vmatprep.mubr.f32.mxu0 0.0
    %3430 = vmatmul.mubr.f32.gmra.mrb[0].mxu0 %v3353
    %v3431 = vpop.f32.mrb[0].mxu0
    %v3432 = vadd.f32 0.0, %v3431
    %v3433 = vpop.f32.mrb[0].mxu0
    %3434 = vmatprep.mubr.f32.mxu0 0.0
    %3435 = vmatmul.mubr.f32.gmra.mrb[0].mxu0 %v3355
    %v3436 = vpop.f32.mrb[0].mxu0
    %v3437 = vadd.f32 0.0, %v3436
    %v3438 = vpop.f32.mrb[0].mxu0
    %3439 = vmatprep.mubr.f32.mxu0 0.0
    %3440 = vmatmul.mubr.f32.gmra.mrb[0].mxu0 %v3357
    %v3441 = vpop.f32.mrb[0].mxu0
    %v3442 = vadd.f32 0.0, %v3441
    %v3443 = vpop.f32.mrb[0].mxu0
    %3444 = vdwg.mxu0
    %v3445 = vmul.f32 %v3432, 0.17677669
    %v3446 = vmul.f32 %v3437, 0.17677669
    %v3447 = vmul.f32 %v3442, 0.17677669
    %v3448 = vsel %vm72, %v3445, -inf
    %3449 = vmax.xlane.f32.xlu0 %v3448
    %v3450 = vpop.xlane.xlu0 %3449
    %v3451 = vsel %vm72, %v3446, -inf
    %3452 = vmax.xlane.f32.xlu0 %v3451
    %v3453 = vpop.xlane.xlu0 %3452
    %v3454 = vsel %vm3212, %v3447, -inf
    %3455 = vmax.xlane.f32.xlu0 %v3454
    %v3456 = vpop.xlane.xlu0 %3455
    %v3457 = vsub.f32 %v3445, %v3450
    %v3458 = vsub.f32 %v3446, %v3453
    %v3459 = vsub.f32 %v3447, %v3456
    %v3460 = vmul.f32 %v3457, 1.442695
    %v3461 = vpow.pop %v3460
    %v3462 = vmul.f32 %v3458, 1.442695
    %v3463 = vpow.pop %v3462
    %v3464 = vmul.f32 %v3459, 1.442695
    %v3465 = vpow.pop %v3464
    %v3466 = vsel %vm72, %v3461, 0.0
    %3467 = vadd.xlane.f32.xlu0 %v3466
    %v3468 = vpop.xlane.xlu0 %3467
    %v3469 = vsel %vm72, %v3463, 0.0
    %3470 = vadd.xlane.f32.xlu0 %v3469
    %v3471 = vpop.xlane.xlu0 %3470
    %v3472 = vsel %vm3212, %v3465, 0.0
    %3473 = vadd.xlane.f32.xlu0 %v3472
    %v3474 = vpop.xlane.xlu0 %3473
    %v3475 = vrcp.pop %v3468
    %v3476 = vrcp.pop %v3471
    %v3477 = vrcp.pop %v3474
    %v3478 = vmul.f32 %v3461, %v3475
    %v3479 = vmul.f32 %v3463, %v3476
    %v3480 = vmul.f32 %v3465, %v3477
    %3481 = vrot.lane.b32.xlu0 %v3344, 64
    %v3482 = vpop.permute.xlu0 %3481
    %3483 = vrot.lane.b32.xlu0 %v3346, 64
    %v3484 = vpop.permute.xlu0 %3483
    %3485 = vrot.lane.b32.xlu0 %v3345, 64
    %v3486 = vpop.permute.xlu0 %3485
    %v3490 = vsel %vm72, %v3478, 0
    %v3493 = vsel %vm72, %v3479, 0
    %v3496 = vsel %vm72, %v3480, 0
    %v3498 = vsel %vm49, %v3486, 0
    %3500 = vmatprep.subr.mxu0 0.0
    %3501 = vmatpush1.msra.mxu0 %v3482
    %3502 = vmatprep.subr.mxu0 0.0
    %3503 = vmatpush1.msra.mxu0 %v3484
    %3504 = vmatprep.subr.mxu0 0.0
    %3505 = vmatpush1.msra.mxu0 %v3498
    %3506 = vmatprep.subr.mxu0 0.0
    %3507 = vmatpush1.msra.mxu0 0.0
    %3508 = vmatprep.subr.mxu0 0.0
    %3509 = vmatpush1.msra.mxu0 0.0
    %3510 = vmatprep.subr.mxu0 0.0
    %3511 = vmatpush1.msra.mxu0 0.0
    %3512 = vmatprep.subr.mxu0 0.0
    %3513 = vmatpush1.msra.mxu0 0.0
    %3514 = vmatprep.subr.mxu0 0.0
    %3515 = vmatpush1.msra.mxu0 0.0
    %3516 = vmatprep.subr.mxu0 0.0
    %3517 = vmatpush1.msra.mxu0 0.0
    %3518 = vmatprep.subr.mxu0 0.0
    %3519 = vmatpush1.msra.mxu0 0.0
    %3520 = vmatprep.subr.mxu0 0.0
    %3521 = vmatpush1.msra.mxu0 0.0
    %3522 = vmatprep.subr.mxu0 0.0
    %3523 = vmatpush1.msra.mxu0 0.0
    %3524 = vmatprep.subr.mxu0 0.0
    %3525 = vmatpush1.msra.mxu0 0.0
    %3526 = vmatprep.subr.mxu0 0.0
    %3527 = vmatpush1.msra.mxu0 0.0
    %3528 = vmatprep.subr.mxu0 0.0
    %3529 = vmatpush1.msra.mxu0 0.0
    %3530 = vmatprep.subr.mxu0 0.0
    %3531 = vmatpush1.msra.mxu0 0.0
    %3532 = vmatprep.subr.mxu0 0.0
    %3533 = vmatpush1.msra.mxu0 0.0
    %3534 = vmatprep.subr.mxu0 0.0
    %3535 = vmatpush1.msra.mxu0 0.0
    %3536 = vmatprep.subr.mxu0 0.0
    %3537 = vmatpush1.msra.mxu0 0.0
    %3538 = vmatprep.subr.mxu0 0.0
    %3539 = vmatpush1.msra.mxu0 0.0
    %3540 = vmatprep.subr.mxu0 0.0
    %3541 = vmatpush1.msra.mxu0 0.0
    %3542 = vmatprep.subr.mxu0 0.0
    %3543 = vmatpush1.msra.mxu0 0.0
    %3544 = vmatprep.subr.mxu0 0.0
    %3545 = vmatpush1.msra.mxu0 0.0
    %3546 = vmatprep.subr.mxu0 0.0
    %3547 = vmatpush1.msra.mxu0 0.0
    %3548 = vmatprep.subr.mxu0 0.0
    %3549 = vmatpush1.msra.mxu0 0.0
    %3550 = vmatprep.subr.mxu0 0.0
    %3551 = vmatpush1.msra.mxu0 0.0
    %3552 = vmatprep.subr.mxu0 0.0
    %3553 = vmatpush1.msra.mxu0 0.0
    %3554 = vmatprep.subr.mxu0 0.0
    %3555 = vmatpush1.msra.mxu0 0.0
    %3556 = vmatprep.subr.mxu0 0.0
    %3557 = vmatpush1.msra.mxu0 0.0
    %3558 = vmatprep.subr.mxu0 0.0
    %3559 = vmatpush1.msra.mxu0 0.0
    %3560 = vmatprep.subr.mxu0 0.0
    %3561 = vmatpush1.msra.mxu0 0.0
    %3562 = vmatprep.subr.mxu0 0.0
    %3563 = vmatpush1.msra.mxu0 0.0
    %3564 = vmatprep.mubr.f32.mxu0 0.0
    %3565 = vmatmul.mubr.f32.gmra.mrb[0].mxu0 %v3490
    %v3566 = vpop.f32.mrb[0].mxu0
    %v3567 = vadd.f32 0.0, %v3566
    %v3568 = vpop.f32.mrb[0].mxu0
    %3569 = vmatprep.mubr.f32.mxu0 0.0
    %3570 = vmatmul.mubr.f32.gmra.mrb[0].mxu0 %v3493
    %v3571 = vpop.f32.mrb[0].mxu0
    %v3572 = vadd.f32 0.0, %v3571
    %v3573 = vpop.f32.mrb[0].mxu0
    %3574 = vmatprep.mubr.f32.mxu0 0.0
    %3575 = vmatmul.mubr.f32.gmra.mrb[0].mxu0 %v3496
    %v3576 = vpop.f32.mrb[0].mxu0
    %v3577 = vadd.f32 0.0, %v3576
    %v3578 = vpop.f32.mrb[0].mxu0
    %3579 = vdwg.mxu0
    %v3583 = vrot.slane %v3567, 7
    %v3584 = vrot.slane %v3572, 7
    %v3585 = vsel %vm49, %v3583, %v3584
    %v3586 = vrot.slane %v3577, 7
    %v3587 = vsel %vm49, %v3584, %v3586
    %v3589 = vsel %vm49, %v3336, %v3583
    %v3590 = vld [vmem:[#allocation4 + $0x80] sm:$0xff]
    %v3591 = vld [vmem:[#allocation4 + $0x88] sm:$0xff]
    %v3592 = vld [vmem:[#allocation4 + $0x90] sm:$0xff]
    %v3593 = vld [vmem:[#allocation4 + $0x98] sm:$0xff]
    %v3595 = vsel %vm1242, %v3326, 0
    %v3598 = vsel %vm1242, %v3331, 0
    %v3601 = vsel %vm1242, %v3589, 0
    %v3603 = vsel %vm1242, %v3585, 0
    %v3605 = vsel %vm1242, %v3587, 0
    %3607 = vmatprep.subr.mxu0 0.0
    %3608 = vmatpush1.msra.mxu0 %v3590
    %3609 = vmatprep.subr.mxu0 0.0
    %3610 = vmatpush1.msra.mxu0 %v3591
    %3611 = vmatprep.subr.mxu0 0.0
    %3612 = vmatpush1.msra.mxu0 %v3592
    %3613 = vmatprep.subr.mxu0 0.0
    %3614 = vmatpush1.msra.mxu0 %v3593
    %3615 = vmatprep.subr.mxu0 0.0
    %3616 = vmatpush1.msra.mxu0 0.0
    %3617 = vmatprep.subr.mxu0 0.0
    %3618 = vmatpush1.msra.mxu0 0.0
    %3619 = vmatprep.subr.mxu0 0.0
    %3620 = vmatpush1.msra.mxu0 0.0
    %3621 = vmatprep.subr.mxu0 0.0
    %3622 = vmatpush1.msra.mxu0 0.0
    %3623 = vmatprep.subr.mxu0 0.0
    %3624 = vmatpush1.msra.mxu0 0.0
    %3625 = vmatprep.subr.mxu0 0.0
    %3626 = vmatpush1.msra.mxu0 0.0
    %3627 = vmatprep.subr.mxu0 0.0
    %3628 = vmatpush1.msra.mxu0 0.0
    %3629 = vmatprep.subr.mxu0 0.0
    %3630 = vmatpush1.msra.mxu0 0.0
    %3631 = vmatprep.subr.mxu0 0.0
    %3632 = vmatpush1.msra.mxu0 0.0
    %3633 = vmatprep.subr.mxu0 0.0
    %3634 = vmatpush1.msra.mxu0 0.0
    %3635 = vmatprep.subr.mxu0 0.0
    %3636 = vmatpush1.msra.mxu0 0.0
    %3637 = vmatprep.subr.mxu0 0.0
    %3638 = vmatpush1.msra.mxu0 0.0
    %3639 = vmatprep.subr.mxu0 0.0
    %3640 = vmatpush1.msra.mxu0 0.0
    %3641 = vmatprep.subr.mxu0 0.0
    %3642 = vmatpush1.msra.mxu0 0.0
    %3643 = vmatprep.subr.mxu0 0.0
    %3644 = vmatpush1.msra.mxu0 0.0
    %3645 = vmatprep.subr.mxu0 0.0
    %3646 = vmatpush1.msra.mxu0 0.0
    %3647 = vmatprep.subr.mxu0 0.0
    %3648 = vmatpush1.msra.mxu0 0.0
    %3649 = vmatprep.subr.mxu0 0.0
    %3650 = vmatpush1.msra.mxu0 0.0
    %3651 = vmatprep.subr.mxu0 0.0
    %3652 = vmatpush1.msra.mxu0 0.0
    %3653 = vmatprep.subr.mxu0 0.0
    %3654 = vmatpush1.msra.mxu0 0.0
    %3655 = vmatprep.subr.mxu0 0.0
    %3656 = vmatpush1.msra.mxu0 0.0
    %3657 = vmatprep.subr.mxu0 0.0
    %3658 = vmatpush1.msra.mxu0 0.0
    %3659 = vmatprep.subr.mxu0 0.0
    %3660 = vmatpush1.msra.mxu0 0.0
    %3661 = vmatprep.subr.mxu0 0.0
    %3662 = vmatpush1.msra.mxu0 0.0
    %3663 = vmatprep.subr.mxu0 0.0
    %3664 = vmatpush1.msra.mxu0 0.0
    %3665 = vmatprep.subr.mxu0 0.0
    %3666 = vmatpush1.msra.mxu0 0.0
    %3667 = vmatprep.subr.mxu0 0.0
    %3668 = vmatpush1.msra.mxu0 0.0
    %3669 = vmatprep.subr.mxu0 0.0
    %3670 = vmatpush1.msra.mxu0 0.0
    %3671 = vmatprep.mubr.f32.mxu0 0.0
    %3672 = vmatmul.mubr.f32.gmra.mrb[0].mxu0 %v3595
    %v3673 = vpop.f32.mrb[0].mxu0
    %v3674 = vadd.f32 0.0, %v3673
    %v3675 = vpop.f32.mrb[0].mxu0
    %3676 = vmatprep.mubr.f32.mxu0 0.0
    %3677 = vmatmul.mubr.f32.gmra.mrb[0].mxu0 %v3598
    %v3678 = vpop.f32.mrb[0].mxu0
    %v3679 = vadd.f32 0.0, %v3678
    %v3680 = vpop.f32.mrb[0].mxu0
    %3681 = vmatprep.mubr.f32.mxu0 0.0
    %3682 = vmatmul.mubr.f32.gmra.mrb[0].mxu0 %v3601
    %v3683 = vpop.f32.mrb[0].mxu0
    %v3684 = vadd.f32 0.0, %v3683
    %v3685 = vpop.f32.mrb[0].mxu0
    %3686 = vmatprep.mubr.f32.mxu0 0.0
    %3687 = vmatmul.mubr.f32.gmra.mrb[0].mxu0 %v3603
    %v3688 = vpop.f32.mrb[0].mxu0
    %v3689 = vadd.f32 0.0, %v3688
    %v3690 = vpop.f32.mrb[0].mxu0
    %3691 = vmatprep.mubr.f32.mxu0 0.0
    %3692 = vmatmul.mubr.f32.gmra.mrb[0].mxu0 %v3605
    %v3693 = vpop.f32.mrb[0].mxu0
    %v3694 = vadd.f32 0.0, %v3693
    %v3695 = vpop.f32.mrb[0].mxu0
    %3696 = vdwg.mxu0
    %v3697 = vadd.f32 %v2878, %v3674
    %v3698 = vadd.f32 %v2883, %v3679
    %v3699 = vadd.f32 %v2888, %v3684
    %v3700 = vadd.f32 %v2893, %v3689
    %v3701 = vadd.f32 %v2898, %v3694
    %v3702 = vld [vmem:[#allocation4 + $0xa0] sm:$0x1]
    %v3703 = vlaneseq
    %v3704 = vshrl.u32 %v3703, 7
    %v3705 = vsub.s32 0, %v3704
    %v3706 = vrot.slane %v3702, %v3705
    %v3707 = vadd.f32 %v3697, %v3706
    %v3708 = vadd.f32 %v3698, %v3706
    %v3709 = vadd.f32 %v3699, %v3706
    %v3710 = vadd.f32 %v3700, %v3706
    %v3711 = vadd.f32 %v3701, %v3706
    %v3712 = vsel %vm1242, %v3707, 0.0
    %3713 = vadd.xlane.f32.xlu0 %v3712
    %v3714 = vpop.xlane.xlu0 %3713
    %v3715 = vsel %vm1242, %v3708, 0.0
    %3716 = vadd.xlane.f32.xlu0 %v3715
    %v3717 = vpop.xlane.xlu0 %3716
    %v3718 = vsel %vm1242, %v3709, 0.0
    %3719 = vadd.xlane.f32.xlu0 %v3718
    %v3720 = vpop.xlane.xlu0 %3719
    %v3721 = vsel %vm1242, %v3710, 0.0
    %3722 = vadd.xlane.f32.xlu0 %v3721
    %v3723 = vpop.xlane.xlu0 %3722
    %v3724 = vsel %vm2913, %v3711, 0.0
    %3725 = vadd.xlane.f32.xlu0 %v3724
    %v3726 = vpop.xlane.xlu0 %3725
    %v3727 = vmul.f32 %v3714, %v2917
    %v3728 = vmul.f32 %v3717, %v2917
    %v3729 = vmul.f32 %v3720, %v2917
    %v3730 = vmul.f32 %v3723, %v2917
    %v3731 = vmul.f32 %v3726, %v2917
    %v3732 = vsub.f32 %v3707, %v3727
    %v3733 = vsub.f32 %v3708, %v3728
    %v3734 = vsub.f32 %v3709, %v3729
    %v3735 = vsub.f32 %v3710, %v3730
    %v3736 = vsub.f32 %v3711, %v3731
    %v3737 = vmul.f32 %v3732, %v3732
    %v3738 = vmul.f32 %v3733, %v3733
    %v3739 = vmul.f32 %v3734, %v3734
    %v3740 = vmul.f32 %v3735, %v3735
    %v3741 = vmul.f32 %v3736, %v3736
    %v3742 = vsel %vm1242, %v3737, 0.0
    %3743 = vadd.xlane.f32.xlu0 %v3742
    %v3744 = vpop.xlane.xlu0 %3743
    %v3745 = vsel %vm1242, %v3738, 0.0
    %3746 = vadd.xlane.f32.xlu0 %v3745
    %v3747 = vpop.xlane.xlu0 %3746
    %v3748 = vsel %vm1242, %v3739, 0.0
    %3749 = vadd.xlane.f32.xlu0 %v3748
    %v3750 = vpop.xlane.xlu0 %3749
    %v3751 = vsel %vm1242, %v3740, 0.0
    %3752 = vadd.xlane.f32.xlu0 %v3751
    %v3753 = vpop.xlane.xlu0 %3752
    %v3754 = vsel %vm2913, %v3741, 0.0
    %3755 = vadd.xlane.f32.xlu0 %v3754
    %v3756 = vpop.xlane.xlu0 %3755
    %v3757 = vmul.f32 %v3744, %v2917
    %v3758 = vmul.f32 %v3747, %v2917
    %v3759 = vmul.f32 %v3750, %v2917
    %v3760 = vmul.f32 %v3753, %v2917
    %v3761 = vmul.f32 %v3756, %v2917
    %v3762 = vadd.f32 %v3757, 1e-05
    %v3763 = vadd.f32 %v3758, 1e-05
    %v3764 = vadd.f32 %v3759, 1e-05
    %v3765 = vadd.f32 %v3760, 1e-05
    %v3766 = vadd.f32 %v3761, 1e-05
    %v3767 = vrsqrt.pop %v3762
    %v3768 = vrsqrt.pop %v3763
    %v3769 = vrsqrt.pop %v3764
    %v3770 = vrsqrt.pop %v3765
    %v3771 = vrsqrt.pop %v3766
    %v3772 = vmul.f32 %v3732, %v3767
    %v3773 = vmul.f32 %v3733, %v3768
    %v3774 = vmul.f32 %v3734, %v3769
    %v3775 = vmul.f32 %v3735, %v3770
    %v3776 = vmul.f32 %v3736, %v3771
    %v3777 = vld [vmem:[#allocation4 + $0xa8] sm:$0x1]
    %v3778 = vlaneseq
    %v3779 = vshrl.u32 %v3778, 7
    %v3780 = vsub.s32 0, %v3779
    %v3781 = vrot.slane %v3777, %v3780
    %v3782 = vmul.f32 %v3772, %v3781
    %v3783 = vmul.f32 %v3773, %v3781
    %v3784 = vmul.f32 %v3774, %v3781
    %v3785 = vmul.f32 %v3775, %v3781
    %v3786 = vmul.f32 %v3776, %v3781
    %v3787 = vld [vmem:[#allocation4 + $0xb0] sm:$0x1]
    %v3788 = vlaneseq
    %v3789 = vshrl.u32 %v3788, 7
    %v3790 = vsub.s32 0, %v3789
    %v3791 = vrot.slane %v3787, %v3790
    %v3792 = vadd.f32 %v3782, %v3791
    %v3793 = vadd.f32 %v3783, %v3791
    %v3794 = vadd.f32 %v3784, %v3791
    %v3795 = vadd.f32 %v3785, %v3791
    %v3796 = vadd.f32 %v3786, %v3791
    %v3797 = vld [vmem:[#allocation4 + $0xb8] sm:$0xff]
    %v3798 = vld [vmem:[#allocation4 + $0xc0] sm:$0xff]
    %v3799 = vld [vmem:[#allocation4 + $0xc8] sm:$0xff]
    %v3800 = vld [vmem:[#allocation4 + $0xd0] sm:$0xff]
    %v3801 = vld [vmem:[#allocation4 + $0xd8] sm:$0x1]
    %v3802 = vlaneseq
    %v3803 = vshrl.u32 %v3802, 7
    %v3804 = vsub.s32 0, %v3803
    %v3805 = vrot.slane %v3801, %v3804
    %v3807 = vsel %vm1242, %v3792, 0
    %v3810 = vsel %vm1242, %v3793, 0
    %v3813 = vsel %vm1242, %v3794, 0
    %v3816 = vsel %vm1242, %v3795, 0
    %v3819 = vsel %vm1242, %v3796, 0
    %3821 = vmatprep.subr.mxu0 0.0
    %3822 = vmatpush1.msra.mxu0 %v3797
    %3823 = vmatprep.subr.mxu0 0.0
    %3824 = vmatpush1.msra.mxu0 %v3798
    %3825 = vmatprep.subr.mxu0 0.0
    %3826 = vmatpush1.msra.mxu0 %v3799
    %3827 = vmatprep.subr.mxu0 0.0
    %3828 = vmatpush1.msra.mxu0 %v3800
    %3829 = vmatprep.subr.mxu0 0.0
    %3830 = vmatpush1.msra.mxu0 0.0
    %3831 = vmatprep.subr.mxu0 0.0
    %3832 = vmatpush1.msra.mxu0 0.0
    %3833 = vmatprep.subr.mxu0 0.0
    %3834 = vmatpush1.msra.mxu0 0.0
    %3835 = vmatprep.subr.mxu0 0.0
    %3836 = vmatpush1.msra.mxu0 0.0
    %3837 = vmatprep.subr.mxu0 0.0
    %3838 = vmatpush1.msra.mxu0 0.0
    %3839 = vmatprep.subr.mxu0 0.0
    %3840 = vmatpush1.msra.mxu0 0.0
    %3841 = vmatprep.subr.mxu0 0.0
    %3842 = vmatpush1.msra.mxu0 0.0
    %3843 = vmatprep.subr.mxu0 0.0
    %3844 = vmatpush1.msra.mxu0 0.0
    %3845 = vmatprep.subr.mxu0 0.0
    %3846 = vmatpush1.msra.mxu0 0.0
    %3847 = vmatprep.subr.mxu0 0.0
    %3848 = vmatpush1.msra.mxu0 0.0
    %3849 = vmatprep.subr.mxu0 0.0
    %3850 = vmatpush1.msra.mxu0 0.0
    %3851 = vmatprep.subr.mxu0 0.0
    %3852 = vmatpush1.msra.mxu0 0.0
    %3853 = vmatprep.subr.mxu0 0.0
    %3854 = vmatpush1.msra.mxu0 0.0
    %3855 = vmatprep.subr.mxu0 0.0
    %3856 = vmatpush1.msra.mxu0 0.0
    %3857 = vmatprep.subr.mxu0 0.0
    %3858 = vmatpush1.msra.mxu0 0.0
    %3859 = vmatprep.subr.mxu0 0.0
    %3860 = vmatpush1.msra.mxu0 0.0
    %3861 = vmatprep.subr.mxu0 0.0
    %3862 = vmatpush1.msra.mxu0 0.0
    %3863 = vmatprep.subr.mxu0 0.0
    %3864 = vmatpush1.msra.mxu0 0.0
    %3865 = vmatprep.subr.mxu0 0.0
    %3866 = vmatpush1.msra.mxu0 0.0
    %3867 = vmatprep.subr.mxu0 0.0
    %3868 = vmatpush1.msra.mxu0 0.0
    %3869 = vmatprep.subr.mxu0 0.0
    %3870 = vmatpush1.msra.mxu0 0.0
    %3871 = vmatprep.subr.mxu0 0.0
    %3872 = vmatpush1.msra.mxu0 0.0
    %3873 = vmatprep.subr.mxu0 0.0
    %3874 = vmatpush1.msra.mxu0 0.0
    %3875 = vmatprep.subr.mxu0 0.0
    %3876 = vmatpush1.msra.mxu0 0.0
    %3877 = vmatprep.subr.mxu0 0.0
    %3878 = vmatpush1.msra.mxu0 0.0
    %3879 = vmatprep.subr.mxu0 0.0
    %3880 = vmatpush1.msra.mxu0 0.0
    %3881 = vmatprep.subr.mxu0 0.0
    %3882 = vmatpush1.msra.mxu0 0.0
    %3883 = vmatprep.subr.mxu0 0.0
    %3884 = vmatpush1.msra.mxu0 0.0
    %3885 = vmatprep.mubr.f32.mxu0 0.0
    %3886 = vmatmul.mubr.f32.gmra.mrb[0].mxu0 %v3807
    %v3887 = vpop.f32.mrb[0].mxu0
    %v3888 = vadd.f32 %v3805, %v3887
    %v3889 = vpop.f32.mrb[0].mxu0
    %3890 = vmatprep.mubr.f32.mxu0 0.0
    %3891 = vmatmul.mubr.f32.gmra.mrb[0].mxu0 %v3810
    %v3892 = vpop.f32.mrb[0].mxu0
    %v3893 = vadd.f32 %v3805, %v3892
    %v3894 = vpop.f32.mrb[0].mxu0
    %3895 = vmatprep.mubr.f32.mxu0 0.0
    %3896 = vmatmul.mubr.f32.gmra.mrb[0].mxu0 %v3813
    %v3897 = vpop.f32.mrb[0].mxu0
    %v3898 = vadd.f32 %v3805, %v3897
    %v3899 = vpop.f32.mrb[0].mxu0
    %3900 = vmatprep.mubr.f32.mxu0 0.0
    %3901 = vmatmul.mubr.f32.gmra.mrb[0].mxu0 %v3816
    %v3902 = vpop.f32.mrb[0].mxu0
    %v3903 = vadd.f32 %v3805, %v3902
    %v3904 = vpop.f32.mrb[0].mxu0
    %3905 = vmatprep.mubr.f32.mxu0 0.0
    %3906 = vmatmul.mubr.f32.gmra.mrb[0].mxu0 %v3819
    %v3907 = vpop.f32.mrb[0].mxu0
    %v3908 = vadd.f32 %v3805, %v3907
    %v3909 = vpop.f32.mrb[0].mxu0
    %3910 = vdwg.mxu0
    %v3911 = vxor.u32 %v3888, 2147483648
    %v3912 = vxor.u32 %v3893, 2147483648
    %v3913 = vxor.u32 %v3898, 2147483648
    %v3914 = vxor.u32 %v3903, 2147483648
    %v3915 = vxor.u32 %v3908, 2147483648
    %v3916 = vmul.f32 %v3911, 1.442695
    %v3917 = vpow.pop %v3916
    %v3918 = vmul.f32 %v3912, 1.442695
    %v3919 = vpow.pop %v3918
    %v3920 = vmul.f32 %v3913, 1.442695
    %v3921 = vpow.pop %v3920
    %v3922 = vmul.f32 %v3914, 1.442695
    %v3923 = vpow.pop %v3922
    %v3924 = vmul.f32 %v3915, 1.442695
    %v3925 = vpow.pop %v3924
    %v3926 = vadd.f32 %v3917, 1.0
    %v3927 = vadd.f32 %v3919, 1.0
    %v3928 = vadd.f32 %v3921, 1.0
    %v3929 = vadd.f32 %v3923, 1.0
    %v3930 = vadd.f32 %v3925, 1.0
    %v3931 = vrcp.pop %v3926
    %v3932 = vmul.f32 1.0, %v3931
    %v3933 = vrcp.pop %v3927
    %v3934 = vmul.f32 1.0, %v3933
    %v3935 = vrcp.pop %v3928
    %v3936 = vmul.f32 1.0, %v3935
    %v3937 = vrcp.pop %v3929
    %v3938 = vmul.f32 1.0, %v3937
    %v3939 = vrcp.pop %v3930
    %v3940 = vmul.f32 1.0, %v3939
    %v3941 = vmul.f32 %v3888, %v3932
    %v3942 = vmul.f32 %v3893, %v3934
    %v3943 = vmul.f32 %v3898, %v3936
    %v3944 = vmul.f32 %v3903, %v3938
    %v3945 = vmul.f32 %v3908, %v3940
    %v3946 = vld [vmem:[#allocation4 + $0xe0] sm:$0xff]
    %v3947 = vld [vmem:[#allocation4 + $0xe8] sm:$0xff]
    %v3948 = vld [vmem:[#allocation4 + $0xf0] sm:$0xff]
    %v3949 = vld [vmem:[#allocation4 + $0xf8] sm:$0xff]
    %v3950 = vld [vmem:[#allocation4 + $0x100] sm:$0xff]
    %v3951 = vld [vmem:[#allocation4 + $0x108] sm:$0xff]
    %v3952 = vld [vmem:[#allocation4 + $0x110] sm:$0xff]
    %v3953 = vld [vmem:[#allocation4 + $0x118] sm:$0xff]
    %v3954 = vld [vmem:[#allocation4 + $0x120] sm:$0xff]
    %v3955 = vld [vmem:[#allocation4 + $0x128] sm:$0xff]
    %v3956 = vld [vmem:[#allocation4 + $0x130] sm:$0xff]
    %v3957 = vld [vmem:[#allocation4 + $0x138] sm:$0xff]
    %v3958 = vld [vmem:[#allocation4 + $0x140] sm:$0xff]
    %v3959 = vld [vmem:[#allocation4 + $0x148] sm:$0xff]
    %v3960 = vld [vmem:[#allocation4 + $0x150] sm:$0xff]
    %v3961 = vld [vmem:[#allocation4 + $0x158] sm:$0xff]
    %3962 = vmatprep.subr.mxu0 0.0
    %3963 = vmatpush1.msra.mxu0 %v3946
    %3964 = vmatprep.subr.mxu0 0.0
    %3965 = vmatpush1.msra.mxu0 %v3947
    %3966 = vmatprep.subr.mxu0 0.0
    %3967 = vmatpush1.msra.mxu0 %v3948
    %3968 = vmatprep.subr.mxu0 0.0
    %3969 = vmatpush1.msra.mxu0 %v3949
    %3970 = vmatprep.subr.mxu0 0.0
    %3971 = vmatpush1.msra.mxu0 %v3950
    %3972 = vmatprep.subr.mxu0 0.0
    %3973 = vmatpush1.msra.mxu0 %v3951
    %3974 = vmatprep.subr.mxu0 0.0
    %3975 = vmatpush1.msra.mxu0 %v3952
    %3976 = vmatprep.subr.mxu0 0.0
    %3977 = vmatpush1.msra.mxu0 %v3953
    %3978 = vmatprep.subr.mxu0 0.0
    %3979 = vmatpush1.msra.mxu0 %v3954
    %3980 = vmatprep.subr.mxu0 0.0
    %3981 = vmatpush1.msra.mxu0 %v3955
    %3982 = vmatprep.subr.mxu0 0.0
    %3983 = vmatpush1.msra.mxu0 %v3956
    %3984 = vmatprep.subr.mxu0 0.0
    %3985 = vmatpush1.msra.mxu0 %v3957
    %3986 = vmatprep.subr.mxu0 0.0
    %3987 = vmatpush1.msra.mxu0 %v3958
    %3988 = vmatprep.subr.mxu0 0.0
    %3989 = vmatpush1.msra.mxu0 %v3959
    %3990 = vmatprep.subr.mxu0 0.0
    %3991 = vmatpush1.msra.mxu0 %v3960
    %3992 = vmatprep.subr.mxu0 0.0
    %3993 = vmatpush1.msra.mxu0 %v3961
    %3994 = vmatprep.subr.mxu0 0.0
    %3995 = vmatpush1.msra.mxu0 0.0
    %3996 = vmatprep.subr.mxu0 0.0
    %3997 = vmatpush1.msra.mxu0 0.0
    %3998 = vmatprep.subr.mxu0 0.0
    %3999 = vmatpush1.msra.mxu0 0.0
    %4000 = vmatprep.subr.mxu0 0.0
    %4001 = vmatpush1.msra.mxu0 0.0
    %4002 = vmatprep.subr.mxu0 0.0
    %4003 = vmatpush1.msra.mxu0 0.0
    %4004 = vmatprep.subr.mxu0 0.0
    %4005 = vmatpush1.msra.mxu0 0.0
    %4006 = vmatprep.subr.mxu0 0.0
    %4007 = vmatpush1.msra.mxu0 0.0
    %4008 = vmatprep.subr.mxu0 0.0
    %4009 = vmatpush1.msra.mxu0 0.0
    %4010 = vmatprep.subr.mxu0 0.0
    %4011 = vmatpush1.msra.mxu0 0.0
    %4012 = vmatprep.subr.mxu0 0.0
    %4013 = vmatpush1.msra.mxu0 0.0
    %4014 = vmatprep.subr.mxu0 0.0
    %4015 = vmatpush1.msra.mxu0 0.0
    %4016 = vmatprep.subr.mxu0 0.0
    %4017 = vmatpush1.msra.mxu0 0.0
    %4018 = vmatprep.subr.mxu0 0.0
    %4019 = vmatpush1.msra.mxu0 0.0
    %4020 = vmatprep.subr.mxu0 0.0
    %4021 = vmatpush1.msra.mxu0 0.0
    %4022 = vmatprep.subr.mxu0 0.0
    %4023 = vmatpush1.msra.mxu0 0.0
    %4024 = vmatprep.subr.mxu0 0.0
    %4025 = vmatpush1.msra.mxu0 0.0
    %4026 = vmatprep.mubr.f32.mxu0 0.0
    %4027 = vmatmul.mubr.f32.gmra.mrb[0].mxu0 %v3941
    %v4028 = vpop.f32.mrb[0].mxu0
    %v4029 = vadd.f32 0.0, %v4028
    %v4030 = vpop.f32.mrb[0].mxu0
    %4031 = vmatprep.mubr.f32.mxu0 0.0
    %4032 = vmatmul.mubr.f32.gmra.mrb[0].mxu0 %v3942
    %v4033 = vpop.f32.mrb[0].mxu0
    %v4034 = vadd.f32 0.0, %v4033
    %v4035 = vpop.f32.mrb[0].mxu0
    %4036 = vmatprep.mubr.f32.mxu0 0.0
    %4037 = vmatmul.mubr.f32.gmra.mrb[0].mxu0 %v3943
    %v4038 = vpop.f32.mrb[0].mxu0
    %v4039 = vadd.f32 0.0, %v4038
    %v4040 = vpop.f32.mrb[0].mxu0
    %4041 = vmatprep.mubr.f32.mxu0 0.0
    %4042 = vmatmul.mubr.f32.gmra.mrb[0].mxu0 %v3944
    %v4043 = vpop.f32.mrb[0].mxu0
    %v4044 = vadd.f32 0.0, %v4043
    %v4045 = vpop.f32.mrb[0].mxu0
    %4046 = vmatprep.mubr.f32.mxu0 0.0
    %4047 = vmatmul.mubr.f32.gmra.mrb[0].mxu0 %v3945
    %v4048 = vpop.f32.mrb[0].mxu0
    %v4049 = vadd.f32 0.0, %v4048
    %v4050 = vpop.f32.mrb[0].mxu0
    %4051 = vdwg.mxu0
    %v4052 = vadd.f32 %v3707, %v4029
    %v4053 = vadd.f32 %v3708, %v4034
    %v4054 = vadd.f32 %v3709, %v4039
    %v4055 = vadd.f32 %v3710, %v4044
    %v4056 = vadd.f32 %v3711, %v4049
    %v4057 = vld [vmem:[#allocation4 + $0x160] sm:$0x1]
    %v4058 = vlaneseq
    %v4059 = vshrl.u32 %v4058, 7
    %v4060 = vsub.s32 0, %v4059
    %v4061 = vrot.slane %v4057, %v4060
    %v4062 = vadd.f32 %v4052, %v4061
    %v4063 = vadd.f32 %v4053, %v4061
    %v4064 = vadd.f32 %v4054, %v4061
    %v4065 = vadd.f32 %v4055, %v4061
    %v4066 = vadd.f32 %v4056, %v4061
    %v4067 = vsel %vm1242, %v4062, 0.0
    %4068 = vadd.xlane.f32.xlu0 %v4067
    %v4069 = vpop.xlane.xlu0 %4068
    %v4070 = vsel %vm1242, %v4063, 0.0
    %4071 = vadd.xlane.f32.xlu0 %v4070
    %v4072 = vpop.xlane.xlu0 %4071
    %v4073 = vsel %vm1242, %v4064, 0.0
    %4074 = vadd.xlane.f32.xlu0 %v4073
    %v4075 = vpop.xlane.xlu0 %4074
    %v4076 = vsel %vm1242, %v4065, 0.0
    %4077 = vadd.xlane.f32.xlu0 %v4076
    %v4078 = vpop.xlane.xlu0 %4077
    %v4079 = vsel %vm2913, %v4066, 0.0
    %4080 = vadd.xlane.f32.xlu0 %v4079
    %v4081 = vpop.xlane.xlu0 %4080
    %v4082 = vmul.f32 %v4069, %v2917
    %v4083 = vmul.f32 %v4072, %v2917
    %v4084 = vmul.f32 %v4075, %v2917
    %v4085 = vmul.f32 %v4078, %v2917
    %v4086 = vmul.f32 %v4081, %v2917
    %v4087 = vsub.f32 %v4062, %v4082
    %v4088 = vsub.f32 %v4063, %v4083
    %v4089 = vsub.f32 %v4064, %v4084
    %v4090 = vsub.f32 %v4065, %v4085
    %v4091 = vsub.f32 %v4066, %v4086
    %v4092 = vmul.f32 %v4087, %v4087
    %v4093 = vmul.f32 %v4088, %v4088
    %v4094 = vmul.f32 %v4089, %v4089
    %v4095 = vmul.f32 %v4090, %v4090
    %v4096 = vmul.f32 %v4091, %v4091
    %v4097 = vsel %vm1242, %v4092, 0.0
    %4098 = vadd.xlane.f32.xlu0 %v4097
    %v4099 = vpop.xlane.xlu0 %4098
    %v4100 = vsel %vm1242, %v4093, 0.0
    %4101 = vadd.xlane.f32.xlu0 %v4100
    %v4102 = vpop.xlane.xlu0 %4101
    %v4103 = vsel %vm1242, %v4094, 0.0
    %4104 = vadd.xlane.f32.xlu0 %v4103
    %v4105 = vpop.xlane.xlu0 %4104
    %v4106 = vsel %vm1242, %v4095, 0.0
    %4107 = vadd.xlane.f32.xlu0 %v4106
    %v4108 = vpop.xlane.xlu0 %4107
    %v4109 = vsel %vm2913, %v4096, 0.0
    %4110 = vadd.xlane.f32.xlu0 %v4109
    %v4111 = vpop.xlane.xlu0 %4110
    %v4112 = vmul.f32 %v4099, %v2917
    %v4113 = vmul.f32 %v4102, %v2917
    %v4114 = vmul.f32 %v4105, %v2917
    %v4115 = vmul.f32 %v4108, %v2917
    %v4116 = vmul.f32 %v4111, %v2917
    %v4117 = vadd.f32 %v4112, 1e-05
    %v4118 = vadd.f32 %v4113, 1e-05
    %v4119 = vadd.f32 %v4114, 1e-05
    %v4120 = vadd.f32 %v4115, 1e-05
    %v4121 = vadd.f32 %v4116, 1e-05
    %v4122 = vrsqrt.pop %v4117
    %v4123 = vrsqrt.pop %v4118
    %v4124 = vrsqrt.pop %v4119
    %v4125 = vrsqrt.pop %v4120
    %v4126 = vrsqrt.pop %v4121
    %v4127 = vmul.f32 %v4087, %v4122
    %v4128 = vmul.f32 %v4088, %v4123
    %v4129 = vmul.f32 %v4089, %v4124
    %v4130 = vmul.f32 %v4090, %v4125
    %v4131 = vmul.f32 %v4091, %v4126
    %v4132 = vld [vmem:[#allocation4 + $0x168] sm:$0x1]
    %v4133 = vlaneseq
    %v4134 = vshrl.u32 %v4133, 7
    %v4135 = vsub.s32 0, %v4134
    %v4136 = vrot.slane %v4132, %v4135
    %v4137 = vmul.f32 %v4127, %v4136
    %v4138 = vmul.f32 %v4128, %v4136
    %v4139 = vmul.f32 %v4129, %v4136
    %v4140 = vmul.f32 %v4130, %v4136
    %v4141 = vmul.f32 %v4131, %v4136
    %v4142 = vld [vmem:[#allocation4 + $0x170] sm:$0x1]
    %v4143 = vlaneseq
    %v4144 = vshrl.u32 %v4143, 7
    %v4145 = vsub.s32 0, %v4144
    %v4146 = vrot.slane %v4142, %v4145
    %v4147 = vadd.f32 %v4137, %v4146
    %v4148 = vadd.f32 %v4138, %v4146
    %v4149 = vadd.f32 %v4139, %v4146
    %v4150 = vadd.f32 %v4140, %v4146
    %v4151 = vadd.f32 %v4141, %v4146
    %v4152 = vld [vmem:[#allocation4 + $0x178] sm:$0xff]
    %v4153 = vld [vmem:[#allocation4 + $0x180] sm:$0xff]
    %v4154 = vld [vmem:[#allocation4 + $0x188] sm:$0xff]
    %v4155 = vld [vmem:[#allocation4 + $0x190] sm:$0xff]
    %v4156 = vld [vmem:[#allocation4 + $0x198] sm:$0x1]
    %v4157 = vlaneseq
    %v4158 = vshrl.u32 %v4157, 7
    %v4159 = vsub.s32 0, %v4158
    %v4160 = vrot.slane %v4156, %v4159
    %v4162 = vsel %vm1242, %v4147, 0
    %v4165 = vsel %vm1242, %v4148, 0
    %v4168 = vsel %vm1242, %v4149, 0
    %v4171 = vsel %vm1242, %v4150, 0
    %v4174 = vsel %vm1242, %v4151, 0
    %4176 = vmatprep.subr.mxu0 0.0
    %4177 = vmatpush1.msra.mxu0 %v4152
    %4178 = vmatprep.subr.mxu0 0.0
    %4179 = vmatpush1.msra.mxu0 %v4153
    %4180 = vmatprep.subr.mxu0 0.0
    %4181 = vmatpush1.msra.mxu0 %v4154
    %4182 = vmatprep.subr.mxu0 0.0
    %4183 = vmatpush1.msra.mxu0 %v4155
    %4184 = vmatprep.subr.mxu0 0.0
    %4185 = vmatpush1.msra.mxu0 0.0
    %4186 = vmatprep.subr.mxu0 0.0
    %4187 = vmatpush1.msra.mxu0 0.0
    %4188 = vmatprep.subr.mxu0 0.0
    %4189 = vmatpush1.msra.mxu0 0.0
    %4190 = vmatprep.subr.mxu0 0.0
    %4191 = vmatpush1.msra.mxu0 0.0
    %4192 = vmatprep.subr.mxu0 0.0
    %4193 = vmatpush1.msra.mxu0 0.0
    %4194 = vmatprep.subr.mxu0 0.0
    %4195 = vmatpush1.msra.mxu0 0.0
    %4196 = vmatprep.subr.mxu0 0.0
    %4197 = vmatpush1.msra.mxu0 0.0
    %4198 = vmatprep.subr.mxu0 0.0
    %4199 = vmatpush1.msra.mxu0 0.0
    %4200 = vmatprep.subr.mxu0 0.0
    %4201 = vmatpush1.msra.mxu0 0.0
    %4202 = vmatprep.subr.mxu0 0.0
    %4203 = vmatpush1.msra.mxu0 0.0
    %4204 = vmatprep.subr.mxu0 0.0
    %4205 = vmatpush1.msra.mxu0 0.0
    %4206 = vmatprep.subr.mxu0 0.0
    %4207 = vmatpush1.msra.mxu0 0.0
    %4208 = vmatprep.subr.mxu0 0.0
    %4209 = vmatpush1.msra.mxu0 0.0
    %4210 = vmatprep.subr.mxu0 0.0
    %4211 = vmatpush1.msra.mxu0 0.0
    %4212 = vmatprep.subr.mxu0 0.0
    %4213 = vmatpush1.msra.mxu0 0.0
    %4214 = vmatprep.subr.mxu0 0.0
    %4215 = vmatpush1.msra.mxu0 0.0
    %4216 = vmatprep.subr.mxu0 0.0
    %4217 = vmatpush1.msra.mxu0 0.0
    %4218 = vmatprep.subr.mxu0 0.0
    %4219 = vmatpush1.msra.mxu0 0.0
    %4220 = vmatprep.subr.mxu0 0.0
    %4221 = vmatpush1.msra.mxu0 0.0
    %4222 = vmatprep.subr.mxu0 0.0
    %4223 = vmatpush1.msra.mxu0 0.0
    %4224 = vmatprep.subr.mxu0 0.0
    %4225 = vmatpush1.msra.mxu0 0.0
    %4226 = vmatprep.subr.mxu0 0.0
    %4227 = vmatpush1.msra.mxu0 0.0
    %4228 = vmatprep.subr.mxu0 0.0
    %4229 = vmatpush1.msra.mxu0 0.0
    %4230 = vmatprep.subr.mxu0 0.0
    %4231 = vmatpush1.msra.mxu0 0.0
    %4232 = vmatprep.subr.mxu0 0.0
    %4233 = vmatpush1.msra.mxu0 0.0
    %4234 = vmatprep.subr.mxu0 0.0
    %4235 = vmatpush1.msra.mxu0 0.0
    %4236 = vmatprep.subr.mxu0 0.0
    %4237 = vmatpush1.msra.mxu0 0.0
    %4238 = vmatprep.subr.mxu0 0.0
    %4239 = vmatpush1.msra.mxu0 0.0
    %4240 = vmatprep.mubr.f32.mxu0 0.0
    %4241 = vmatmul.mubr.f32.gmra.mrb[0].mxu0 %v4162
    %v4242 = vpop.f32.mrb[0].mxu0
    %v4243 = vadd.f32 %v4160, %v4242
    %v4244 = vpop.f32.mrb[0].mxu0
    %4245 = vmatprep.mubr.f32.mxu0 0.0
    %4246 = vmatmul.mubr.f32.gmra.mrb[0].mxu0 %v4165
    %v4247 = vpop.f32.mrb[0].mxu0
    %v4248 = vadd.f32 %v4160, %v4247
    %v4249 = vpop.f32.mrb[0].mxu0
    %4250 = vmatprep.mubr.f32.mxu0 0.0
    %4251 = vmatmul.mubr.f32.gmra.mrb[0].mxu0 %v4168
    %v4252 = vpop.f32.mrb[0].mxu0
    %v4253 = vadd.f32 %v4160, %v4252
    %v4254 = vpop.f32.mrb[0].mxu0
    %4255 = vmatprep.mubr.f32.mxu0 0.0
    %4256 = vmatmul.mubr.f32.gmra.mrb[0].mxu0 %v4171
    %v4257 = vpop.f32.mrb[0].mxu0
    %v4258 = vadd.f32 %v4160, %v4257
    %v4259 = vpop.f32.mrb[0].mxu0
    %4260 = vmatprep.mubr.f32.mxu0 0.0
    %4261 = vmatmul.mubr.f32.gmra.mrb[0].mxu0 %v4174
    %v4262 = vpop.f32.mrb[0].mxu0
    %v4263 = vadd.f32 %v4160, %v4262
    %v4264 = vpop.f32.mrb[0].mxu0
    %4265 = vdwg.mxu0
    %4266 = vst [vmem:[%s2] sm:$0xff] %v4243
    %4267 = vst [vmem:[%s2 + $0x8] sm:$0xff] %v4248
    %4268 = vst [vmem:[%s2 + $0x10] sm:$0xff] %v4253
    %4269 = vst [vmem:[%s2 + $0x18] sm:$0xff] %v4258
    %4270 = vst [vmem:[%s2 + $0x20] sm:$0x3] %v4263
    // Predicated region
    $region18: #{sed_forward.1} parent=1 // pred_check
      _
    $region19: #{sed_forward.1} parent=1 // pred_check_branch
      %4272 = sbr.rel (0) target = $region21
    $region20: #{sed_forward.1} parent=1 // pred_region
      _
    $region21: #{sed_forward.1} parent=1 // pred_fallthru
      _
    // Predicated region
    $region22: #{sed_forward.1} parent=1 // pred_check
      _
    $region23: #{sed_forward.1} parent=1 // pred_check_branch
      %4274 = sbr.rel (0) target = $region25
    $region24: #{sed_forward.1} parent=1 // pred_region
      _
    $region25: #{sed_forward.1} parent=1 // pred_fallthru
      _
    %4275 = vsyncpa [#allocation3], 1
    %4276 = vsyncpa [#allocation5], 1

</llo_original>
